<compile_context>
chip_gen: v6e
topology: v6e:2x2x1
jax: 0.10.0
libtpu: 0.0.40
codegen_flags: <defaults>
</compile_context>

<pallas_src>
import jax
import jax.numpy as jnp
import numpy as np
from jax import lax
from jax.experimental import pallas as pl
from jax.experimental.pallas import tpu as pltpu

INPUT_SIZE = 32
HIDDEN_SIZE = 32
MEMORY_BANK_SIZE = 16
N_IMG = 8


def _softmax_lastdim(x):
    z = x - jnp.max(x, axis=-1, keepdims=True)
    e = jnp.exp(z)
    return e * pl.reciprocal(jnp.sum(e, axis=-1, keepdims=True), approx=True)


def _sigmoid(x):
    return pl.reciprocal(1.0 + jnp.exp(-x), approx=True)


def _make_kernel(n_img, hid, mem_n):
    # Static lane offsets inside the fused projection:
    #   [read_prob | write_prob | Wxh/Whh | content | read_gate | write_gate | pad]
    o_rp = 0
    o_wp = mem_n
    o_h = 2 * mem_n
    o_c = 2 * mem_n + hid
    o_rg = 2 * mem_n + 2 * hid
    o_wg = o_rg + 1

    def kernel(x_ref, wxf_ref, whf_ref, bf_ref, wrh_ref, out_ref):
        # One batched MXU op: every x_t-dependent projection + all biases for
        # all timesteps at once.  Padded lanes are exactly zero.
        xp = jnp.dot(x_ref[...], wxf_ref[...],
                     preferred_element_type=jnp.float32) + bf_ref[...]   # (n_img, P)

        # Hoisted constant (built once, outside the unrolled loop).
        eye_m = (lax.broadcasted_iota(jnp.int32, (mem_n, mem_n), 0) ==
                 lax.broadcasted_iota(jnp.int32, (mem_n, mem_n), 1)
                 ).astype(jnp.float32)                                   # (MEM, MEM)

        # Recurrent state lives in vregs across the unrolled steps.
        mem = jnp.zeros((mem_n, hid), jnp.float32)   # memory_ram.fill_(0)
        h = jnp.zeros((1, hid), jnp.float32)         # h_t = zeros

        # Fully unrolled recurrence (n_img is a compile-time constant).
        for t in range(n_img):
            # Single fused h-projection per step.
            z = xp[t:t + 1, :] + jnp.dot(h, whf_ref[...],
                                         preferred_element_type=jnp.float32)
            rp_logits = z[:, o_rp:o_rp + mem_n]      # read_prob logits  (1, MEM)
            wp_logits = z[:, o_wp:o_wp + mem_n]      # write_prob logits (1, MEM)
            mh = z[:, o_h:o_h + hid]                 # m1 + m3 + bh      (1, HID)
            cz = z[:, o_c:o_c + hid]                 # content pre-act   (1, HID)
            rg = z[:, o_rg:o_rg + 1]                 # read_gate logit   (1, 1)
            wg = z[:, o_wg:o_wg + 1]                 # write_gate logit  (1, 1)

            # ---- read path ----
            ar = _softmax_lastdim(rp_logits)
            go = _sigmoid(rg)
            r = go * jnp.dot(ar, mem, preferred_element_type=jnp.float32)  # (1, HID)

            # ---- hidden update: h' = relu(m1 + m2 + m3 + bh) ----
            m2 = jnp.dot(r, wrh_ref[...], preferred_element_type=jnp.float32)
            h = jnp.maximum(mh + m2, 0.0)

            # ---- write path (uses old h only through z, already computed) ----
            c_t = jnp.maximum(cz, 0.0)
            aw = _softmax_lastdim(wp_logits)
            gw = _sigmoid(wg)
            # memory = gw*aw_col*c + (1-aw_col)*memory
            #        = memory + diag(aw) @ (gw*c - memory)
            diag_aw = eye_m * aw                                           # (MEM, MEM)
            mem = mem + jnp.dot(diag_aw, gw * c_t - mem,
                                preferred_element_type=jnp.float32)

            # VMEM row store; off the serial dependence chain.  Kept per-step
            # with a static index for lowering robustness (sublane concat of
            # 1-row pieces is avoided on purpose).
            out_ref[t:t + 1, :] = h

    return kernel


def memory_ram_forward(hidden_frames, params, n_img):
    in_size, hid = params["Wxh"].shape
    mem_n = params["Wwp_x"].shape[1]

    fused = 2 * mem_n + 2 * hid + 2          # 98 for the default sizes
    padded = ((fused + 127) // 128) * 128    # pad fused lane dim to 128

    def fuse(parts):
        w = jnp.concatenate([p.astype(jnp.float32) for p in parts], axis=1)
        return jnp.pad(w, ((0, 0), (0, padded - fused)))

    # Fused lane layout: [read_prob | write_prob | Wxh/Whh | content | rg | wg]
    wx_fused = fuse([params["Wrp_x"], params["Wwp_x"], params["Wxh"],
                     params["Wc_x"], params["Wrg_x"].T, params["Wwg_x"].T])
    wh_fused = fuse([params["Wrp_h"], params["Wwp_h"], params["Whh"],
                     params["Wc_h"], params["Wrg_h"].T, params["Wwg_h"].T])
    b_fused = fuse([params["brp"], params["bwp"], params["bh"],
                    params["bc"], params["brg"], params["bwg"]])

    kernel = _make_kernel(n_img, hid, mem_n)
    in_arrays = (hidden_frames, wx_fused, wh_fused, b_fused, params["Wrh"])

    def full_spec(a):
        return pl.BlockSpec(a.shape, lambda i: (0,) * a.ndim)

    return pl.pallas_call(
        kernel,
        out_shape=jax.ShapeDtypeStruct((n_img, hid), jnp.float32),
        grid=(1,),
        in_specs=[full_spec(a) for a in in_arrays],
        out_specs=pl.BlockSpec((n_img, hid), lambda i: (0, 0)),
        compiler_params=pltpu.CompilerParams(
            dimension_semantics=("arbitrary",)),
    )(*in_arrays)


def init_params(key):
    IN, HID, MEM = INPUT_SIZE, HIDDEN_SIZE, MEMORY_BANK_SIZE
    ks = jax.random.split(key, 18)

    def n(k, shape, scale=0.01):
        return (scale * jax.random.normal(k, shape)).astype(jnp.float32)

    return dict(
        # recurrent params (init_weights: normal(0, 0.01), bh = 0)
        Wxh=n(ks[0], (IN, HID)), Wrh=n(ks[1], (HID, HID)), Whh=n(ks[2], (HID, HID)),
        bh=jnp.zeros((1, HID), jnp.float32),
        # hidden_to_content: Linear(HID+IN, HID), split + transposed
        Wc_x=n(ks[3], (IN, HID)), Wc_h=n(ks[4], (HID, HID)), bc=n(ks[5], (1, HID)),
        # write_gate: Linear(HID+IN, 1), kept as row vectors
        Wwg_x=n(ks[6], (1, IN)), Wwg_h=n(ks[7], (1, HID)), bwg=n(ks[8], (1, 1)),
        # write_prob: Linear(HID+IN, MEM)
        Wwp_x=n(ks[9], (IN, MEM)), Wwp_h=n(ks[10], (HID, MEM)), bwp=n(ks[11], (1, MEM)),
        # read_gate
        Wrg_x=n(ks[12], (1, IN)), Wrg_h=n(ks[13], (1, HID)), brg=n(ks[14], (1, 1)),
        # read_prob
        Wrp_x=n(ks[15], (IN, MEM)), Wrp_h=n(ks[16], (HID, MEM)), brp=n(ks[17], (1, MEM)),
    )


def reference_forward(hidden_frames, params, n_img):
    p = {k: np.asarray(v, np.float32) for k, v in params.items()}
    x = np.asarray(hidden_frames, np.float32)
    mem = np.zeros((p["Wwp_x"].shape[1], p["Wxh"].shape[1]), np.float32)
    h = np.zeros((1, p["Wxh"].shape[1]), np.float32)

    def softmax(z):
        z = z - z.max(axis=-1, keepdims=True)
        e = np.exp(z)
        return e / e.sum(axis=-1, keepdims=True)

    def sigmoid(z):
        return 1.0 / (1.0 + np.exp(-z))

    outs = []
    for t in range(n_img):
        x_t = x[t:t + 1]
        ar = softmax(x_t @ p["Wrp_x"] + h @ p["Wrp_h"] + p["brp"])
        go = sigmoid((x_t * p["Wrg_x"]).sum(-1, keepdims=True)
                     + (h * p["Wrg_h"]).sum(-1, keepdims=True) + p["brg"])
        r = go * (ar @ mem)
        h_new = np.maximum(x_t @ p["Wxh"] + r @ p["Wrh"] + h @ p["Whh"] + p["bh"], 0.0)
        c_t = np.maximum(x_t @ p["Wc_x"] + h @ p["Wc_h"] + p["bc"], 0.0)
        aw = softmax(x_t @ p["Wwp_x"] + h @ p["Wwp_h"] + p["bwp"])
        gw = sigmoid((x_t * p["Wwg_x"]).sum(-1, keepdims=True)
                     + (h * p["Wwg_h"]).sum(-1, keepdims=True) + p["bwg"])
        aw_col = aw.reshape(-1, 1)
        mem = gw * aw_col * c_t + (1.0 - aw_col) * mem
        h = h_new
        outs.append(h_new[0])
    return np.stack(outs, 0)


if __name__ == "__main__":
    key = jax.random.PRNGKey(0)
    k_param, k_input = jax.random.split(key)

    params = init_params(k_param)
    hidden_frames = jax.random.normal(k_input, (N_IMG, INPUT_SIZE), jnp.float32)

    hiddens = memory_ram_forward(hidden_frames, params, N_IMG)
    hiddens = jax.block_until_ready(hiddens)

    ref = reference_forward(hidden_frames, params, N_IMG)
    np.testing.assert_allclose(np.asarray(hiddens), ref, rtol=1e-3, atol=1e-4)

    print("KERNEL_OK")
</pallas_src>

<mosaic_0001>
module attributes {stable_mosaic.version = 11 : i64} {
  func.func @kernel(%arg0: i32, %arg1: memref<8x32xf32, #tpu.memory_space<vmem>>, %arg2: memref<32x128xf32, #tpu.memory_space<vmem>>, %arg3: memref<32x128xf32, #tpu.memory_space<vmem>>, %arg4: memref<1x128xf32, #tpu.memory_space<vmem>>, %arg5: memref<32x32xf32, #tpu.memory_space<vmem>>, %arg6: memref<8x32xf32, #tpu.memory_space<vmem>>) attributes {dimension_semantics = [#tpu.dimension_semantics<arbitrary>], iteration_bounds = array<i64: 1>, scalar_prefetch = 0 : i64, scratch_operands = 0 : i64, tpu.core_type = #tpu.core_type<tc>, window_params = [{pipeline_mode = #tpu.pipeline_mode<synchronous>, transform_indices = @transform_0, window_bounds = array<i64: 8, 32>}, {pipeline_mode = #tpu.pipeline_mode<synchronous>, transform_indices = @transform_1, window_bounds = array<i64: 32, 128>}, {pipeline_mode = #tpu.pipeline_mode<synchronous>, transform_indices = @transform_2, window_bounds = array<i64: 32, 128>}, {pipeline_mode = #tpu.pipeline_mode<synchronous>, transform_indices = @transform_3, window_bounds = array<i64: 1, 128>}, {pipeline_mode = #tpu.pipeline_mode<synchronous>, transform_indices = @transform_4, window_bounds = array<i64: 32, 32>}, {pipeline_mode = #tpu.pipeline_mode<synchronous>, transform_indices = @transform_5, window_bounds = array<i64: 8, 32>}]} {
    %c0 = arith.constant 0 : index
    %c0_0 = arith.constant 0 : index
    %0 = vector.load %arg1[%c0, %c0_0] : memref<8x32xf32, #tpu.memory_space<vmem>>, vector<8x32xf32>
    %c0_1 = arith.constant 0 : index
    %c0_2 = arith.constant 0 : index
    %1 = vector.load %arg2[%c0_1, %c0_2] : memref<32x128xf32, #tpu.memory_space<vmem>>, vector<32x128xf32>
    %cst = arith.constant dense<0.000000e+00> : vector<8x128xf32>
    %2 = tpu.matmul %0, %1, %cst {dimension_numbers = #tpu.dot_dimension_numbers<[1], [0], [0], [1], [0, 0, 1, 1], [], []>} : vector<8x32xf32>, vector<32x128xf32>, vector<8x128xf32> -> vector<8x128xf32>
    %c0_3 = arith.constant 0 : index
    %c0_4 = arith.constant 0 : index
    %3 = vector.load %arg4[%c0_3, %c0_4] : memref<1x128xf32, #tpu.memory_space<vmem>>, vector<1x128xf32>
    %4 = vector.broadcast %3 : vector<1x128xf32> to vector<8x128xf32>
    %5 = arith.addf %2, %4 : vector<8x128xf32>
    %6 = tpu.iota {dimensions = array<i32: 0>} : vector<16x16xi32>
    %7 = tpu.iota {dimensions = array<i32: 1>} : vector<16x16xi32>
    %8 = arith.cmpi eq, %6, %7 : vector<16x16xi32>
    %9 = arith.extui %8 : vector<16x16xi1> to vector<16x16xi32>
    %10 = arith.sitofp %9 : vector<16x16xi32> to vector<16x16xf32>
    %cst_5 = arith.constant 0.000000e+00 : f32
    %11 = vector.broadcast %cst_5 : f32 to vector<16x32xf32>
    %cst_6 = arith.constant 0.000000e+00 : f32
    %12 = vector.broadcast %cst_6 : f32 to vector<1x32xf32>
    %13 = vector.extract_strided_slice %5 {offsets = [0, 0], sizes = [1, 128], strides = [1, 1]} : vector<8x128xf32> to vector<1x128xf32>
    %c0_7 = arith.constant 0 : index
    %c0_8 = arith.constant 0 : index
    %14 = vector.load %arg3[%c0_7, %c0_8] : memref<32x128xf32, #tpu.memory_space<vmem>>, vector<32x128xf32>
    %cst_9 = arith.constant dense<0.000000e+00> : vector<1x128xf32>
    %15 = tpu.matmul %12, %14, %cst_9 {dimension_numbers = #tpu.dot_dimension_numbers<[1], [0], [0], [1], [0, 0, 1, 1], [], []>} : vector<1x32xf32>, vector<32x128xf32>, vector<1x128xf32> -> vector<1x128xf32>
    %16 = arith.addf %13, %15 : vector<1x128xf32>
    %17 = vector.extract_strided_slice %16 {offsets = [0, 0], sizes = [1, 16], strides = [1, 1]} : vector<1x128xf32> to vector<1x16xf32>
    %18 = vector.extract_strided_slice %16 {offsets = [0, 16], sizes = [1, 16], strides = [1, 1]} : vector<1x128xf32> to vector<1x16xf32>
    %19 = vector.extract_strided_slice %16 {offsets = [0, 32], sizes = [1, 32], strides = [1, 1]} : vector<1x128xf32> to vector<1x32xf32>
    %20 = vector.extract_strided_slice %16 {offsets = [0, 64], sizes = [1, 32], strides = [1, 1]} : vector<1x128xf32> to vector<1x32xf32>
    %21 = vector.extract_strided_slice %16 {offsets = [0, 96], sizes = [1, 1], strides = [1, 1]} : vector<1x128xf32> to vector<1x1xf32>
    %22 = vector.extract_strided_slice %16 {offsets = [0, 97], sizes = [1, 1], strides = [1, 1]} : vector<1x128xf32> to vector<1x1xf32>
    %cst_10 = arith.constant dense<0xFF800000> : vector<1xf32>
    %23 = vector.multi_reduction <maximumf>, %17, %cst_10 [1] : vector<1x16xf32> to vector<1xf32>
    %24 = vector.shape_cast %23 : vector<1xf32> to vector<1x1xf32>
    %25 = vector.broadcast %24 : vector<1x1xf32> to vector<1x16xf32>
    %26 = arith.subf %17, %25 : vector<1x16xf32>
    %27 = math.exp %26 : vector<1x16xf32>
    %cst_11 = arith.constant dense<0.000000e+00> : vector<1xf32>
    %28 = vector.multi_reduction <add>, %27, %cst_11 [1] : vector<1x16xf32> to vector<1xf32>
    %29 = vector.shape_cast %28 : vector<1xf32> to vector<1x1xf32>
    %30 = tpu.reciprocal %29 {approx = true} : vector<1x1xf32> -> vector<1x1xf32>
    %31 = vector.broadcast %30 : vector<1x1xf32> to vector<1x16xf32>
    %32 = arith.mulf %27, %31 : vector<1x16xf32>
    %cst_12 = arith.constant 0.000000e+00 : f32
    %33 = vector.broadcast %cst_12 : f32 to vector<1x1xf32>
    %34 = arith.subf %33, %21 : vector<1x1xf32>
    %35 = math.exp %34 : vector<1x1xf32>
    %cst_13 = arith.constant 1.000000e+00 : f32
    %36 = vector.broadcast %cst_13 : f32 to vector<1x1xf32>
    %37 = arith.addf %36, %35 : vector<1x1xf32>
    %38 = tpu.reciprocal %37 {approx = true} : vector<1x1xf32> -> vector<1x1xf32>
    %cst_14 = arith.constant dense<0.000000e+00> : vector<1x32xf32>
    %39 = tpu.matmul %32, %11, %cst_14 {dimension_numbers = #tpu.dot_dimension_numbers<[1], [0], [0], [1], [0, 0, 1, 1], [], []>} : vector<1x16xf32>, vector<16x32xf32>, vector<1x32xf32> -> vector<1x32xf32>
    %40 = vector.broadcast %38 : vector<1x1xf32> to vector<1x32xf32>
    %41 = arith.mulf %40, %39 : vector<1x32xf32>
    %c0_15 = arith.constant 0 : index
    %c0_16 = arith.constant 0 : index
    %42 = vector.load %arg5[%c0_15, %c0_16] : memref<32x32xf32, #tpu.memory_space<vmem>>, vector<32x32xf32>
    %cst_17 = arith.constant dense<0.000000e+00> : vector<1x32xf32>
    %43 = tpu.matmul %41, %42, %cst_17 {dimension_numbers = #tpu.dot_dimension_numbers<[1], [0], [0], [1], [0, 0, 1, 1], [], []>} : vector<1x32xf32>, vector<32x32xf32>, vector<1x32xf32> -> vector<1x32xf32>
    %44 = arith.addf %19, %43 : vector<1x32xf32>
    %cst_18 = arith.constant 0.000000e+00 : f32
    %45 = vector.broadcast %cst_18 : f32 to vector<1x32xf32>
    %46 = arith.maximumf %44, %45 : vector<1x32xf32>
    %cst_19 = arith.constant 0.000000e+00 : f32
    %47 = vector.broadcast %cst_19 : f32 to vector<1x32xf32>
    %48 = arith.maximumf %20, %47 : vector<1x32xf32>
    %cst_20 = arith.constant dense<0xFF800000> : vector<1xf32>
    %49 = vector.multi_reduction <maximumf>, %18, %cst_20 [1] : vector<1x16xf32> to vector<1xf32>
    %50 = vector.shape_cast %49 : vector<1xf32> to vector<1x1xf32>
    %51 = vector.broadcast %50 : vector<1x1xf32> to vector<1x16xf32>
    %52 = arith.subf %18, %51 : vector<1x16xf32>
    %53 = math.exp %52 : vector<1x16xf32>
    %cst_21 = arith.constant dense<0.000000e+00> : vector<1xf32>
    %54 = vector.multi_reduction <add>, %53, %cst_21 [1] : vector<1x16xf32> to vector<1xf32>
    %55 = vector.shape_cast %54 : vector<1xf32> to vector<1x1xf32>
    %56 = tpu.reciprocal %55 {approx = true} : vector<1x1xf32> -> vector<1x1xf32>
    %57 = vector.broadcast %56 : vector<1x1xf32> to vector<1x16xf32>
    %58 = arith.mulf %53, %57 : vector<1x16xf32>
    %cst_22 = arith.constant 0.000000e+00 : f32
    %59 = vector.broadcast %cst_22 : f32 to vector<1x1xf32>
    %60 = arith.subf %59, %22 : vector<1x1xf32>
    %61 = math.exp %60 : vector<1x1xf32>
    %cst_23 = arith.constant 1.000000e+00 : f32
    %62 = vector.broadcast %cst_23 : f32 to vector<1x1xf32>
    %63 = arith.addf %62, %61 : vector<1x1xf32>
    %64 = tpu.reciprocal %63 {approx = true} : vector<1x1xf32> -> vector<1x1xf32>
    %65 = vector.broadcast %58 : vector<1x16xf32> to vector<16x16xf32>
    %66 = arith.mulf %10, %65 : vector<16x16xf32>
    %67 = vector.broadcast %64 : vector<1x1xf32> to vector<1x32xf32>
    %68 = arith.mulf %67, %48 : vector<1x32xf32>
    %69 = vector.broadcast %68 : vector<1x32xf32> to vector<16x32xf32>
    %70 = arith.subf %69, %11 : vector<16x32xf32>
    %cst_24 = arith.constant dense<0.000000e+00> : vector<16x32xf32>
    %71 = tpu.matmul %66, %70, %cst_24 {dimension_numbers = #tpu.dot_dimension_numbers<[1], [0], [0], [1], [0, 0, 1, 1], [], []>} : vector<16x16xf32>, vector<16x32xf32>, vector<16x32xf32> -> vector<16x32xf32>
    %72 = arith.addf %11, %71 : vector<16x32xf32>
    %c0_25 = arith.constant 0 : index
    %c0_26 = arith.constant 0 : index
    %73 = vector.load %arg6[%c0_25, %c0_26] : memref<8x32xf32, #tpu.memory_space<vmem>>, vector<1x32xf32>
    tpu.vector_store %arg6[%c0_25, %c0_26], %46 {strides = array<i32>} : memref<8x32xf32, #tpu.memory_space<vmem>>, vector<1x32xf32>,
    %74 = vector.extract_strided_slice %5 {offsets = [1, 0], sizes = [1, 128], strides = [1, 1]} : vector<8x128xf32> to vector<1x128xf32>
    %c0_27 = arith.constant 0 : index
    %c0_28 = arith.constant 0 : index
    %75 = vector.load %arg3[%c0_27, %c0_28] : memref<32x128xf32, #tpu.memory_space<vmem>>, vector<32x128xf32>
    %cst_29 = arith.constant dense<0.000000e+00> : vector<1x128xf32>
    %76 = tpu.matmul %46, %75, %cst_29 {dimension_numbers = #tpu.dot_dimension_numbers<[1], [0], [0], [1], [0, 0, 1, 1], [], []>} : vector<1x32xf32>, vector<32x128xf32>, vector<1x128xf32> -> vector<1x128xf32>
    %77 = arith.addf %74, %76 : vector<1x128xf32>
    %78 = vector.extract_strided_slice %77 {offsets = [0, 0], sizes = [1, 16], strides = [1, 1]} : vector<1x128xf32> to vector<1x16xf32>
    %79 = vector.extract_strided_slice %77 {offsets = [0, 16], sizes = [1, 16], strides = [1, 1]} : vector<1x128xf32> to vector<1x16xf32>
    %80 = vector.extract_strided_slice %77 {offsets = [0, 32], sizes = [1, 32], strides = [1, 1]} : vector<1x128xf32> to vector<1x32xf32>
    %81 = vector.extract_strided_slice %77 {offsets = [0, 64], sizes = [1, 32], strides = [1, 1]} : vector<1x128xf32> to vector<1x32xf32>
    %82 = vector.extract_strided_slice %77 {offsets = [0, 96], sizes = [1, 1], strides = [1, 1]} : vector<1x128xf32> to vector<1x1xf32>
    %83 = vector.extract_strided_slice %77 {offsets = [0, 97], sizes = [1, 1], strides = [1, 1]} : vector<1x128xf32> to vector<1x1xf32>
    %cst_30 = arith.constant dense<0xFF800000> : vector<1xf32>
    %84 = vector.multi_reduction <maximumf>, %78, %cst_30 [1] : vector<1x16xf32> to vector<1xf32>
    %85 = vector.shape_cast %84 : vector<1xf32> to vector<1x1xf32>
    %86 = vector.broadcast %85 : vector<1x1xf32> to vector<1x16xf32>
    %87 = arith.subf %78, %86 : vector<1x16xf32>
    %88 = math.exp %87 : vector<1x16xf32>
    %cst_31 = arith.constant dense<0.000000e+00> : vector<1xf32>
    %89 = vector.multi_reduction <add>, %88, %cst_31 [1] : vector<1x16xf32> to vector<1xf32>
    %90 = vector.shape_cast %89 : vector<1xf32> to vector<1x1xf32>
    %91 = tpu.reciprocal %90 {approx = true} : vector<1x1xf32> -> vector<1x1xf32>
    %92 = vector.broadcast %91 : vector<1x1xf32> to vector<1x16xf32>
    %93 = arith.mulf %88, %92 : vector<1x16xf32>
    %cst_32 = arith.constant 0.000000e+00 : f32
    %94 = vector.broadcast %cst_32 : f32 to vector<1x1xf32>
    %95 = arith.subf %94, %82 : vector<1x1xf32>
    %96 = math.exp %95 : vector<1x1xf32>
    %cst_33 = arith.constant 1.000000e+00 : f32
    %97 = vector.broadcast %cst_33 : f32 to vector<1x1xf32>
    %98 = arith.addf %97, %96 : vector<1x1xf32>
    %99 = tpu.reciprocal %98 {approx = true} : vector<1x1xf32> -> vector<1x1xf32>
    %cst_34 = arith.constant dense<0.000000e+00> : vector<1x32xf32>
    %100 = tpu.matmul %93, %72, %cst_34 {dimension_numbers = #tpu.dot_dimension_numbers<[1], [0], [0], [1], [0, 0, 1, 1], [], []>} : vector<1x16xf32>, vector<16x32xf32>, vector<1x32xf32> -> vector<1x32xf32>
    %101 = vector.broadcast %99 : vector<1x1xf32> to vector<1x32xf32>
    %102 = arith.mulf %101, %100 : vector<1x32xf32>
    %c0_35 = arith.constant 0 : index
    %c0_36 = arith.constant 0 : index
    %103 = vector.load %arg5[%c0_35, %c0_36] : memref<32x32xf32, #tpu.memory_space<vmem>>, vector<32x32xf32>
    %cst_37 = arith.constant dense<0.000000e+00> : vector<1x32xf32>
    %104 = tpu.matmul %102, %103, %cst_37 {dimension_numbers = #tpu.dot_dimension_numbers<[1], [0], [0], [1], [0, 0, 1, 1], [], []>} : vector<1x32xf32>, vector<32x32xf32>, vector<1x32xf32> -> vector<1x32xf32>
    %105 = arith.addf %80, %104 : vector<1x32xf32>
    %cst_38 = arith.constant 0.000000e+00 : f32
    %106 = vector.broadcast %cst_38 : f32 to vector<1x32xf32>
    %107 = arith.maximumf %105, %106 : vector<1x32xf32>
    %cst_39 = arith.constant 0.000000e+00 : f32
    %108 = vector.broadcast %cst_39 : f32 to vector<1x32xf32>
    %109 = arith.maximumf %81, %108 : vector<1x32xf32>
    %cst_40 = arith.constant dense<0xFF800000> : vector<1xf32>
    %110 = vector.multi_reduction <maximumf>, %79, %cst_40 [1] : vector<1x16xf32> to vector<1xf32>
    %111 = vector.shape_cast %110 : vector<1xf32> to vector<1x1xf32>
    %112 = vector.broadcast %111 : vector<1x1xf32> to vector<1x16xf32>
    %113 = arith.subf %79, %112 : vector<1x16xf32>
    %114 = math.exp %113 : vector<1x16xf32>
    %cst_41 = arith.constant dense<0.000000e+00> : vector<1xf32>
    %115 = vector.multi_reduction <add>, %114, %cst_41 [1] : vector<1x16xf32> to vector<1xf32>
    %116 = vector.shape_cast %115 : vector<1xf32> to vector<1x1xf32>
    %117 = tpu.reciprocal %116 {approx = true} : vector<1x1xf32> -> vector<1x1xf32>
    %118 = vector.broadcast %117 : vector<1x1xf32> to vector<1x16xf32>
    %119 = arith.mulf %114, %118 : vector<1x16xf32>
    %cst_42 = arith.constant 0.000000e+00 : f32
    %120 = vector.broadcast %cst_42 : f32 to vector<1x1xf32>
    %121 = arith.subf %120, %83 : vector<1x1xf32>
    %122 = math.exp %121 : vector<1x1xf32>
    %cst_43 = arith.constant 1.000000e+00 : f32
    %123 = vector.broadcast %cst_43 : f32 to vector<1x1xf32>
    %124 = arith.addf %123, %122 : vector<1x1xf32>
    %125 = tpu.reciprocal %124 {approx = true} : vector<1x1xf32> -> vector<1x1xf32>
    %126 = vector.broadcast %119 : vector<1x16xf32> to vector<16x16xf32>
    %127 = arith.mulf %10, %126 : vector<16x16xf32>
    %128 = vector.broadcast %125 : vector<1x1xf32> to vector<1x32xf32>
    %129 = arith.mulf %128, %109 : vector<1x32xf32>
    %130 = vector.broadcast %129 : vector<1x32xf32> to vector<16x32xf32>
    %131 = arith.subf %130, %72 : vector<16x32xf32>
    %cst_44 = arith.constant dense<0.000000e+00> : vector<16x32xf32>
    %132 = tpu.matmul %127, %131, %cst_44 {dimension_numbers = #tpu.dot_dimension_numbers<[1], [0], [0], [1], [0, 0, 1, 1], [], []>} : vector<16x16xf32>, vector<16x32xf32>, vector<16x32xf32> -> vector<16x32xf32>
    %133 = arith.addf %72, %132 : vector<16x32xf32>
    %c1 = arith.constant 1 : index
    %c0_45 = arith.constant 0 : index
    %134 = vector.load %arg6[%c1, %c0_45] : memref<8x32xf32, #tpu.memory_space<vmem>>, vector<1x32xf32>
    tpu.vector_store %arg6[%c1, %c0_45], %107 {strides = array<i32>} : memref<8x32xf32, #tpu.memory_space<vmem>>, vector<1x32xf32>,
    %135 = vector.extract_strided_slice %5 {offsets = [2, 0], sizes = [1, 128], strides = [1, 1]} : vector<8x128xf32> to vector<1x128xf32>
    %c0_46 = arith.constant 0 : index
    %c0_47 = arith.constant 0 : index
    %136 = vector.load %arg3[%c0_46, %c0_47] : memref<32x128xf32, #tpu.memory_space<vmem>>, vector<32x128xf32>
    %cst_48 = arith.constant dense<0.000000e+00> : vector<1x128xf32>
    %137 = tpu.matmul %107, %136, %cst_48 {dimension_numbers = #tpu.dot_dimension_numbers<[1], [0], [0], [1], [0, 0, 1, 1], [], []>} : vector<1x32xf32>, vector<32x128xf32>, vector<1x128xf32> -> vector<1x128xf32>
    %138 = arith.addf %135, %137 : vector<1x128xf32>
    %139 = vector.extract_strided_slice %138 {offsets = [0, 0], sizes = [1, 16], strides = [1, 1]} : vector<1x128xf32> to vector<1x16xf32>
    %140 = vector.extract_strided_slice %138 {offsets = [0, 16], sizes = [1, 16], strides = [1, 1]} : vector<1x128xf32> to vector<1x16xf32>
    %141 = vector.extract_strided_slice %138 {offsets = [0, 32], sizes = [1, 32], strides = [1, 1]} : vector<1x128xf32> to vector<1x32xf32>
    %142 = vector.extract_strided_slice %138 {offsets = [0, 64], sizes = [1, 32], strides = [1, 1]} : vector<1x128xf32> to vector<1x32xf32>
    %143 = vector.extract_strided_slice %138 {offsets = [0, 96], sizes = [1, 1], strides = [1, 1]} : vector<1x128xf32> to vector<1x1xf32>
    %144 = vector.extract_strided_slice %138 {offsets = [0, 97], sizes = [1, 1], strides = [1, 1]} : vector<1x128xf32> to vector<1x1xf32>
    %cst_49 = arith.constant dense<0xFF800000> : vector<1xf32>
    %145 = vector.multi_reduction <maximumf>, %139, %cst_49 [1] : vector<1x16xf32> to vector<1xf32>
    %146 = vector.shape_cast %145 : vector<1xf32> to vector<1x1xf32>
    %147 = vector.broadcast %146 : vector<1x1xf32> to vector<1x16xf32>
    %148 = arith.subf %139, %147 : vector<1x16xf32>
    %149 = math.exp %148 : vector<1x16xf32>
    %cst_50 = arith.constant dense<0.000000e+00> : vector<1xf32>
    %150 = vector.multi_reduction <add>, %149, %cst_50 [1] : vector<1x16xf32> to vector<1xf32>
    %151 = vector.shape_cast %150 : vector<1xf32> to vector<1x1xf32>
    %152 = tpu.reciprocal %151 {approx = true} : vector<1x1xf32> -> vector<1x1xf32>
    %153 = vector.broadcast %152 : vector<1x1xf32> to vector<1x16xf32>
    %154 = arith.mulf %149, %153 : vector<1x16xf32>
    %cst_51 = arith.constant 0.000000e+00 : f32
    %155 = vector.broadcast %cst_51 : f32 to vector<1x1xf32>
    %156 = arith.subf %155, %143 : vector<1x1xf32>
    %157 = math.exp %156 : vector<1x1xf32>
    %cst_52 = arith.constant 1.000000e+00 : f32
    %158 = vector.broadcast %cst_52 : f32 to vector<1x1xf32>
    %159 = arith.addf %158, %157 : vector<1x1xf32>
    %160 = tpu.reciprocal %159 {approx = true} : vector<1x1xf32> -> vector<1x1xf32>
    %cst_53 = arith.constant dense<0.000000e+00> : vector<1x32xf32>
    %161 = tpu.matmul %154, %133, %cst_53 {dimension_numbers = #tpu.dot_dimension_numbers<[1], [0], [0], [1], [0, 0, 1, 1], [], []>} : vector<1x16xf32>, vector<16x32xf32>, vector<1x32xf32> -> vector<1x32xf32>
    %162 = vector.broadcast %160 : vector<1x1xf32> to vector<1x32xf32>
    %163 = arith.mulf %162, %161 : vector<1x32xf32>
    %c0_54 = arith.constant 0 : index
    %c0_55 = arith.constant 0 : index
    %164 = vector.load %arg5[%c0_54, %c0_55] : memref<32x32xf32, #tpu.memory_space<vmem>>, vector<32x32xf32>
    %cst_56 = arith.constant dense<0.000000e+00> : vector<1x32xf32>
    %165 = tpu.matmul %163, %164, %cst_56 {dimension_numbers = #tpu.dot_dimension_numbers<[1], [0], [0], [1], [0, 0, 1, 1], [], []>} : vector<1x32xf32>, vector<32x32xf32>, vector<1x32xf32> -> vector<1x32xf32>
    %166 = arith.addf %141, %165 : vector<1x32xf32>
    %cst_57 = arith.constant 0.000000e+00 : f32
    %167 = vector.broadcast %cst_57 : f32 to vector<1x32xf32>
    %168 = arith.maximumf %166, %167 : vector<1x32xf32>
    %cst_58 = arith.constant 0.000000e+00 : f32
    %169 = vector.broadcast %cst_58 : f32 to vector<1x32xf32>
    %170 = arith.maximumf %142, %169 : vector<1x32xf32>
    %cst_59 = arith.constant dense<0xFF800000> : vector<1xf32>
    %171 = vector.multi_reduction <maximumf>, %140, %cst_59 [1] : vector<1x16xf32> to vector<1xf32>
    %172 = vector.shape_cast %171 : vector<1xf32> to vector<1x1xf32>
    %173 = vector.broadcast %172 : vector<1x1xf32> to vector<1x16xf32>
    %174 = arith.subf %140, %173 : vector<1x16xf32>
    %175 = math.exp %174 : vector<1x16xf32>
    %cst_60 = arith.constant dense<0.000000e+00> : vector<1xf32>
    %176 = vector.multi_reduction <add>, %175, %cst_60 [1] : vector<1x16xf32> to vector<1xf32>
    %177 = vector.shape_cast %176 : vector<1xf32> to vector<1x1xf32>
    %178 = tpu.reciprocal %177 {approx = true} : vector<1x1xf32> -> vector<1x1xf32>
    %179 = vector.broadcast %178 : vector<1x1xf32> to vector<1x16xf32>
    %180 = arith.mulf %175, %179 : vector<1x16xf32>
    %cst_61 = arith.constant 0.000000e+00 : f32
    %181 = vector.broadcast %cst_61 : f32 to vector<1x1xf32>
    %182 = arith.subf %181, %144 : vector<1x1xf32>
    %183 = math.exp %182 : vector<1x1xf32>
    %cst_62 = arith.constant 1.000000e+00 : f32
    %184 = vector.broadcast %cst_62 : f32 to vector<1x1xf32>
    %185 = arith.addf %184, %183 : vector<1x1xf32>
    %186 = tpu.reciprocal %185 {approx = true} : vector<1x1xf32> -> vector<1x1xf32>
    %187 = vector.broadcast %180 : vector<1x16xf32> to vector<16x16xf32>
    %188 = arith.mulf %10, %187 : vector<16x16xf32>
    %189 = vector.broadcast %186 : vector<1x1xf32> to vector<1x32xf32>
    %190 = arith.mulf %189, %170 : vector<1x32xf32>
    %191 = vector.broadcast %190 : vector<1x32xf32> to vector<16x32xf32>
    %192 = arith.subf %191, %133 : vector<16x32xf32>
    %cst_63 = arith.constant dense<0.000000e+00> : vector<16x32xf32>
    %193 = tpu.matmul %188, %192, %cst_63 {dimension_numbers = #tpu.dot_dimension_numbers<[1], [0], [0], [1], [0, 0, 1, 1], [], []>} : vector<16x16xf32>, vector<16x32xf32>, vector<16x32xf32> -> vector<16x32xf32>
    %194 = arith.addf %133, %193 : vector<16x32xf32>
    %c2 = arith.constant 2 : index
    %c0_64 = arith.constant 0 : index
    %195 = vector.load %arg6[%c2, %c0_64] : memref<8x32xf32, #tpu.memory_space<vmem>>, vector<1x32xf32>
    tpu.vector_store %arg6[%c2, %c0_64], %168 {strides = array<i32>} : memref<8x32xf32, #tpu.memory_space<vmem>>, vector<1x32xf32>,
    %196 = vector.extract_strided_slice %5 {offsets = [3, 0], sizes = [1, 128], strides = [1, 1]} : vector<8x128xf32> to vector<1x128xf32>
    %c0_65 = arith.constant 0 : index
    %c0_66 = arith.constant 0 : index
    %197 = vector.load %arg3[%c0_65, %c0_66] : memref<32x128xf32, #tpu.memory_space<vmem>>, vector<32x128xf32>
    %cst_67 = arith.constant dense<0.000000e+00> : vector<1x128xf32>
    %198 = tpu.matmul %168, %197, %cst_67 {dimension_numbers = #tpu.dot_dimension_numbers<[1], [0], [0], [1], [0, 0, 1, 1], [], []>} : vector<1x32xf32>, vector<32x128xf32>, vector<1x128xf32> -> vector<1x128xf32>
    %199 = arith.addf %196, %198 : vector<1x128xf32>
    %200 = vector.extract_strided_slice %199 {offsets = [0, 0], sizes = [1, 16], strides = [1, 1]} : vector<1x128xf32> to vector<1x16xf32>
    %201 = vector.extract_strided_slice %199 {offsets = [0, 16], sizes = [1, 16], strides = [1, 1]} : vector<1x128xf32> to vector<1x16xf32>
    %202 = vector.extract_strided_slice %199 {offsets = [0, 32], sizes = [1, 32], strides = [1, 1]} : vector<1x128xf32> to vector<1x32xf32>
    %203 = vector.extract_strided_slice %199 {offsets = [0, 64], sizes = [1, 32], strides = [1, 1]} : vector<1x128xf32> to vector<1x32xf32>
    %204 = vector.extract_strided_slice %199 {offsets = [0, 96], sizes = [1, 1], strides = [1, 1]} : vector<1x128xf32> to vector<1x1xf32>
    %205 = vector.extract_strided_slice %199 {offsets = [0, 97], sizes = [1, 1], strides = [1, 1]} : vector<1x128xf32> to vector<1x1xf32>
    %cst_68 = arith.constant dense<0xFF800000> : vector<1xf32>
    %206 = vector.multi_reduction <maximumf>, %200, %cst_68 [1] : vector<1x16xf32> to vector<1xf32>
    %207 = vector.shape_cast %206 : vector<1xf32> to vector<1x1xf32>
    %208 = vector.broadcast %207 : vector<1x1xf32> to vector<1x16xf32>
    %209 = arith.subf %200, %208 : vector<1x16xf32>
    %210 = math.exp %209 : vector<1x16xf32>
    %cst_69 = arith.constant dense<0.000000e+00> : vector<1xf32>
    %211 = vector.multi_reduction <add>, %210, %cst_69 [1] : vector<1x16xf32> to vector<1xf32>
    %212 = vector.shape_cast %211 : vector<1xf32> to vector<1x1xf32>
    %213 = tpu.reciprocal %212 {approx = true} : vector<1x1xf32> -> vector<1x1xf32>
    %214 = vector.broadcast %213 : vector<1x1xf32> to vector<1x16xf32>
    %215 = arith.mulf %210, %214 : vector<1x16xf32>
    %cst_70 = arith.constant 0.000000e+00 : f32
    %216 = vector.broadcast %cst_70 : f32 to vector<1x1xf32>
    %217 = arith.subf %216, %204 : vector<1x1xf32>
    %218 = math.exp %217 : vector<1x1xf32>
    %cst_71 = arith.constant 1.000000e+00 : f32
    %219 = vector.broadcast %cst_71 : f32 to vector<1x1xf32>
    %220 = arith.addf %219, %218 : vector<1x1xf32>
    %221 = tpu.reciprocal %220 {approx = true} : vector<1x1xf32> -> vector<1x1xf32>
    %cst_72 = arith.constant dense<0.000000e+00> : vector<1x32xf32>
    %222 = tpu.matmul %215, %194, %cst_72 {dimension_numbers = #tpu.dot_dimension_numbers<[1], [0], [0], [1], [0, 0, 1, 1], [], []>} : vector<1x16xf32>, vector<16x32xf32>, vector<1x32xf32> -> vector<1x32xf32>
    %223 = vector.broadcast %221 : vector<1x1xf32> to vector<1x32xf32>
    %224 = arith.mulf %223, %222 : vector<1x32xf32>
    %c0_73 = arith.constant 0 : index
    %c0_74 = arith.constant 0 : index
    %225 = vector.load %arg5[%c0_73, %c0_74] : memref<32x32xf32, #tpu.memory_space<vmem>>, vector<32x32xf32>
    %cst_75 = arith.constant dense<0.000000e+00> : vector<1x32xf32>
    %226 = tpu.matmul %224, %225, %cst_75 {dimension_numbers = #tpu.dot_dimension_numbers<[1], [0], [0], [1], [0, 0, 1, 1], [], []>} : vector<1x32xf32>, vector<32x32xf32>, vector<1x32xf32> -> vector<1x32xf32>
    %227 = arith.addf %202, %226 : vector<1x32xf32>
    %cst_76 = arith.constant 0.000000e+00 : f32
    %228 = vector.broadcast %cst_76 : f32 to vector<1x32xf32>
    %229 = arith.maximumf %227, %228 : vector<1x32xf32>
    %cst_77 = arith.constant 0.000000e+00 : f32
    %230 = vector.broadcast %cst_77 : f32 to vector<1x32xf32>
    %231 = arith.maximumf %203, %230 : vector<1x32xf32>
    %cst_78 = arith.constant dense<0xFF800000> : vector<1xf32>
    %232 = vector.multi_reduction <maximumf>, %201, %cst_78 [1] : vector<1x16xf32> to vector<1xf32>
    %233 = vector.shape_cast %232 : vector<1xf32> to vector<1x1xf32>
    %234 = vector.broadcast %233 : vector<1x1xf32> to vector<1x16xf32>
    %235 = arith.subf %201, %234 : vector<1x16xf32>
    %236 = math.exp %235 : vector<1x16xf32>
    %cst_79 = arith.constant dense<0.000000e+00> : vector<1xf32>
    %237 = vector.multi_reduction <add>, %236, %cst_79 [1] : vector<1x16xf32> to vector<1xf32>
    %238 = vector.shape_cast %237 : vector<1xf32> to vector<1x1xf32>
    %239 = tpu.reciprocal %238 {approx = true} : vector<1x1xf32> -> vector<1x1xf32>
    %240 = vector.broadcast %239 : vector<1x1xf32> to vector<1x16xf32>
    %241 = arith.mulf %236, %240 : vector<1x16xf32>
    %cst_80 = arith.constant 0.000000e+00 : f32
    %242 = vector.broadcast %cst_80 : f32 to vector<1x1xf32>
    %243 = arith.subf %242, %205 : vector<1x1xf32>
    %244 = math.exp %243 : vector<1x1xf32>
    %cst_81 = arith.constant 1.000000e+00 : f32
    %245 = vector.broadcast %cst_81 : f32 to vector<1x1xf32>
    %246 = arith.addf %245, %244 : vector<1x1xf32>
    %247 = tpu.reciprocal %246 {approx = true} : vector<1x1xf32> -> vector<1x1xf32>
    %248 = vector.broadcast %241 : vector<1x16xf32> to vector<16x16xf32>
    %249 = arith.mulf %10, %248 : vector<16x16xf32>
    %250 = vector.broadcast %247 : vector<1x1xf32> to vector<1x32xf32>
    %251 = arith.mulf %250, %231 : vector<1x32xf32>
    %252 = vector.broadcast %251 : vector<1x32xf32> to vector<16x32xf32>
    %253 = arith.subf %252, %194 : vector<16x32xf32>
    %cst_82 = arith.constant dense<0.000000e+00> : vector<16x32xf32>
    %254 = tpu.matmul %249, %253, %cst_82 {dimension_numbers = #tpu.dot_dimension_numbers<[1], [0], [0], [1], [0, 0, 1, 1], [], []>} : vector<16x16xf32>, vector<16x32xf32>, vector<16x32xf32> -> vector<16x32xf32>
    %255 = arith.addf %194, %254 : vector<16x32xf32>
    %c3 = arith.constant 3 : index
    %c0_83 = arith.constant 0 : index
    %256 = vector.load %arg6[%c3, %c0_83] : memref<8x32xf32, #tpu.memory_space<vmem>>, vector<1x32xf32>
    tpu.vector_store %arg6[%c3, %c0_83], %229 {strides = array<i32>} : memref<8x32xf32, #tpu.memory_space<vmem>>, vector<1x32xf32>,
    %257 = vector.extract_strided_slice %5 {offsets = [4, 0], sizes = [1, 128], strides = [1, 1]} : vector<8x128xf32> to vector<1x128xf32>
    %c0_84 = arith.constant 0 : index
    %c0_85 = arith.constant 0 : index
    %258 = vector.load %arg3[%c0_84, %c0_85] : memref<32x128xf32, #tpu.memory_space<vmem>>, vector<32x128xf32>
    %cst_86 = arith.constant dense<0.000000e+00> : vector<1x128xf32>
    %259 = tpu.matmul %229, %258, %cst_86 {dimension_numbers = #tpu.dot_dimension_numbers<[1], [0], [0], [1], [0, 0, 1, 1], [], []>} : vector<1x32xf32>, vector<32x128xf32>, vector<1x128xf32> -> vector<1x128xf32>
    %260 = arith.addf %257, %259 : vector<1x128xf32>
    %261 = vector.extract_strided_slice %260 {offsets = [0, 0], sizes = [1, 16], strides = [1, 1]} : vector<1x128xf32> to vector<1x16xf32>
    %262 = vector.extract_strided_slice %260 {offsets = [0, 16], sizes = [1, 16], strides = [1, 1]} : vector<1x128xf32> to vector<1x16xf32>
    %263 = vector.extract_strided_slice %260 {offsets = [0, 32], sizes = [1, 32], strides = [1, 1]} : vector<1x128xf32> to vector<1x32xf32>
    %264 = vector.extract_strided_slice %260 {offsets = [0, 64], sizes = [1, 32], strides = [1, 1]} : vector<1x128xf32> to vector<1x32xf32>
    %265 = vector.extract_strided_slice %260 {offsets = [0, 96], sizes = [1, 1], strides = [1, 1]} : vector<1x128xf32> to vector<1x1xf32>
    %266 = vector.extract_strided_slice %260 {offsets = [0, 97], sizes = [1, 1], strides = [1, 1]} : vector<1x128xf32> to vector<1x1xf32>
    %cst_87 = arith.constant dense<0xFF800000> : vector<1xf32>
    %267 = vector.multi_reduction <maximumf>, %261, %cst_87 [1] : vector<1x16xf32> to vector<1xf32>
    %268 = vector.shape_cast %267 : vector<1xf32> to vector<1x1xf32>
    %269 = vector.broadcast %268 : vector<1x1xf32> to vector<1x16xf32>
    %270 = arith.subf %261, %269 : vector<1x16xf32>
    %271 = math.exp %270 : vector<1x16xf32>
    %cst_88 = arith.constant dense<0.000000e+00> : vector<1xf32>
    %272 = vector.multi_reduction <add>, %271, %cst_88 [1] : vector<1x16xf32> to vector<1xf32>
    %273 = vector.shape_cast %272 : vector<1xf32> to vector<1x1xf32>
    %274 = tpu.reciprocal %273 {approx = true} : vector<1x1xf32> -> vector<1x1xf32>
    %275 = vector.broadcast %274 : vector<1x1xf32> to vector<1x16xf32>
    %276 = arith.mulf %271, %275 : vector<1x16xf32>
    %cst_89 = arith.constant 0.000000e+00 : f32
    %277 = vector.broadcast %cst_89 : f32 to vector<1x1xf32>
    %278 = arith.subf %277, %265 : vector<1x1xf32>
    %279 = math.exp %278 : vector<1x1xf32>
    %cst_90 = arith.constant 1.000000e+00 : f32
    %280 = vector.broadcast %cst_90 : f32 to vector<1x1xf32>
    %281 = arith.addf %280, %279 : vector<1x1xf32>
    %282 = tpu.reciprocal %281 {approx = true} : vector<1x1xf32> -> vector<1x1xf32>
    %cst_91 = arith.constant dense<0.000000e+00> : vector<1x32xf32>
    %283 = tpu.matmul %276, %255, %cst_91 {dimension_numbers = #tpu.dot_dimension_numbers<[1], [0], [0], [1], [0, 0, 1, 1], [], []>} : vector<1x16xf32>, vector<16x32xf32>, vector<1x32xf32> -> vector<1x32xf32>
    %284 = vector.broadcast %282 : vector<1x1xf32> to vector<1x32xf32>
    %285 = arith.mulf %284, %283 : vector<1x32xf32>
    %c0_92 = arith.constant 0 : index
    %c0_93 = arith.constant 0 : index
    %286 = vector.load %arg5[%c0_92, %c0_93] : memref<32x32xf32, #tpu.memory_space<vmem>>, vector<32x32xf32>
    %cst_94 = arith.constant dense<0.000000e+00> : vector<1x32xf32>
    %287 = tpu.matmul %285, %286, %cst_94 {dimension_numbers = #tpu.dot_dimension_numbers<[1], [0], [0], [1], [0, 0, 1, 1], [], []>} : vector<1x32xf32>, vector<32x32xf32>, vector<1x32xf32> -> vector<1x32xf32>
    %288 = arith.addf %263, %287 : vector<1x32xf32>
    %cst_95 = arith.constant 0.000000e+00 : f32
    %289 = vector.broadcast %cst_95 : f32 to vector<1x32xf32>
    %290 = arith.maximumf %288, %289 : vector<1x32xf32>
    %cst_96 = arith.constant 0.000000e+00 : f32
    %291 = vector.broadcast %cst_96 : f32 to vector<1x32xf32>
    %292 = arith.maximumf %264, %291 : vector<1x32xf32>
    %cst_97 = arith.constant dense<0xFF800000> : vector<1xf32>
    %293 = vector.multi_reduction <maximumf>, %262, %cst_97 [1] : vector<1x16xf32> to vector<1xf32>
    %294 = vector.shape_cast %293 : vector<1xf32> to vector<1x1xf32>
    %295 = vector.broadcast %294 : vector<1x1xf32> to vector<1x16xf32>
    %296 = arith.subf %262, %295 : vector<1x16xf32>
    %297 = math.exp %296 : vector<1x16xf32>
    %cst_98 = arith.constant dense<0.000000e+00> : vector<1xf32>
    %298 = vector.multi_reduction <add>, %297, %cst_98 [1] : vector<1x16xf32> to vector<1xf32>
    %299 = vector.shape_cast %298 : vector<1xf32> to vector<1x1xf32>
    %300 = tpu.reciprocal %299 {approx = true} : vector<1x1xf32> -> vector<1x1xf32>
    %301 = vector.broadcast %300 : vector<1x1xf32> to vector<1x16xf32>
    %302 = arith.mulf %297, %301 : vector<1x16xf32>
    %cst_99 = arith.constant 0.000000e+00 : f32
    %303 = vector.broadcast %cst_99 : f32 to vector<1x1xf32>
    %304 = arith.subf %303, %266 : vector<1x1xf32>
    %305 = math.exp %304 : vector<1x1xf32>
    %cst_100 = arith.constant 1.000000e+00 : f32
    %306 = vector.broadcast %cst_100 : f32 to vector<1x1xf32>
    %307 = arith.addf %306, %305 : vector<1x1xf32>
    %308 = tpu.reciprocal %307 {approx = true} : vector<1x1xf32> -> vector<1x1xf32>
    %309 = vector.broadcast %302 : vector<1x16xf32> to vector<16x16xf32>
    %310 = arith.mulf %10, %309 : vector<16x16xf32>
    %311 = vector.broadcast %308 : vector<1x1xf32> to vector<1x32xf32>
    %312 = arith.mulf %311, %292 : vector<1x32xf32>
    %313 = vector.broadcast %312 : vector<1x32xf32> to vector<16x32xf32>
    %314 = arith.subf %313, %255 : vector<16x32xf32>
    %cst_101 = arith.constant dense<0.000000e+00> : vector<16x32xf32>
    %315 = tpu.matmul %310, %314, %cst_101 {dimension_numbers = #tpu.dot_dimension_numbers<[1], [0], [0], [1], [0, 0, 1, 1], [], []>} : vector<16x16xf32>, vector<16x32xf32>, vector<16x32xf32> -> vector<16x32xf32>
    %316 = arith.addf %255, %315 : vector<16x32xf32>
    %c4 = arith.constant 4 : index
    %c0_102 = arith.constant 0 : index
    %317 = vector.load %arg6[%c4, %c0_102] : memref<8x32xf32, #tpu.memory_space<vmem>>, vector<1x32xf32>
    tpu.vector_store %arg6[%c4, %c0_102], %290 {strides = array<i32>} : memref<8x32xf32, #tpu.memory_space<vmem>>, vector<1x32xf32>,
    %318 = vector.extract_strided_slice %5 {offsets = [5, 0], sizes = [1, 128], strides = [1, 1]} : vector<8x128xf32> to vector<1x128xf32>
    %c0_103 = arith.constant 0 : index
    %c0_104 = arith.constant 0 : index
    %319 = vector.load %arg3[%c0_103, %c0_104] : memref<32x128xf32, #tpu.memory_space<vmem>>, vector<32x128xf32>
    %cst_105 = arith.constant dense<0.000000e+00> : vector<1x128xf32>
    %320 = tpu.matmul %290, %319, %cst_105 {dimension_numbers = #tpu.dot_dimension_numbers<[1], [0], [0], [1], [0, 0, 1, 1], [], []>} : vector<1x32xf32>, vector<32x128xf32>, vector<1x128xf32> -> vector<1x128xf32>
    %321 = arith.addf %318, %320 : vector<1x128xf32>
    %322 = vector.extract_strided_slice %321 {offsets = [0, 0], sizes = [1, 16], strides = [1, 1]} : vector<1x128xf32> to vector<1x16xf32>
    %323 = vector.extract_strided_slice %321 {offsets = [0, 16], sizes = [1, 16], strides = [1, 1]} : vector<1x128xf32> to vector<1x16xf32>
    %324 = vector.extract_strided_slice %321 {offsets = [0, 32], sizes = [1, 32], strides = [1, 1]} : vector<1x128xf32> to vector<1x32xf32>
    %325 = vector.extract_strided_slice %321 {offsets = [0, 64], sizes = [1, 32], strides = [1, 1]} : vector<1x128xf32> to vector<1x32xf32>
    %326 = vector.extract_strided_slice %321 {offsets = [0, 96], sizes = [1, 1], strides = [1, 1]} : vector<1x128xf32> to vector<1x1xf32>
    %327 = vector.extract_strided_slice %321 {offsets = [0, 97], sizes = [1, 1], strides = [1, 1]} : vector<1x128xf32> to vector<1x1xf32>
    %cst_106 = arith.constant dense<0xFF800000> : vector<1xf32>
    %328 = vector.multi_reduction <maximumf>, %322, %cst_106 [1] : vector<1x16xf32> to vector<1xf32>
    %329 = vector.shape_cast %328 : vector<1xf32> to vector<1x1xf32>
    %330 = vector.broadcast %329 : vector<1x1xf32> to vector<1x16xf32>
    %331 = arith.subf %322, %330 : vector<1x16xf32>
    %332 = math.exp %331 : vector<1x16xf32>
    %cst_107 = arith.constant dense<0.000000e+00> : vector<1xf32>
    %333 = vector.multi_reduction <add>, %332, %cst_107 [1] : vector<1x16xf32> to vector<1xf32>
    %334 = vector.shape_cast %333 : vector<1xf32> to vector<1x1xf32>
    %335 = tpu.reciprocal %334 {approx = true} : vector<1x1xf32> -> vector<1x1xf32>
    %336 = vector.broadcast %335 : vector<1x1xf32> to vector<1x16xf32>
    %337 = arith.mulf %332, %336 : vector<1x16xf32>
    %cst_108 = arith.constant 0.000000e+00 : f32
    %338 = vector.broadcast %cst_108 : f32 to vector<1x1xf32>
    %339 = arith.subf %338, %326 : vector<1x1xf32>
    %340 = math.exp %339 : vector<1x1xf32>
    %cst_109 = arith.constant 1.000000e+00 : f32
    %341 = vector.broadcast %cst_109 : f32 to vector<1x1xf32>
    %342 = arith.addf %341, %340 : vector<1x1xf32>
    %343 = tpu.reciprocal %342 {approx = true} : vector<1x1xf32> -> vector<1x1xf32>
    %cst_110 = arith.constant dense<0.000000e+00> : vector<1x32xf32>
    %344 = tpu.matmul %337, %316, %cst_110 {dimension_numbers = #tpu.dot_dimension_numbers<[1], [0], [0], [1], [0, 0, 1, 1], [], []>} : vector<1x16xf32>, vector<16x32xf32>, vector<1x32xf32> -> vector<1x32xf32>
    %345 = vector.broadcast %343 : vector<1x1xf32> to vector<1x32xf32>
    %346 = arith.mulf %345, %344 : vector<1x32xf32>
    %c0_111 = arith.constant 0 : index
    %c0_112 = arith.constant 0 : index
    %347 = vector.load %arg5[%c0_111, %c0_112] : memref<32x32xf32, #tpu.memory_space<vmem>>, vector<32x32xf32>
    %cst_113 = arith.constant dense<0.000000e+00> : vector<1x32xf32>
    %348 = tpu.matmul %346, %347, %cst_113 {dimension_numbers = #tpu.dot_dimension_numbers<[1], [0], [0], [1], [0, 0, 1, 1], [], []>} : vector<1x32xf32>, vector<32x32xf32>, vector<1x32xf32> -> vector<1x32xf32>
    %349 = arith.addf %324, %348 : vector<1x32xf32>
    %cst_114 = arith.constant 0.000000e+00 : f32
    %350 = vector.broadcast %cst_114 : f32 to vector<1x32xf32>
    %351 = arith.maximumf %349, %350 : vector<1x32xf32>
    %cst_115 = arith.constant 0.000000e+00 : f32
    %352 = vector.broadcast %cst_115 : f32 to vector<1x32xf32>
    %353 = arith.maximumf %325, %352 : vector<1x32xf32>
    %cst_116 = arith.constant dense<0xFF800000> : vector<1xf32>
    %354 = vector.multi_reduction <maximumf>, %323, %cst_116 [1] : vector<1x16xf32> to vector<1xf32>
    %355 = vector.shape_cast %354 : vector<1xf32> to vector<1x1xf32>
    %356 = vector.broadcast %355 : vector<1x1xf32> to vector<1x16xf32>
    %357 = arith.subf %323, %356 : vector<1x16xf32>
    %358 = math.exp %357 : vector<1x16xf32>
    %cst_117 = arith.constant dense<0.000000e+00> : vector<1xf32>
    %359 = vector.multi_reduction <add>, %358, %cst_117 [1] : vector<1x16xf32> to vector<1xf32>
    %360 = vector.shape_cast %359 : vector<1xf32> to vector<1x1xf32>
    %361 = tpu.reciprocal %360 {approx = true} : vector<1x1xf32> -> vector<1x1xf32>
    %362 = vector.broadcast %361 : vector<1x1xf32> to vector<1x16xf32>
    %363 = arith.mulf %358, %362 : vector<1x16xf32>
    %cst_118 = arith.constant 0.000000e+00 : f32
    %364 = vector.broadcast %cst_118 : f32 to vector<1x1xf32>
    %365 = arith.subf %364, %327 : vector<1x1xf32>
    %366 = math.exp %365 : vector<1x1xf32>
    %cst_119 = arith.constant 1.000000e+00 : f32
    %367 = vector.broadcast %cst_119 : f32 to vector<1x1xf32>
    %368 = arith.addf %367, %366 : vector<1x1xf32>
    %369 = tpu.reciprocal %368 {approx = true} : vector<1x1xf32> -> vector<1x1xf32>
    %370 = vector.broadcast %363 : vector<1x16xf32> to vector<16x16xf32>
    %371 = arith.mulf %10, %370 : vector<16x16xf32>
    %372 = vector.broadcast %369 : vector<1x1xf32> to vector<1x32xf32>
    %373 = arith.mulf %372, %353 : vector<1x32xf32>
    %374 = vector.broadcast %373 : vector<1x32xf32> to vector<16x32xf32>
    %375 = arith.subf %374, %316 : vector<16x32xf32>
    %cst_120 = arith.constant dense<0.000000e+00> : vector<16x32xf32>
    %376 = tpu.matmul %371, %375, %cst_120 {dimension_numbers = #tpu.dot_dimension_numbers<[1], [0], [0], [1], [0, 0, 1, 1], [], []>} : vector<16x16xf32>, vector<16x32xf32>, vector<16x32xf32> -> vector<16x32xf32>
    %377 = arith.addf %316, %376 : vector<16x32xf32>
    %c5 = arith.constant 5 : index
    %c0_121 = arith.constant 0 : index
    %378 = vector.load %arg6[%c5, %c0_121] : memref<8x32xf32, #tpu.memory_space<vmem>>, vector<1x32xf32>
    tpu.vector_store %arg6[%c5, %c0_121], %351 {strides = array<i32>} : memref<8x32xf32, #tpu.memory_space<vmem>>, vector<1x32xf32>,
    %379 = vector.extract_strided_slice %5 {offsets = [6, 0], sizes = [1, 128], strides = [1, 1]} : vector<8x128xf32> to vector<1x128xf32>
    %c0_122 = arith.constant 0 : index
    %c0_123 = arith.constant 0 : index
    %380 = vector.load %arg3[%c0_122, %c0_123] : memref<32x128xf32, #tpu.memory_space<vmem>>, vector<32x128xf32>
    %cst_124 = arith.constant dense<0.000000e+00> : vector<1x128xf32>
    %381 = tpu.matmul %351, %380, %cst_124 {dimension_numbers = #tpu.dot_dimension_numbers<[1], [0], [0], [1], [0, 0, 1, 1], [], []>} : vector<1x32xf32>, vector<32x128xf32>, vector<1x128xf32> -> vector<1x128xf32>
    %382 = arith.addf %379, %381 : vector<1x128xf32>
    %383 = vector.extract_strided_slice %382 {offsets = [0, 0], sizes = [1, 16], strides = [1, 1]} : vector<1x128xf32> to vector<1x16xf32>
    %384 = vector.extract_strided_slice %382 {offsets = [0, 16], sizes = [1, 16], strides = [1, 1]} : vector<1x128xf32> to vector<1x16xf32>
    %385 = vector.extract_strided_slice %382 {offsets = [0, 32], sizes = [1, 32], strides = [1, 1]} : vector<1x128xf32> to vector<1x32xf32>
    %386 = vector.extract_strided_slice %382 {offsets = [0, 64], sizes = [1, 32], strides = [1, 1]} : vector<1x128xf32> to vector<1x32xf32>
    %387 = vector.extract_strided_slice %382 {offsets = [0, 96], sizes = [1, 1], strides = [1, 1]} : vector<1x128xf32> to vector<1x1xf32>
    %388 = vector.extract_strided_slice %382 {offsets = [0, 97], sizes = [1, 1], strides = [1, 1]} : vector<1x128xf32> to vector<1x1xf32>
    %cst_125 = arith.constant dense<0xFF800000> : vector<1xf32>
    %389 = vector.multi_reduction <maximumf>, %383, %cst_125 [1] : vector<1x16xf32> to vector<1xf32>
    %390 = vector.shape_cast %389 : vector<1xf32> to vector<1x1xf32>
    %391 = vector.broadcast %390 : vector<1x1xf32> to vector<1x16xf32>
    %392 = arith.subf %383, %391 : vector<1x16xf32>
    %393 = math.exp %392 : vector<1x16xf32>
    %cst_126 = arith.constant dense<0.000000e+00> : vector<1xf32>
    %394 = vector.multi_reduction <add>, %393, %cst_126 [1] : vector<1x16xf32> to vector<1xf32>
    %395 = vector.shape_cast %394 : vector<1xf32> to vector<1x1xf32>
    %396 = tpu.reciprocal %395 {approx = true} : vector<1x1xf32> -> vector<1x1xf32>
    %397 = vector.broadcast %396 : vector<1x1xf32> to vector<1x16xf32>
    %398 = arith.mulf %393, %397 : vector<1x16xf32>
    %cst_127 = arith.constant 0.000000e+00 : f32
    %399 = vector.broadcast %cst_127 : f32 to vector<1x1xf32>
    %400 = arith.subf %399, %387 : vector<1x1xf32>
    %401 = math.exp %400 : vector<1x1xf32>
    %cst_128 = arith.constant 1.000000e+00 : f32
    %402 = vector.broadcast %cst_128 : f32 to vector<1x1xf32>
    %403 = arith.addf %402, %401 : vector<1x1xf32>
    %404 = tpu.reciprocal %403 {approx = true} : vector<1x1xf32> -> vector<1x1xf32>
    %cst_129 = arith.constant dense<0.000000e+00> : vector<1x32xf32>
    %405 = tpu.matmul %398, %377, %cst_129 {dimension_numbers = #tpu.dot_dimension_numbers<[1], [0], [0], [1], [0, 0, 1, 1], [], []>} : vector<1x16xf32>, vector<16x32xf32>, vector<1x32xf32> -> vector<1x32xf32>
    %406 = vector.broadcast %404 : vector<1x1xf32> to vector<1x32xf32>
    %407 = arith.mulf %406, %405 : vector<1x32xf32>
    %c0_130 = arith.constant 0 : index
    %c0_131 = arith.constant 0 : index
    %408 = vector.load %arg5[%c0_130, %c0_131] : memref<32x32xf32, #tpu.memory_space<vmem>>, vector<32x32xf32>
    %cst_132 = arith.constant dense<0.000000e+00> : vector<1x32xf32>
    %409 = tpu.matmul %407, %408, %cst_132 {dimension_numbers = #tpu.dot_dimension_numbers<[1], [0], [0], [1], [0, 0, 1, 1], [], []>} : vector<1x32xf32>, vector<32x32xf32>, vector<1x32xf32> -> vector<1x32xf32>
    %410 = arith.addf %385, %409 : vector<1x32xf32>
    %cst_133 = arith.constant 0.000000e+00 : f32
    %411 = vector.broadcast %cst_133 : f32 to vector<1x32xf32>
    %412 = arith.maximumf %410, %411 : vector<1x32xf32>
    %cst_134 = arith.constant 0.000000e+00 : f32
    %413 = vector.broadcast %cst_134 : f32 to vector<1x32xf32>
    %414 = arith.maximumf %386, %413 : vector<1x32xf32>
    %cst_135 = arith.constant dense<0xFF800000> : vector<1xf32>
    %415 = vector.multi_reduction <maximumf>, %384, %cst_135 [1] : vector<1x16xf32> to vector<1xf32>
    %416 = vector.shape_cast %415 : vector<1xf32> to vector<1x1xf32>
    %417 = vector.broadcast %416 : vector<1x1xf32> to vector<1x16xf32>
    %418 = arith.subf %384, %417 : vector<1x16xf32>
    %419 = math.exp %418 : vector<1x16xf32>
    %cst_136 = arith.constant dense<0.000000e+00> : vector<1xf32>
    %420 = vector.multi_reduction <add>, %419, %cst_136 [1] : vector<1x16xf32> to vector<1xf32>
    %421 = vector.shape_cast %420 : vector<1xf32> to vector<1x1xf32>
    %422 = tpu.reciprocal %421 {approx = true} : vector<1x1xf32> -> vector<1x1xf32>
    %423 = vector.broadcast %422 : vector<1x1xf32> to vector<1x16xf32>
    %424 = arith.mulf %419, %423 : vector<1x16xf32>
    %cst_137 = arith.constant 0.000000e+00 : f32
    %425 = vector.broadcast %cst_137 : f32 to vector<1x1xf32>
    %426 = arith.subf %425, %388 : vector<1x1xf32>
    %427 = math.exp %426 : vector<1x1xf32>
    %cst_138 = arith.constant 1.000000e+00 : f32
    %428 = vector.broadcast %cst_138 : f32 to vector<1x1xf32>
    %429 = arith.addf %428, %427 : vector<1x1xf32>
    %430 = tpu.reciprocal %429 {approx = true} : vector<1x1xf32> -> vector<1x1xf32>
    %431 = vector.broadcast %424 : vector<1x16xf32> to vector<16x16xf32>
    %432 = arith.mulf %10, %431 : vector<16x16xf32>
    %433 = vector.broadcast %430 : vector<1x1xf32> to vector<1x32xf32>
    %434 = arith.mulf %433, %414 : vector<1x32xf32>
    %435 = vector.broadcast %434 : vector<1x32xf32> to vector<16x32xf32>
    %436 = arith.subf %435, %377 : vector<16x32xf32>
    %cst_139 = arith.constant dense<0.000000e+00> : vector<16x32xf32>
    %437 = tpu.matmul %432, %436, %cst_139 {dimension_numbers = #tpu.dot_dimension_numbers<[1], [0], [0], [1], [0, 0, 1, 1], [], []>} : vector<16x16xf32>, vector<16x32xf32>, vector<16x32xf32> -> vector<16x32xf32>
    %438 = arith.addf %377, %437 : vector<16x32xf32>
    %c6 = arith.constant 6 : index
    %c0_140 = arith.constant 0 : index
    %439 = vector.load %arg6[%c6, %c0_140] : memref<8x32xf32, #tpu.memory_space<vmem>>, vector<1x32xf32>
    tpu.vector_store %arg6[%c6, %c0_140], %412 {strides = array<i32>} : memref<8x32xf32, #tpu.memory_space<vmem>>, vector<1x32xf32>,
    %440 = vector.extract_strided_slice %5 {offsets = [7, 0], sizes = [1, 128], strides = [1, 1]} : vector<8x128xf32> to vector<1x128xf32>
    %c0_141 = arith.constant 0 : index
    %c0_142 = arith.constant 0 : index
    %441 = vector.load %arg3[%c0_141, %c0_142] : memref<32x128xf32, #tpu.memory_space<vmem>>, vector<32x128xf32>
    %cst_143 = arith.constant dense<0.000000e+00> : vector<1x128xf32>
    %442 = tpu.matmul %412, %441, %cst_143 {dimension_numbers = #tpu.dot_dimension_numbers<[1], [0], [0], [1], [0, 0, 1, 1], [], []>} : vector<1x32xf32>, vector<32x128xf32>, vector<1x128xf32> -> vector<1x128xf32>
    %443 = arith.addf %440, %442 : vector<1x128xf32>
    %444 = vector.extract_strided_slice %443 {offsets = [0, 0], sizes = [1, 16], strides = [1, 1]} : vector<1x128xf32> to vector<1x16xf32>
    %445 = vector.extract_strided_slice %443 {offsets = [0, 32], sizes = [1, 32], strides = [1, 1]} : vector<1x128xf32> to vector<1x32xf32>
    %446 = vector.extract_strided_slice %443 {offsets = [0, 96], sizes = [1, 1], strides = [1, 1]} : vector<1x128xf32> to vector<1x1xf32>
    %cst_144 = arith.constant dense<0xFF800000> : vector<1xf32>
    %447 = vector.multi_reduction <maximumf>, %444, %cst_144 [1] : vector<1x16xf32> to vector<1xf32>
    %448 = vector.shape_cast %447 : vector<1xf32> to vector<1x1xf32>
    %449 = vector.broadcast %448 : vector<1x1xf32> to vector<1x16xf32>
    %450 = arith.subf %444, %449 : vector<1x16xf32>
    %451 = math.exp %450 : vector<1x16xf32>
    %cst_145 = arith.constant dense<0.000000e+00> : vector<1xf32>
    %452 = vector.multi_reduction <add>, %451, %cst_145 [1] : vector<1x16xf32> to vector<1xf32>
    %453 = vector.shape_cast %452 : vector<1xf32> to vector<1x1xf32>
    %454 = tpu.reciprocal %453 {approx = true} : vector<1x1xf32> -> vector<1x1xf32>
    %455 = vector.broadcast %454 : vector<1x1xf32> to vector<1x16xf32>
    %456 = arith.mulf %451, %455 : vector<1x16xf32>
    %cst_146 = arith.constant 0.000000e+00 : f32
    %457 = vector.broadcast %cst_146 : f32 to vector<1x1xf32>
    %458 = arith.subf %457, %446 : vector<1x1xf32>
    %459 = math.exp %458 : vector<1x1xf32>
    %cst_147 = arith.constant 1.000000e+00 : f32
    %460 = vector.broadcast %cst_147 : f32 to vector<1x1xf32>
    %461 = arith.addf %460, %459 : vector<1x1xf32>
    %462 = tpu.reciprocal %461 {approx = true} : vector<1x1xf32> -> vector<1x1xf32>
    %cst_148 = arith.constant dense<0.000000e+00> : vector<1x32xf32>
    %463 = tpu.matmul %456, %438, %cst_148 {dimension_numbers = #tpu.dot_dimension_numbers<[1], [0], [0], [1], [0, 0, 1, 1], [], []>} : vector<1x16xf32>, vector<16x32xf32>, vector<1x32xf32> -> vector<1x32xf32>
    %464 = vector.broadcast %462 : vector<1x1xf32> to vector<1x32xf32>
    %465 = arith.mulf %464, %463 : vector<1x32xf32>
    %c0_149 = arith.constant 0 : index
    %c0_150 = arith.constant 0 : index
    %466 = vector.load %arg5[%c0_149, %c0_150] : memref<32x32xf32, #tpu.memory_space<vmem>>, vector<32x32xf32>
    %cst_151 = arith.constant dense<0.000000e+00> : vector<1x32xf32>
    %467 = tpu.matmul %465, %466, %cst_151 {dimension_numbers = #tpu.dot_dimension_numbers<[1], [0], [0], [1], [0, 0, 1, 1], [], []>} : vector<1x32xf32>, vector<32x32xf32>, vector<1x32xf32> -> vector<1x32xf32>
    %468 = arith.addf %445, %467 : vector<1x32xf32>
    %cst_152 = arith.constant 0.000000e+00 : f32
    %469 = vector.broadcast %cst_152 : f32 to vector<1x32xf32>
    %470 = arith.maximumf %468, %469 : vector<1x32xf32>
    %c7 = arith.constant 7 : index
    %c0_153 = arith.constant 0 : index
    %471 = vector.load %arg6[%c7, %c0_153] : memref<8x32xf32, #tpu.memory_space<vmem>>, vector<1x32xf32>
    tpu.vector_store %arg6[%c7, %c0_153], %470 {strides = array<i32>} : memref<8x32xf32, #tpu.memory_space<vmem>>, vector<1x32xf32>,
    return
  }
  func.func @transform_0(%arg0: i32) -> (i32, i32) {
    %c0_i32 = arith.constant 0 : i32
    %c0_i32_0 = arith.constant 0 : i32
    %c0_i32_1 = arith.constant 0 : i32
    return %c0_i32, %c0_i32_0 : i32, i32
  }
  func.func @transform_1(%arg0: i32) -> (i32, i32) {
    %c0_i32 = arith.constant 0 : i32
    %c0_i32_0 = arith.constant 0 : i32
    %c0_i32_1 = arith.constant 0 : i32
    return %c0_i32, %c0_i32_0 : i32, i32
  }
  func.func @transform_2(%arg0: i32) -> (i32, i32) {
    %c0_i32 = arith.constant 0 : i32
    %c0_i32_0 = arith.constant 0 : i32
    %c0_i32_1 = arith.constant 0 : i32
    return %c0_i32, %c0_i32_0 : i32, i32
  }
  func.func @transform_3(%arg0: i32) -> (i32, i32) {
    %c0_i32 = arith.constant 0 : i32
    %c0_i32_0 = arith.constant 0 : i32
    %c0_i32_1 = arith.constant 0 : i32
    return %c0_i32, %c0_i32_0 : i32, i32
  }
  func.func @transform_4(%arg0: i32) -> (i32, i32) {
    %c0_i32 = arith.constant 0 : i32
    %c0_i32_0 = arith.constant 0 : i32
    %c0_i32_1 = arith.constant 0 : i32
    return %c0_i32, %c0_i32_0 : i32, i32
  }
  func.func @transform_5(%arg0: i32) -> (i32, i32) {
    %c0_i32 = arith.constant 0 : i32
    %c0_i32_0 = arith.constant 0 : i32
    %c0_i32_1 = arith.constant 0 : i32
    return %c0_i32, %c0_i32_0 : i32, i32
  }
}

</mosaic_0001>

<llo_original>
// kernel: tpu_custom_call.1
$region0: #{tpu_custom_call.1}
  #allocation0 [shape = 'u32[]', space=smem, size = 0x4, offset = 0x4, fixed_abs, tag = 'smem constant byte address 0x4 - core index']
  #allocation1 [shape = 'u32[144,128]{1,0:T(1,128)}', space=vmem, size = 0x12000, scoped, tag = 'internal scratch']
  %s0 = inlined_call_operand.hbm [shape: f32[8,32], index: 0, kind: input, shape index: {}]
  %s1 = inlined_call_operand.hbm [shape: f32[32,128], index: 1, kind: input, shape index: {}]
  %s2 = inlined_call_operand.hbm [shape: f32[32,128], index: 2, kind: input, shape index: {}]
  %s3 = inlined_call_operand.vmem [shape: f32[1,128], index: 3, kind: input, shape index: {}]
  %s4 = inlined_call_operand.hbm [shape: f32[32,32], index: 4, kind: input, shape index: {}]
  %s5 = inlined_call_operand.hbm [shape: f32[8,32], index: 5, kind: output, shape index: {}]
  %s6 = sld [smem:[#allocation0]]
  $region46: #{tpu_custom_call.1} parent=0
    _
  %s8 = ssub.s32 1, %s6
  %s9 = scalar_select 0, %s8, %s6
  $region1: #{tpu_custom_call.1} parent=0
    #allocation2 [shape = 'u8[4096]{0}', space=vmem, size = 0x1000, scoped, tag = 'input window, operand 0, single buffered']
    #allocation3 [shape = 's32[1]{0}', space=sflag, size = 0x4, scoped, tag = 'scoped memory for tpu_custom_call.1']
    #allocation4 [shape = 's32[1]{0}', space=sflag, size = 0x4, scoped, tag = 'scoped memory for tpu_custom_call.1']
    #allocation5 [shape = 'u8[16384]{0}', space=vmem, size = 0x4000, scoped, tag = 'input window, operand 1, single buffered']
    #allocation6 [shape = 's32[1]{0}', space=sflag, size = 0x4, scoped, tag = 'scoped memory for tpu_custom_call.1']
    #allocation7 [shape = 'u8[16384]{0}', space=vmem, size = 0x4000, scoped, tag = 'input window, operand 2, single buffered']
    #allocation8 [shape = 'u8[16384]{0}', space=vmem, size = 0x4000, scoped, tag = 'input window, operand 4, single buffered']
    #allocation9 [shape = 's32[1]{0}', space=sflag, size = 0x4, scoped, tag = 'scoped memory for tpu_custom_call.1']
    #allocation10 [shape = 'u8[4096]{0}', space=vmem, size = 0x1000, scoped, tag = 'output window, operand 0, single buffered']
    %10 = vsyncpa [#allocation3], 0
    %11 = vsyncpa [#allocation6], 0
    %12 = vsyncpa [#allocation9], 0
    %13 = vsyncpa [#allocation4], 0
    // Predicated region
    $region2: #{tpu_custom_call.1} parent=1 // pred_check
      _
    $region3: #{tpu_custom_call.1} parent=1 // pred_check_branch
      %15 = sbr.rel (0) target = $region5
    $region4: #{tpu_custom_call.1} parent=1 // pred_region
      %s17 = ssub.s32 128, 128
      %18 = vsyncadd [#allocation3], %s17
      %s20 = sshll.u32 [#allocation2], 4
      %s21 = int_to_ptr.vmem [resolvable:$true] %s20
      %23 = dma.hbm_to_vmem [thread:$0]  %s0, 128, %s21, [#allocation3]
    $region5: #{tpu_custom_call.1} parent=1 // pred_fallthru
      _
    // Predicated region
    $region6: #{tpu_custom_call.1} parent=1 // pred_check
      _
    $region7: #{tpu_custom_call.1} parent=1 // pred_check_branch
      %25 = sbr.rel (0) target = $region9
    $region8: #{tpu_custom_call.1} parent=1 // pred_region
      %s27 = ssub.s32 512, 512
      %28 = vsyncadd [#allocation6], %s27
      %s29 = sshll.u32 [#allocation5], 4
      %s30 = int_to_ptr.vmem [resolvable:$true] %s29
      %35 = dma.hbm_to_vmem [thread:$0]  %s1, 512, %s30, [#allocation6], 128, 128, 8
    $region9: #{tpu_custom_call.1} parent=1 // pred_fallthru
      _
    // Predicated region
    $region10: #{tpu_custom_call.1} parent=1 // pred_check
      _
    $region11: #{tpu_custom_call.1} parent=1 // pred_check_branch
      %37 = sbr.rel (0) target = $region13
    $region12: #{tpu_custom_call.1} parent=1 // pred_region
      %s39 = ssub.s32 512, 512
      %40 = vsyncadd [#allocation6], %s39
      %s41 = sshll.u32 [#allocation7], 4
      %s42 = int_to_ptr.vmem [resolvable:$true] %s41
      %47 = dma.hbm_to_vmem [thread:$0]  %s2, 512, %s42, [#allocation6], 128, 128, 8
    $region13: #{tpu_custom_call.1} parent=1 // pred_fallthru
      _
    // Predicated region
    $region14: #{tpu_custom_call.1} parent=1 // pred_check
      _
    $region15: #{tpu_custom_call.1} parent=1 // pred_check_branch
      %49 = sbr.rel (0) target = $region17
    $region16: #{tpu_custom_call.1} parent=1 // pred_region
      _
    $region17: #{tpu_custom_call.1} parent=1 // pred_fallthru
      _
    // Predicated region
    $region18: #{tpu_custom_call.1} parent=1 // pred_check
      _
    $region19: #{tpu_custom_call.1} parent=1 // pred_check_branch
      %51 = sbr.rel (0) target = $region21
    $region20: #{tpu_custom_call.1} parent=1 // pred_region
      %s53 = ssub.s32 512, 512
      %54 = vsyncadd [#allocation9], %s53
      %s55 = sshll.u32 [#allocation8], 4
      %s56 = int_to_ptr.vmem [resolvable:$true] %s55
      %61 = dma.hbm_to_vmem [thread:$0]  %s4, 512, %s56, [#allocation9], 128, 128, 8
    $region21: #{tpu_custom_call.1} parent=1 // pred_fallthru
      _
    // Predicated region
    $region22: #{tpu_custom_call.1} parent=1 // pred_check
      _
    $region23: #{tpu_custom_call.1} parent=1 // pred_check_branch
      %63 = sbr.rel (0) target = $region25
    $region24: #{tpu_custom_call.1} parent=1 // pred_region
      %64 = dma.done [#allocation3], 128
    $region25: #{tpu_custom_call.1} parent=1 // pred_fallthru
      _
    // Predicated region
    $region26: #{tpu_custom_call.1} parent=1 // pred_check
      _
    $region27: #{tpu_custom_call.1} parent=1 // pred_check_branch
      %66 = sbr.rel (0) target = $region29
    $region28: #{tpu_custom_call.1} parent=1 // pred_region
      %67 = dma.done [#allocation6], 512
    $region29: #{tpu_custom_call.1} parent=1 // pred_fallthru
      _
    // Predicated region
    $region30: #{tpu_custom_call.1} parent=1 // pred_check
      _
    $region31: #{tpu_custom_call.1} parent=1 // pred_check_branch
      %69 = sbr.rel (0) target = $region33
    $region32: #{tpu_custom_call.1} parent=1 // pred_region
      %70 = dma.done [#allocation6], 512
    $region33: #{tpu_custom_call.1} parent=1 // pred_fallthru
      _
    // Predicated region
    $region34: #{tpu_custom_call.1} parent=1 // pred_check
      _
    $region35: #{tpu_custom_call.1} parent=1 // pred_check_branch
      %72 = sbr.rel (0) target = $region37
    $region36: #{tpu_custom_call.1} parent=1 // pred_region
      %73 = dma.done [#allocation9], 512
    $region37: #{tpu_custom_call.1} parent=1 // pred_fallthru
      _
    %v74 = vld [vmem:[#allocation2] sm:$0xff]
    %v75 = vld [vmem:[#allocation5] sm:$0xff]
    %v76 = vld [vmem:[#allocation5 + $0x8] sm:$0xff]
    %v77 = vld [vmem:[#allocation5 + $0x10] sm:$0xff]
    %v78 = vld [vmem:[#allocation5 + $0x18] sm:$0xff]
    %v79 = vld [vmem:[%s3] sm:$0x1]
    %v81 = vlaneseq
    %v82 = vshrl.u32 %v81, 7
    %v83 = vsub.s32 0, %v82
    %v84 = vrot.slane %v79, %v83
    %vm86 = vcmask 261120
    %v88 = vsel %vm86, %v74, 0
    %90 = vmatprep.subr.mxu0 0.0
    %91 = vmatpush1.msra.mxu0 0.0
    %92 = vmatprep.subr.mxu0 0.0
    %93 = vmatpush1.msra.mxu0 0.0
    %94 = vmatprep.subr.mxu0 0.0
    %95 = vmatpush1.msra.mxu0 0.0
    %96 = vmatprep.subr.mxu0 0.0
    %97 = vmatpush1.msra.mxu0 0.0
    %98 = vmatprep.subr.mxu0 0.0
    %99 = vmatpush1.msra.mxu0 0.0
    %100 = vmatprep.subr.mxu0 0.0
    %101 = vmatpush1.msra.mxu0 0.0
    %102 = vmatprep.subr.mxu0 0.0
    %103 = vmatpush1.msra.mxu0 0.0
    %104 = vmatprep.subr.mxu0 0.0
    %105 = vmatpush1.msra.mxu0 0.0
    %106 = vmatprep.subr.mxu0 0.0
    %107 = vmatpush1.msra.mxu0 0.0
    %108 = vmatprep.subr.mxu0 0.0
    %109 = vmatpush1.msra.mxu0 0.0
    %110 = vmatprep.subr.mxu0 0.0
    %111 = vmatpush1.msra.mxu0 0.0
    %112 = vmatprep.subr.mxu0 0.0
    %113 = vmatpush1.msra.mxu0 0.0
    %114 = vmatprep.subr.mxu0 0.0
    %115 = vmatpush1.msra.mxu0 %v78
    %116 = vmatprep.subr.mxu0 0.0
    %117 = vmatpush1.msra.mxu0 %v77
    %118 = vmatprep.subr.mxu0 0.0
    %119 = vmatpush1.msra.mxu0 %v76
    %120 = vmatprep.subr.mxu0 0.0
    %121 = vmatpush1.msra.mxu0 %v75
    %122 = vmatprep.subr.mxu0 0.0
    %123 = vmatpush2.msra.mxu0 0.0
    %124 = vmatprep.subr.mxu0 0.0
    %125 = vmatpush2.msra.mxu0 0.0
    %126 = vmatprep.subr.mxu0 0.0
    %127 = vmatpush2.msra.mxu0 0.0
    %128 = vmatprep.subr.mxu0 0.0
    %129 = vmatpush2.msra.mxu0 0.0
    %130 = vmatprep.subr.mxu0 0.0
    %131 = vmatpush2.msra.mxu0 0.0
    %132 = vmatprep.subr.mxu0 0.0
    %133 = vmatpush2.msra.mxu0 0.0
    %134 = vmatprep.subr.mxu0 0.0
    %135 = vmatpush2.msra.mxu0 0.0
    %136 = vmatprep.subr.mxu0 0.0
    %137 = vmatpush2.msra.mxu0 0.0
    %138 = vmatprep.subr.mxu0 0.0
    %139 = vmatpush2.msra.mxu0 0.0
    %140 = vmatprep.subr.mxu0 0.0
    %141 = vmatpush2.msra.mxu0 0.0
    %142 = vmatprep.subr.mxu0 0.0
    %143 = vmatpush2.msra.mxu0 0.0
    %144 = vmatprep.subr.mxu0 0.0
    %145 = vmatpush2.msra.mxu0 0.0
    %146 = vmatprep.subr.mxu0 0.0
    %147 = vmatpush2.msra.mxu0 0.0
    %148 = vmatprep.subr.mxu0 0.0
    %149 = vmatpush2.msra.mxu0 0.0
    %150 = vmatprep.subr.mxu0 0.0
    %151 = vmatpush2.msra.mxu0 0.0
    %152 = vmatprep.subr.mxu0 0.0
    %153 = vmatpush2.msra.mxu0 0.0
    %154 = vmatprep.mubr.f32.mxu0 0.0
    %155 = vmatmul.mubr.f32.gmra.mxu0 %v88
    %v156 = vpop.f32.mrf.mxu0
    %v157 = vadd.f32 %v84, %v156
    %v158 = vpop.f32.mrf.mxu0
    %159 = vdwg.mxu0
    %v160 = vlaneseq
    %v161 = vshrl.u32 %v160, 7
    %v162 = vadd.s32 %v161, 8
    %v163 = vlaneseq
    %v164 = vand.u32 %v163, 127
    %vm165 = vcmp.eq.s32.totalorder %v161, %v164
    %vm166 = vcmp.eq.s32.totalorder %v162, %v164
    %v167 = vsel %vm165, 1, 0
    %v168 = vsel %vm166, 1, 0
    %v169 = vcvt.s32.f32 %v167
    %v170 = vcvt.s32.f32 %v168
    %v171 = vld [vmem:[#allocation7] sm:$0xff]
    %v172 = vld [vmem:[#allocation7 + $0x8] sm:$0xff]
    %v173 = vld [vmem:[#allocation7 + $0x10] sm:$0xff]
    %v174 = vld [vmem:[#allocation7 + $0x18] sm:$0xff]
    %v176 = vsel %vm86, 0.0, 0
    %178 = vmatprep.subr.mxu0 0.0
    %179 = vmatpush1.msra.mxu0 0.0
    %180 = vmatprep.subr.mxu0 0.0
    %181 = vmatpush1.msra.mxu0 0.0
    %182 = vmatprep.subr.mxu0 0.0
    %183 = vmatpush1.msra.mxu0 0.0
    %184 = vmatprep.subr.mxu0 0.0
    %185 = vmatpush1.msra.mxu0 0.0
    %186 = vmatprep.subr.mxu0 0.0
    %187 = vmatpush1.msra.mxu0 0.0
    %188 = vmatprep.subr.mxu0 0.0
    %189 = vmatpush1.msra.mxu0 0.0
    %190 = vmatprep.subr.mxu0 0.0
    %191 = vmatpush1.msra.mxu0 0.0
    %192 = vmatprep.subr.mxu0 0.0
    %193 = vmatpush1.msra.mxu0 0.0
    %194 = vmatprep.subr.mxu0 0.0
    %195 = vmatpush1.msra.mxu0 0.0
    %196 = vmatprep.subr.mxu0 0.0
    %197 = vmatpush1.msra.mxu0 0.0
    %198 = vmatprep.subr.mxu0 0.0
    %199 = vmatpush1.msra.mxu0 0.0
    %200 = vmatprep.subr.mxu0 0.0
    %201 = vmatpush1.msra.mxu0 0.0
    %202 = vmatprep.subr.mxu0 0.0
    %203 = vmatpush1.msra.mxu0 %v174
    %204 = vmatprep.subr.mxu0 0.0
    %205 = vmatpush1.msra.mxu0 %v173
    %206 = vmatprep.subr.mxu0 0.0
    %207 = vmatpush1.msra.mxu0 %v172
    %208 = vmatprep.subr.mxu0 0.0
    %209 = vmatpush1.msra.mxu0 %v171
    %210 = vmatprep.subr.mxu0 0.0
    %211 = vmatpush2.msra.mxu0 0.0
    %212 = vmatprep.subr.mxu0 0.0
    %213 = vmatpush2.msra.mxu0 0.0
    %214 = vmatprep.subr.mxu0 0.0
    %215 = vmatpush2.msra.mxu0 0.0
    %216 = vmatprep.subr.mxu0 0.0
    %217 = vmatpush2.msra.mxu0 0.0
    %218 = vmatprep.subr.mxu0 0.0
    %219 = vmatpush2.msra.mxu0 0.0
    %220 = vmatprep.subr.mxu0 0.0
    %221 = vmatpush2.msra.mxu0 0.0
    %222 = vmatprep.subr.mxu0 0.0
    %223 = vmatpush2.msra.mxu0 0.0
    %224 = vmatprep.subr.mxu0 0.0
    %225 = vmatpush2.msra.mxu0 0.0
    %226 = vmatprep.subr.mxu0 0.0
    %227 = vmatpush2.msra.mxu0 0.0
    %228 = vmatprep.subr.mxu0 0.0
    %229 = vmatpush2.msra.mxu0 0.0
    %230 = vmatprep.subr.mxu0 0.0
    %231 = vmatpush2.msra.mxu0 0.0
    %232 = vmatprep.subr.mxu0 0.0
    %233 = vmatpush2.msra.mxu0 0.0
    %234 = vmatprep.subr.mxu0 0.0
    %235 = vmatpush2.msra.mxu0 0.0
    %236 = vmatprep.subr.mxu0 0.0
    %237 = vmatpush2.msra.mxu0 0.0
    %238 = vmatprep.subr.mxu0 0.0
    %239 = vmatpush2.msra.mxu0 0.0
    %240 = vmatprep.subr.mxu0 0.0
    %241 = vmatpush2.msra.mxu0 0.0
    %242 = vmatprep.mubr.f32.mxu0 0.0
    %243 = vmatmul.mubr.f32.gmra.mxu0 %v176
    %v244 = vpop.f32.mrf.mxu0
    %v245 = vadd.f32 0.0, %v244
    %v246 = vpop.f32.mrf.mxu0
    %247 = vdwg.mxu0
    %v248 = vadd.f32 %v157, %v245
    %vm249 = vcmask 122880
    %v250 = vsel %vm249, %v248, -inf
    %251 = vmax.xlane.f32.xlu0 %v250
    %v252 = vpop.xlane.xlu0 %251
    %v253 = vsub.f32 %v248, %v252
    %v254 = vmul.f32 %v253, 1.442695
    %v255 = vpow.pop %v254
    %v256 = vsel %vm249, %v255, 0.0
    %257 = vadd.xlane.f32.xlu0 %v256
    %v258 = vpop.xlane.xlu0 %257
    %v259 = vrcp.pop %v258
    %v260 = vmul.f32 %v255, %v259
    %v261 = vsub.f32 0.0, %v248
    %v262 = vmul.f32 %v261, 1.442695
    %v263 = vpow.pop %v262
    %v264 = vadd.f32 %v263, 1.0
    %v265 = vrcp.pop %v264
    %vm266 = vcmask 130048
    %v268 = vsel %vm266, %v260, 0
    %270 = vmatprep.subr.mxu0 0.0
    %271 = vmatpush1.msra.mxu0 0.0
    %272 = vmatprep.subr.mxu0 0.0
    %273 = vmatpush1.msra.mxu0 0.0
    %274 = vmatprep.subr.mxu0 0.0
    %275 = vmatpush1.msra.mxu0 0.0
    %276 = vmatprep.subr.mxu0 0.0
    %277 = vmatpush1.msra.mxu0 0.0
    %278 = vmatprep.subr.mxu0 0.0
    %279 = vmatpush1.msra.mxu0 0.0
    %280 = vmatprep.subr.mxu0 0.0
    %281 = vmatpush1.msra.mxu0 0.0
    %282 = vmatprep.subr.mxu0 0.0
    %283 = vmatpush1.msra.mxu0 0.0
    %284 = vmatprep.subr.mxu0 0.0
    %285 = vmatpush1.msra.mxu0 0.0
    %286 = vmatprep.subr.mxu0 0.0
    %287 = vmatpush1.msra.mxu0 0.0
    %288 = vmatprep.subr.mxu0 0.0
    %289 = vmatpush1.msra.mxu0 0.0
    %290 = vmatprep.subr.mxu0 0.0
    %291 = vmatpush1.msra.mxu0 0.0
    %292 = vmatprep.subr.mxu0 0.0
    %293 = vmatpush1.msra.mxu0 0.0
    %294 = vmatprep.subr.mxu0 0.0
    %295 = vmatpush1.msra.mxu0 0.0
    %296 = vmatprep.subr.mxu0 0.0
    %297 = vmatpush1.msra.mxu0 0.0
    %298 = vmatprep.subr.mxu0 0.0
    %299 = vmatpush1.msra.mxu0 0.0
    %300 = vmatprep.subr.mxu0 0.0
    %301 = vmatpush1.msra.mxu0 0.0
    %302 = vmatprep.subr.mxu0 0.0
    %303 = vmatpush2.msra.mxu0 0.0
    %304 = vmatprep.subr.mxu0 0.0
    %305 = vmatpush2.msra.mxu0 0.0
    %306 = vmatprep.subr.mxu0 0.0
    %307 = vmatpush2.msra.mxu0 0.0
    %308 = vmatprep.subr.mxu0 0.0
    %309 = vmatpush2.msra.mxu0 0.0
    %310 = vmatprep.subr.mxu0 0.0
    %311 = vmatpush2.msra.mxu0 0.0
    %312 = vmatprep.subr.mxu0 0.0
    %313 = vmatpush2.msra.mxu0 0.0
    %314 = vmatprep.subr.mxu0 0.0
    %315 = vmatpush2.msra.mxu0 0.0
    %316 = vmatprep.subr.mxu0 0.0
    %317 = vmatpush2.msra.mxu0 0.0
    %318 = vmatprep.subr.mxu0 0.0
    %319 = vmatpush2.msra.mxu0 0.0
    %320 = vmatprep.subr.mxu0 0.0
    %321 = vmatpush2.msra.mxu0 0.0
    %322 = vmatprep.subr.mxu0 0.0
    %323 = vmatpush2.msra.mxu0 0.0
    %324 = vmatprep.subr.mxu0 0.0
    %325 = vmatpush2.msra.mxu0 0.0
    %326 = vmatprep.subr.mxu0 0.0
    %327 = vmatpush2.msra.mxu0 0.0
    %328 = vmatprep.subr.mxu0 0.0
    %329 = vmatpush2.msra.mxu0 0.0
    %330 = vmatprep.subr.mxu0 0.0
    %331 = vmatpush2.msra.mxu0 0.0
    %332 = vmatprep.subr.mxu0 0.0
    %333 = vmatpush2.msra.mxu0 0.0
    %334 = vmatprep.mubr.f32.mxu0 0.0
    %335 = vmatmul.mubr.f32.gmra.mxu0 %v268
    %v336 = vpop.f32.mrf.mxu0
    %v337 = vadd.f32 0.0, %v336
    %v338 = vpop.f32.mrf.mxu0
    %339 = vdwg.mxu0
    %341 = vset.pattern.permute.xlu0 96
    %342 = vperm.xlu0 %341, %v265
    %v343 = vpop.permute.xlu0 %342
    %v345 = vmul.f32 %v343, %v337
    %v346 = vld [vmem:[#allocation8] sm:$0xff]
    %v347 = vld [vmem:[#allocation8 + $0x8] sm:$0xff]
    %v348 = vld [vmem:[#allocation8 + $0x10] sm:$0xff]
    %v349 = vld [vmem:[#allocation8 + $0x18] sm:$0xff]
    %v351 = vsel %vm86, %v345, 0
    %353 = vmatprep.subr.mxu0 0.0
    %354 = vmatpush1.msra.mxu0 0.0
    %355 = vmatprep.subr.mxu0 0.0
    %356 = vmatpush1.msra.mxu0 0.0
    %357 = vmatprep.subr.mxu0 0.0
    %358 = vmatpush1.msra.mxu0 0.0
    %359 = vmatprep.subr.mxu0 0.0
    %360 = vmatpush1.msra.mxu0 0.0
    %361 = vmatprep.subr.mxu0 0.0
    %362 = vmatpush1.msra.mxu0 0.0
    %363 = vmatprep.subr.mxu0 0.0
    %364 = vmatpush1.msra.mxu0 0.0
    %365 = vmatprep.subr.mxu0 0.0
    %366 = vmatpush1.msra.mxu0 0.0
    %367 = vmatprep.subr.mxu0 0.0
    %368 = vmatpush1.msra.mxu0 0.0
    %369 = vmatprep.subr.mxu0 0.0
    %370 = vmatpush1.msra.mxu0 0.0
    %371 = vmatprep.subr.mxu0 0.0
    %372 = vmatpush1.msra.mxu0 0.0
    %373 = vmatprep.subr.mxu0 0.0
    %374 = vmatpush1.msra.mxu0 0.0
    %375 = vmatprep.subr.mxu0 0.0
    %376 = vmatpush1.msra.mxu0 0.0
    %377 = vmatprep.subr.mxu0 0.0
    %378 = vmatpush1.msra.mxu0 %v349
    %379 = vmatprep.subr.mxu0 0.0
    %380 = vmatpush1.msra.mxu0 %v348
    %381 = vmatprep.subr.mxu0 0.0
    %382 = vmatpush1.msra.mxu0 %v347
    %383 = vmatprep.subr.mxu0 0.0
    %384 = vmatpush1.msra.mxu0 %v346
    %385 = vmatprep.subr.mxu0 0.0
    %386 = vmatpush2.msra.mxu0 0.0
    %387 = vmatprep.subr.mxu0 0.0
    %388 = vmatpush2.msra.mxu0 0.0
    %389 = vmatprep.subr.mxu0 0.0
    %390 = vmatpush2.msra.mxu0 0.0
    %391 = vmatprep.subr.mxu0 0.0
    %392 = vmatpush2.msra.mxu0 0.0
    %393 = vmatprep.subr.mxu0 0.0
    %394 = vmatpush2.msra.mxu0 0.0
    %395 = vmatprep.subr.mxu0 0.0
    %396 = vmatpush2.msra.mxu0 0.0
    %397 = vmatprep.subr.mxu0 0.0
    %398 = vmatpush2.msra.mxu0 0.0
    %399 = vmatprep.subr.mxu0 0.0
    %400 = vmatpush2.msra.mxu0 0.0
    %401 = vmatprep.subr.mxu0 0.0
    %402 = vmatpush2.msra.mxu0 0.0
    %403 = vmatprep.subr.mxu0 0.0
    %404 = vmatpush2.msra.mxu0 0.0
    %405 = vmatprep.subr.mxu0 0.0
    %406 = vmatpush2.msra.mxu0 0.0
    %407 = vmatprep.subr.mxu0 0.0
    %408 = vmatpush2.msra.mxu0 0.0
    %409 = vmatprep.subr.mxu0 0.0
    %410 = vmatpush2.msra.mxu0 0.0
    %411 = vmatprep.subr.mxu0 0.0
    %412 = vmatpush2.msra.mxu0 0.0
    %413 = vmatprep.subr.mxu0 0.0
    %414 = vmatpush2.msra.mxu0 0.0
    %415 = vmatprep.subr.mxu0 0.0
    %416 = vmatpush2.msra.mxu0 0.0
    %417 = vmatprep.mubr.f32.mxu0 0.0
    %418 = vmatmul.mubr.f32.gmra.mxu0 %v351
    %v419 = vpop.f32.mrf.mxu0
    %v420 = vadd.f32 0.0, %v419
    %v421 = vpop.f32.mrf.mxu0
    %422 = vdwg.mxu0
    %424 = vrot.lane.b32.xlu0 %v420, 32
    %v425 = vpop.permute.xlu0 %424
    %v427 = vadd.f32 %v248, %v425
    %v428 = vmax.f32 %v427, 0.0
    %v429 = vmax.f32 %v248, 0.0
    %vm430 = vcmask 254080
    %v431 = vsel %vm430, %v248, -inf
    %432 = vmax.xlane.f32.xlu0 %v431
    %v433 = vpop.xlane.xlu0 %432
    %v434 = vsub.f32 %v248, %v433
    %v435 = vmul.f32 %v434, 1.442695
    %v436 = vpow.pop %v435
    %438 = vrot.lane.b32.xlu0 %v436, 112
    %v439 = vpop.permute.xlu0 %438
    %v441 = vsel %vm249, %v439, 0.0
    %442 = vadd.xlane.f32.xlu0 %v441
    %v443 = vpop.xlane.xlu0 %442
    %v444 = vrcp.pop %v443
    %v445 = vmul.f32 %v436, %v444
    %v446 = vlaneseq
    %v447 = vshrl.u32 %v446, 7
    %v448 = vsub.s32 0, %v447
    %v449 = vrot.slane %v445, %v448
    %451 = vrot.lane.b32.xlu0 %v449, 112
    %v452 = vpop.permute.xlu0 %451
    %v454 = vmul.f32 %v169, %v452
    %v455 = vmul.f32 %v170, %v452
    %456 = vset.pattern.permute.xlu0 97
    %457 = vperm.xlu0 %456, %v265
    %v458 = vpop.permute.xlu0 %457
    %v460 = vmul.f32 %v458, %v429
    %v461 = vlaneseq
    %v462 = vshrl.u32 %v461, 7
    %v463 = vsub.s32 0, %v462
    %v464 = vrot.slane %v460, %v463
    %466 = vrot.lane.b32.xlu0 %v464, 64
    %v467 = vpop.permute.xlu0 %466
    %v470 = vsel %vm266, %v454, 0
    %v473 = vsel %vm266, %v455, 0
    %475 = vmatprep.subr.mxu0 0.0
    %476 = vmatpush1.msra.mxu0 0.0
    %477 = vmatprep.subr.mxu0 0.0
    %478 = vmatpush1.msra.mxu0 0.0
    %479 = vmatprep.subr.mxu0 0.0
    %480 = vmatpush1.msra.mxu0 0.0
    %481 = vmatprep.subr.mxu0 0.0
    %482 = vmatpush1.msra.mxu0 0.0
    %483 = vmatprep.subr.mxu0 0.0
    %484 = vmatpush1.msra.mxu0 0.0
    %485 = vmatprep.subr.mxu0 0.0
    %486 = vmatpush1.msra.mxu0 0.0
    %487 = vmatprep.subr.mxu0 0.0
    %488 = vmatpush1.msra.mxu0 0.0
    %489 = vmatprep.subr.mxu0 0.0
    %490 = vmatpush1.msra.mxu0 0.0
    %491 = vmatprep.subr.mxu0 0.0
    %492 = vmatpush1.msra.mxu0 0.0
    %493 = vmatprep.subr.mxu0 0.0
    %494 = vmatpush1.msra.mxu0 0.0
    %495 = vmatprep.subr.mxu0 0.0
    %496 = vmatpush1.msra.mxu0 0.0
    %497 = vmatprep.subr.mxu0 0.0
    %498 = vmatpush1.msra.mxu0 0.0
    %499 = vmatprep.subr.mxu0 0.0
    %500 = vmatpush1.msra.mxu0 0.0
    %501 = vmatprep.subr.mxu0 0.0
    %502 = vmatpush1.msra.mxu0 0.0
    %503 = vmatprep.subr.mxu0 0.0
    %504 = vmatpush1.msra.mxu0 %v467
    %505 = vmatprep.subr.mxu0 0.0
    %506 = vmatpush1.msra.mxu0 %v467
    %507 = vmatprep.subr.mxu0 0.0
    %508 = vmatpush2.msra.mxu0 0.0
    %509 = vmatprep.subr.mxu0 0.0
    %510 = vmatpush2.msra.mxu0 0.0
    %511 = vmatprep.subr.mxu0 0.0
    %512 = vmatpush2.msra.mxu0 0.0
    %513 = vmatprep.subr.mxu0 0.0
    %514 = vmatpush2.msra.mxu0 0.0
    %515 = vmatprep.subr.mxu0 0.0
    %516 = vmatpush2.msra.mxu0 0.0
    %517 = vmatprep.subr.mxu0 0.0
    %518 = vmatpush2.msra.mxu0 0.0
    %519 = vmatprep.subr.mxu0 0.0
    %520 = vmatpush2.msra.mxu0 0.0
    %521 = vmatprep.subr.mxu0 0.0
    %522 = vmatpush2.msra.mxu0 0.0
    %523 = vmatprep.subr.mxu0 0.0
    %524 = vmatpush2.msra.mxu0 0.0
    %525 = vmatprep.subr.mxu0 0.0
    %526 = vmatpush2.msra.mxu0 0.0
    %527 = vmatprep.subr.mxu0 0.0
    %528 = vmatpush2.msra.mxu0 0.0
    %529 = vmatprep.subr.mxu0 0.0
    %530 = vmatpush2.msra.mxu0 0.0
    %531 = vmatprep.subr.mxu0 0.0
    %532 = vmatpush2.msra.mxu0 0.0
    %533 = vmatprep.subr.mxu0 0.0
    %534 = vmatpush2.msra.mxu0 0.0
    %535 = vmatprep.subr.mxu0 0.0
    %536 = vmatpush2.msra.mxu0 0.0
    %537 = vmatprep.subr.mxu0 0.0
    %538 = vmatpush2.msra.mxu0 0.0
    %539 = vmatprep.mubr.f32.mxu0 0.0
    %540 = vmatmul.mubr.f32.gmra.mxu0 %v470
    %v541 = vpop.f32.mrf.mxu0
    %v542 = vadd.f32 0.0, %v541
    %v543 = vpop.f32.mrf.mxu0
    %544 = vmatprep.mubr.f32.mxu0 0.0
    %545 = vmatmul.mubr.f32.gmra.mxu0 %v473
    %v546 = vpop.f32.mrf.mxu0
    %v547 = vadd.f32 0.0, %v546
    %v548 = vpop.f32.mrf.mxu0
    %549 = vdwg.mxu0
    %551 = vrot.lane.b32.xlu0 %v428, 96
    %v552 = vpop.permute.xlu0 %551
    %vm554 = vcmask 253952
    %555 = vst.msk [vmem:[#allocation10] sm:$0x1] %vm554, %v552
    %v556 = vld [vmem:[#allocation7] sm:$0xff]
    %v557 = vld [vmem:[#allocation7 + $0x8] sm:$0xff]
    %v558 = vld [vmem:[#allocation7 + $0x10] sm:$0xff]
    %v559 = vld [vmem:[#allocation7 + $0x18] sm:$0xff]
    %v560 = vsel %vm86, %v552, 0
    %562 = vmatprep.subr.mxu0 0.0
    %563 = vmatpush1.msra.mxu0 0.0
    %564 = vmatprep.subr.mxu0 0.0
    %565 = vmatpush1.msra.mxu0 0.0
    %566 = vmatprep.subr.mxu0 0.0
    %567 = vmatpush1.msra.mxu0 0.0
    %568 = vmatprep.subr.mxu0 0.0
    %569 = vmatpush1.msra.mxu0 0.0
    %570 = vmatprep.subr.mxu0 0.0
    %571 = vmatpush1.msra.mxu0 0.0
    %572 = vmatprep.subr.mxu0 0.0
    %573 = vmatpush1.msra.mxu0 0.0
    %574 = vmatprep.subr.mxu0 0.0
    %575 = vmatpush1.msra.mxu0 0.0
    %576 = vmatprep.subr.mxu0 0.0
    %577 = vmatpush1.msra.mxu0 0.0
    %578 = vmatprep.subr.mxu0 0.0
    %579 = vmatpush1.msra.mxu0 0.0
    %580 = vmatprep.subr.mxu0 0.0
    %581 = vmatpush1.msra.mxu0 0.0
    %582 = vmatprep.subr.mxu0 0.0
    %583 = vmatpush1.msra.mxu0 0.0
    %584 = vmatprep.subr.mxu0 0.0
    %585 = vmatpush1.msra.mxu0 0.0
    %586 = vmatprep.subr.mxu0 0.0
    %587 = vmatpush1.msra.mxu0 %v559
    %588 = vmatprep.subr.mxu0 0.0
    %589 = vmatpush1.msra.mxu0 %v558
    %590 = vmatprep.subr.mxu0 0.0
    %591 = vmatpush1.msra.mxu0 %v557
    %592 = vmatprep.subr.mxu0 0.0
    %593 = vmatpush1.msra.mxu0 %v556
    %594 = vmatprep.subr.mxu0 0.0
    %595 = vmatpush2.msra.mxu0 0.0
    %596 = vmatprep.subr.mxu0 0.0
    %597 = vmatpush2.msra.mxu0 0.0
    %598 = vmatprep.subr.mxu0 0.0
    %599 = vmatpush2.msra.mxu0 0.0
    %600 = vmatprep.subr.mxu0 0.0
    %601 = vmatpush2.msra.mxu0 0.0
    %602 = vmatprep.subr.mxu0 0.0
    %603 = vmatpush2.msra.mxu0 0.0
    %604 = vmatprep.subr.mxu0 0.0
    %605 = vmatpush2.msra.mxu0 0.0
    %606 = vmatprep.subr.mxu0 0.0
    %607 = vmatpush2.msra.mxu0 0.0
    %608 = vmatprep.subr.mxu0 0.0
    %609 = vmatpush2.msra.mxu0 0.0
    %610 = vmatprep.subr.mxu0 0.0
    %611 = vmatpush2.msra.mxu0 0.0
    %612 = vmatprep.subr.mxu0 0.0
    %613 = vmatpush2.msra.mxu0 0.0
    %614 = vmatprep.subr.mxu0 0.0
    %615 = vmatpush2.msra.mxu0 0.0
    %616 = vmatprep.subr.mxu0 0.0
    %617 = vmatpush2.msra.mxu0 0.0
    %618 = vmatprep.subr.mxu0 0.0
    %619 = vmatpush2.msra.mxu0 0.0
    %620 = vmatprep.subr.mxu0 0.0
    %621 = vmatpush2.msra.mxu0 0.0
    %622 = vmatprep.subr.mxu0 0.0
    %623 = vmatpush2.msra.mxu0 0.0
    %624 = vmatprep.subr.mxu0 0.0
    %625 = vmatpush2.msra.mxu0 0.0
    %626 = vmatprep.mubr.f32.mxu0 0.0
    %627 = vmatmul.mubr.f32.gmra.mxu0 %v560
    %v628 = vpop.f32.mrf.mxu0
    %v629 = vadd.f32 0.0, %v628
    %v630 = vpop.f32.mrf.mxu0
    %631 = vdwg.mxu0
    %v633 = vrot.slane %v629, 7
    %v635 = vadd.f32 %v157, %v633
    %vm636 = vcmask 123905
    %v637 = vsel %vm636, %v635, -inf
    %638 = vmax.xlane.f32.xlu0 %v637
    %v639 = vpop.xlane.xlu0 %638
    %v640 = vsub.f32 %v635, %v639
    %v641 = vmul.f32 %v640, 1.442695
    %v642 = vpow.pop %v641
    %v643 = vsel %vm636, %v642, 0.0
    %644 = vadd.xlane.f32.xlu0 %v643
    %v645 = vpop.xlane.xlu0 %644
    %v646 = vrcp.pop %v645
    %v647 = vmul.f32 %v642, %v646
    %v648 = vsub.f32 0.0, %v635
    %v649 = vmul.f32 %v648, 1.442695
    %v650 = vpow.pop %v649
    %v651 = vadd.f32 %v650, 1.0
    %v652 = vrcp.pop %v651
    %v654 = vrot.slane %v647, 1
    %v655 = vsel %vm266, %v654, 0
    %657 = vmatprep.subr.mxu0 0.0
    %658 = vmatpush1.msra.mxu0 0.0
    %659 = vmatprep.subr.mxu0 0.0
    %660 = vmatpush1.msra.mxu0 0.0
    %661 = vmatprep.subr.mxu0 0.0
    %662 = vmatpush1.msra.mxu0 0.0
    %663 = vmatprep.subr.mxu0 0.0
    %664 = vmatpush1.msra.mxu0 0.0
    %665 = vmatprep.subr.mxu0 0.0
    %666 = vmatpush1.msra.mxu0 0.0
    %667 = vmatprep.subr.mxu0 0.0
    %668 = vmatpush1.msra.mxu0 0.0
    %669 = vmatprep.subr.mxu0 0.0
    %670 = vmatpush1.msra.mxu0 0.0
    %671 = vmatprep.subr.mxu0 0.0
    %672 = vmatpush1.msra.mxu0 0.0
    %673 = vmatprep.subr.mxu0 0.0
    %674 = vmatpush1.msra.mxu0 0.0
    %675 = vmatprep.subr.mxu0 0.0
    %676 = vmatpush1.msra.mxu0 0.0
    %677 = vmatprep.subr.mxu0 0.0
    %678 = vmatpush1.msra.mxu0 0.0
    %679 = vmatprep.subr.mxu0 0.0
    %680 = vmatpush1.msra.mxu0 0.0
    %681 = vmatprep.subr.mxu0 0.0
    %682 = vmatpush1.msra.mxu0 0.0
    %683 = vmatprep.subr.mxu0 0.0
    %684 = vmatpush1.msra.mxu0 0.0
    %685 = vmatprep.subr.mxu0 0.0
    %686 = vmatpush1.msra.mxu0 %v547
    %687 = vmatprep.subr.mxu0 0.0
    %688 = vmatpush1.msra.mxu0 %v542
    %689 = vmatprep.subr.mxu0 0.0
    %690 = vmatpush2.msra.mxu0 0.0
    %691 = vmatprep.subr.mxu0 0.0
    %692 = vmatpush2.msra.mxu0 0.0
    %693 = vmatprep.subr.mxu0 0.0
    %694 = vmatpush2.msra.mxu0 0.0
    %695 = vmatprep.subr.mxu0 0.0
    %696 = vmatpush2.msra.mxu0 0.0
    %697 = vmatprep.subr.mxu0 0.0
    %698 = vmatpush2.msra.mxu0 0.0
    %699 = vmatprep.subr.mxu0 0.0
    %700 = vmatpush2.msra.mxu0 0.0
    %701 = vmatprep.subr.mxu0 0.0
    %702 = vmatpush2.msra.mxu0 0.0
    %703 = vmatprep.subr.mxu0 0.0
    %704 = vmatpush2.msra.mxu0 0.0
    %705 = vmatprep.subr.mxu0 0.0
    %706 = vmatpush2.msra.mxu0 0.0
    %707 = vmatprep.subr.mxu0 0.0
    %708 = vmatpush2.msra.mxu0 0.0
    %709 = vmatprep.subr.mxu0 0.0
    %710 = vmatpush2.msra.mxu0 0.0
    %711 = vmatprep.subr.mxu0 0.0
    %712 = vmatpush2.msra.mxu0 0.0
    %713 = vmatprep.subr.mxu0 0.0
    %714 = vmatpush2.msra.mxu0 0.0
    %715 = vmatprep.subr.mxu0 0.0
    %716 = vmatpush2.msra.mxu0 0.0
    %717 = vmatprep.subr.mxu0 0.0
    %718 = vmatpush2.msra.mxu0 0.0
    %719 = vmatprep.subr.mxu0 0.0
    %720 = vmatpush2.msra.mxu0 0.0
    %721 = vmatprep.mubr.f32.mxu0 0.0
    %722 = vmatmul.mubr.f32.gmra.mxu0 %v655
    %v723 = vpop.f32.mrf.mxu0
    %v724 = vadd.f32 0.0, %v723
    %v725 = vpop.f32.mrf.mxu0
    %726 = vdwg.mxu0
    %728 = vset.pattern.permute.xlu0 96
    %729 = vperm.xlu0 %728, %v652
    %v730 = vpop.permute.xlu0 %729
    %v733 = vrot.slane %v724, 7
    %v735 = vmul.f32 %v730, %v733
    %v736 = vld [vmem:[#allocation8] sm:$0xff]
    %v737 = vld [vmem:[#allocation8 + $0x8] sm:$0xff]
    %v738 = vld [vmem:[#allocation8 + $0x10] sm:$0xff]
    %v739 = vld [vmem:[#allocation8 + $0x18] sm:$0xff]
    %v741 = vrot.slane %v735, 1
    %v742 = vsel %vm86, %v741, 0
    %744 = vmatprep.subr.mxu0 0.0
    %745 = vmatpush1.msra.mxu0 0.0
    %746 = vmatprep.subr.mxu0 0.0
    %747 = vmatpush1.msra.mxu0 0.0
    %748 = vmatprep.subr.mxu0 0.0
    %749 = vmatpush1.msra.mxu0 0.0
    %750 = vmatprep.subr.mxu0 0.0
    %751 = vmatpush1.msra.mxu0 0.0
    %752 = vmatprep.subr.mxu0 0.0
    %753 = vmatpush1.msra.mxu0 0.0
    %754 = vmatprep.subr.mxu0 0.0
    %755 = vmatpush1.msra.mxu0 0.0
    %756 = vmatprep.subr.mxu0 0.0
    %757 = vmatpush1.msra.mxu0 0.0
    %758 = vmatprep.subr.mxu0 0.0
    %759 = vmatpush1.msra.mxu0 0.0
    %760 = vmatprep.subr.mxu0 0.0
    %761 = vmatpush1.msra.mxu0 0.0
    %762 = vmatprep.subr.mxu0 0.0
    %763 = vmatpush1.msra.mxu0 0.0
    %764 = vmatprep.subr.mxu0 0.0
    %765 = vmatpush1.msra.mxu0 0.0
    %766 = vmatprep.subr.mxu0 0.0
    %767 = vmatpush1.msra.mxu0 0.0
    %768 = vmatprep.subr.mxu0 0.0
    %769 = vmatpush1.msra.mxu0 %v739
    %770 = vmatprep.subr.mxu0 0.0
    %771 = vmatpush1.msra.mxu0 %v738
    %772 = vmatprep.subr.mxu0 0.0
    %773 = vmatpush1.msra.mxu0 %v737
    %774 = vmatprep.subr.mxu0 0.0
    %775 = vmatpush1.msra.mxu0 %v736
    %776 = vmatprep.subr.mxu0 0.0
    %777 = vmatpush2.msra.mxu0 0.0
    %778 = vmatprep.subr.mxu0 0.0
    %779 = vmatpush2.msra.mxu0 0.0
    %780 = vmatprep.subr.mxu0 0.0
    %781 = vmatpush2.msra.mxu0 0.0
    %782 = vmatprep.subr.mxu0 0.0
    %783 = vmatpush2.msra.mxu0 0.0
    %784 = vmatprep.subr.mxu0 0.0
    %785 = vmatpush2.msra.mxu0 0.0
    %786 = vmatprep.subr.mxu0 0.0
    %787 = vmatpush2.msra.mxu0 0.0
    %788 = vmatprep.subr.mxu0 0.0
    %789 = vmatpush2.msra.mxu0 0.0
    %790 = vmatprep.subr.mxu0 0.0
    %791 = vmatpush2.msra.mxu0 0.0
    %792 = vmatprep.subr.mxu0 0.0
    %793 = vmatpush2.msra.mxu0 0.0
    %794 = vmatprep.subr.mxu0 0.0
    %795 = vmatpush2.msra.mxu0 0.0
    %796 = vmatprep.subr.mxu0 0.0
    %797 = vmatpush2.msra.mxu0 0.0
    %798 = vmatprep.subr.mxu0 0.0
    %799 = vmatpush2.msra.mxu0 0.0
    %800 = vmatprep.subr.mxu0 0.0
    %801 = vmatpush2.msra.mxu0 0.0
    %802 = vmatprep.subr.mxu0 0.0
    %803 = vmatpush2.msra.mxu0 0.0
    %804 = vmatprep.subr.mxu0 0.0
    %805 = vmatpush2.msra.mxu0 0.0
    %806 = vmatprep.subr.mxu0 0.0
    %807 = vmatpush2.msra.mxu0 0.0
    %808 = vmatprep.mubr.f32.mxu0 0.0
    %809 = vmatmul.mubr.f32.gmra.mxu0 %v742
    %v810 = vpop.f32.mrf.mxu0
    %v811 = vadd.f32 0.0, %v810
    %v812 = vpop.f32.mrf.mxu0
    %813 = vdwg.mxu0
    %v815 = vrot.slane %v811, 7
    %816 = vrot.lane.b32.xlu0 %v815, 32
    %v817 = vpop.permute.xlu0 %816
    %v819 = vadd.f32 %v635, %v817
    %v820 = vmax.f32 %v819, 0.0
    %v821 = vmax.f32 %v635, 0.0
    %vm822 = vcmask 255105
    %v823 = vsel %vm822, %v635, -inf
    %824 = vmax.xlane.f32.xlu0 %v823
    %v825 = vpop.xlane.xlu0 %824
    %v826 = vsub.f32 %v635, %v825
    %v827 = vmul.f32 %v826, 1.442695
    %v828 = vpow.pop %v827
    %830 = vrot.lane.b32.xlu0 %v828, 112
    %v831 = vpop.permute.xlu0 %830
    %v833 = vsel %vm636, %v831, 0.0
    %834 = vadd.xlane.f32.xlu0 %v833
    %v835 = vpop.xlane.xlu0 %834
    %v836 = vrcp.pop %v835
    %v837 = vmul.f32 %v828, %v836
    %v838 = vlaneseq
    %v839 = vshrl.u32 %v838, 7
    %v840 = vsub.s32 1, %v839
    %v841 = vrot.slane %v837, %v840
    %843 = vrot.lane.b32.xlu0 %v841, 112
    %v844 = vpop.permute.xlu0 %843
    %v846 = vmul.f32 %v169, %v844
    %v847 = vmul.f32 %v170, %v844
    %848 = vset.pattern.permute.xlu0 97
    %849 = vperm.xlu0 %848, %v652
    %v850 = vpop.permute.xlu0 %849
    %v852 = vmul.f32 %v850, %v821
    %v853 = vlaneseq
    %v854 = vshrl.u32 %v853, 7
    %v855 = vsub.s32 1, %v854
    %v856 = vrot.slane %v852, %v855
    %859 = vrot.lane.b32.xlu0 %v542, 64
    %v860 = vpop.permute.xlu0 %859
    %861 = vrot.lane.b32.xlu0 %v547, 64
    %v862 = vpop.permute.xlu0 %861
    %v865 = vsub.f32 %v856, %v860
    %v866 = vsub.f32 %v856, %v862
    %869 = vrot.lane.b32.xlu0 %v865, 64
    %v870 = vpop.permute.xlu0 %869
    %871 = vrot.lane.b32.xlu0 %v866, 64
    %v872 = vpop.permute.xlu0 %871
    %v876 = vsel %vm266, %v846, 0
    %v879 = vsel %vm266, %v847, 0
    %881 = vmatprep.subr.mxu0 0.0
    %882 = vmatpush1.msra.mxu0 0.0
    %883 = vmatprep.subr.mxu0 0.0
    %884 = vmatpush1.msra.mxu0 0.0
    %885 = vmatprep.subr.mxu0 0.0
    %886 = vmatpush1.msra.mxu0 0.0
    %887 = vmatprep.subr.mxu0 0.0
    %888 = vmatpush1.msra.mxu0 0.0
    %889 = vmatprep.subr.mxu0 0.0
    %890 = vmatpush1.msra.mxu0 0.0
    %891 = vmatprep.subr.mxu0 0.0
    %892 = vmatpush1.msra.mxu0 0.0
    %893 = vmatprep.subr.mxu0 0.0
    %894 = vmatpush1.msra.mxu0 0.0
    %895 = vmatprep.subr.mxu0 0.0
    %896 = vmatpush1.msra.mxu0 0.0
    %897 = vmatprep.subr.mxu0 0.0
    %898 = vmatpush1.msra.mxu0 0.0
    %899 = vmatprep.subr.mxu0 0.0
    %900 = vmatpush1.msra.mxu0 0.0
    %901 = vmatprep.subr.mxu0 0.0
    %902 = vmatpush1.msra.mxu0 0.0
    %903 = vmatprep.subr.mxu0 0.0
    %904 = vmatpush1.msra.mxu0 0.0
    %905 = vmatprep.subr.mxu0 0.0
    %906 = vmatpush1.msra.mxu0 0.0
    %907 = vmatprep.subr.mxu0 0.0
    %908 = vmatpush1.msra.mxu0 0.0
    %909 = vmatprep.subr.mxu0 0.0
    %910 = vmatpush1.msra.mxu0 %v872
    %911 = vmatprep.subr.mxu0 0.0
    %912 = vmatpush1.msra.mxu0 %v870
    %913 = vmatprep.subr.mxu0 0.0
    %914 = vmatpush2.msra.mxu0 0.0
    %915 = vmatprep.subr.mxu0 0.0
    %916 = vmatpush2.msra.mxu0 0.0
    %917 = vmatprep.subr.mxu0 0.0
    %918 = vmatpush2.msra.mxu0 0.0
    %919 = vmatprep.subr.mxu0 0.0
    %920 = vmatpush2.msra.mxu0 0.0
    %921 = vmatprep.subr.mxu0 0.0
    %922 = vmatpush2.msra.mxu0 0.0
    %923 = vmatprep.subr.mxu0 0.0
    %924 = vmatpush2.msra.mxu0 0.0
    %925 = vmatprep.subr.mxu0 0.0
    %926 = vmatpush2.msra.mxu0 0.0
    %927 = vmatprep.subr.mxu0 0.0
    %928 = vmatpush2.msra.mxu0 0.0
    %929 = vmatprep.subr.mxu0 0.0
    %930 = vmatpush2.msra.mxu0 0.0
    %931 = vmatprep.subr.mxu0 0.0
    %932 = vmatpush2.msra.mxu0 0.0
    %933 = vmatprep.subr.mxu0 0.0
    %934 = vmatpush2.msra.mxu0 0.0
    %935 = vmatprep.subr.mxu0 0.0
    %936 = vmatpush2.msra.mxu0 0.0
    %937 = vmatprep.subr.mxu0 0.0
    %938 = vmatpush2.msra.mxu0 0.0
    %939 = vmatprep.subr.mxu0 0.0
    %940 = vmatpush2.msra.mxu0 0.0
    %941 = vmatprep.subr.mxu0 0.0
    %942 = vmatpush2.msra.mxu0 0.0
    %943 = vmatprep.subr.mxu0 0.0
    %944 = vmatpush2.msra.mxu0 0.0
    %945 = vmatprep.mubr.f32.mxu0 0.0
    %946 = vmatmul.mubr.f32.gmra.mxu0 %v876
    %v947 = vpop.f32.mrf.mxu0
    %v948 = vadd.f32 0.0, %v947
    %v949 = vpop.f32.mrf.mxu0
    %950 = vmatprep.mubr.f32.mxu0 0.0
    %951 = vmatmul.mubr.f32.gmra.mxu0 %v879
    %v952 = vpop.f32.mrf.mxu0
    %v953 = vadd.f32 0.0, %v952
    %v954 = vpop.f32.mrf.mxu0
    %955 = vdwg.mxu0
    %v956 = vadd.f32 %v542, %v948
    %v957 = vadd.f32 %v547, %v953
    %959 = vrot.lane.b32.xlu0 %v820, 96
    %v960 = vpop.permute.xlu0 %959
    %vm962 = vcmask 254977
    %963 = vst.msk [vmem:[#allocation10] sm:$0x2] %vm962, %v960
    %v964 = vld [vmem:[#allocation7] sm:$0xff]
    %v965 = vld [vmem:[#allocation7 + $0x8] sm:$0xff]
    %v966 = vld [vmem:[#allocation7 + $0x10] sm:$0xff]
    %v967 = vld [vmem:[#allocation7 + $0x18] sm:$0xff]
    %v968 = vrot.slane %v820, 1
    %969 = vrot.lane.b32.xlu0 %v968, 96
    %v970 = vpop.permute.xlu0 %969
    %v971 = vsel %vm86, %v970, 0
    %973 = vmatprep.subr.mxu0 0.0
    %974 = vmatpush1.msra.mxu0 0.0
    %975 = vmatprep.subr.mxu0 0.0
    %976 = vmatpush1.msra.mxu0 0.0
    %977 = vmatprep.subr.mxu0 0.0
    %978 = vmatpush1.msra.mxu0 0.0
    %979 = vmatprep.subr.mxu0 0.0
    %980 = vmatpush1.msra.mxu0 0.0
    %981 = vmatprep.subr.mxu0 0.0
    %982 = vmatpush1.msra.mxu0 0.0
    %983 = vmatprep.subr.mxu0 0.0
    %984 = vmatpush1.msra.mxu0 0.0
    %985 = vmatprep.subr.mxu0 0.0
    %986 = vmatpush1.msra.mxu0 0.0
    %987 = vmatprep.subr.mxu0 0.0
    %988 = vmatpush1.msra.mxu0 0.0
    %989 = vmatprep.subr.mxu0 0.0
    %990 = vmatpush1.msra.mxu0 0.0
    %991 = vmatprep.subr.mxu0 0.0
    %992 = vmatpush1.msra.mxu0 0.0
    %993 = vmatprep.subr.mxu0 0.0
    %994 = vmatpush1.msra.mxu0 0.0
    %995 = vmatprep.subr.mxu0 0.0
    %996 = vmatpush1.msra.mxu0 0.0
    %997 = vmatprep.subr.mxu0 0.0
    %998 = vmatpush1.msra.mxu0 %v967
    %999 = vmatprep.subr.mxu0 0.0
    %1000 = vmatpush1.msra.mxu0 %v966
    %1001 = vmatprep.subr.mxu0 0.0
    %1002 = vmatpush1.msra.mxu0 %v965
    %1003 = vmatprep.subr.mxu0 0.0
    %1004 = vmatpush1.msra.mxu0 %v964
    %1005 = vmatprep.subr.mxu0 0.0
    %1006 = vmatpush2.msra.mxu0 0.0
    %1007 = vmatprep.subr.mxu0 0.0
    %1008 = vmatpush2.msra.mxu0 0.0
    %1009 = vmatprep.subr.mxu0 0.0
    %1010 = vmatpush2.msra.mxu0 0.0
    %1011 = vmatprep.subr.mxu0 0.0
    %1012 = vmatpush2.msra.mxu0 0.0
    %1013 = vmatprep.subr.mxu0 0.0
    %1014 = vmatpush2.msra.mxu0 0.0
    %1015 = vmatprep.subr.mxu0 0.0
    %1016 = vmatpush2.msra.mxu0 0.0
    %1017 = vmatprep.subr.mxu0 0.0
    %1018 = vmatpush2.msra.mxu0 0.0
    %1019 = vmatprep.subr.mxu0 0.0
    %1020 = vmatpush2.msra.mxu0 0.0
    %1021 = vmatprep.subr.mxu0 0.0
    %1022 = vmatpush2.msra.mxu0 0.0
    %1023 = vmatprep.subr.mxu0 0.0
    %1024 = vmatpush2.msra.mxu0 0.0
    %1025 = vmatprep.subr.mxu0 0.0
    %1026 = vmatpush2.msra.mxu0 0.0
    %1027 = vmatprep.subr.mxu0 0.0
    %1028 = vmatpush2.msra.mxu0 0.0
    %1029 = vmatprep.subr.mxu0 0.0
    %1030 = vmatpush2.msra.mxu0 0.0
    %1031 = vmatprep.subr.mxu0 0.0
    %1032 = vmatpush2.msra.mxu0 0.0
    %1033 = vmatprep.subr.mxu0 0.0
    %1034 = vmatpush2.msra.mxu0 0.0
    %1035 = vmatprep.subr.mxu0 0.0
    %1036 = vmatpush2.msra.mxu0 0.0
    %1037 = vmatprep.mubr.f32.mxu0 0.0
    %1038 = vmatmul.mubr.f32.gmra.mxu0 %v971
    %v1039 = vpop.f32.mrf.mxu0
    %v1040 = vadd.f32 0.0, %v1039
    %v1041 = vpop.f32.mrf.mxu0
    %1042 = vdwg.mxu0
    %v1044 = vrot.slane %v1040, 6
    %v1046 = vadd.f32 %v157, %v1044
    %vm1047 = vcmask 124930
    %v1048 = vsel %vm1047, %v1046, -inf
    %1049 = vmax.xlane.f32.xlu0 %v1048
    %v1050 = vpop.xlane.xlu0 %1049
    %v1051 = vsub.f32 %v1046, %v1050
    %v1052 = vmul.f32 %v1051, 1.442695
    %v1053 = vpow.pop %v1052
    %v1054 = vsel %vm1047, %v1053, 0.0
    %1055 = vadd.xlane.f32.xlu0 %v1054
    %v1056 = vpop.xlane.xlu0 %1055
    %v1057 = vrcp.pop %v1056
    %v1058 = vmul.f32 %v1053, %v1057
    %v1059 = vsub.f32 0.0, %v1046
    %v1060 = vmul.f32 %v1059, 1.442695
    %v1061 = vpow.pop %v1060
    %v1062 = vadd.f32 %v1061, 1.0
    %v1063 = vrcp.pop %v1062
    %v1065 = vrot.slane %v1058, 2
    %v1066 = vsel %vm266, %v1065, 0
    %1068 = vmatprep.subr.mxu0 0.0
    %1069 = vmatpush1.msra.mxu0 0.0
    %1070 = vmatprep.subr.mxu0 0.0
    %1071 = vmatpush1.msra.mxu0 0.0
    %1072 = vmatprep.subr.mxu0 0.0
    %1073 = vmatpush1.msra.mxu0 0.0
    %1074 = vmatprep.subr.mxu0 0.0
    %1075 = vmatpush1.msra.mxu0 0.0
    %1076 = vmatprep.subr.mxu0 0.0
    %1077 = vmatpush1.msra.mxu0 0.0
    %1078 = vmatprep.subr.mxu0 0.0
    %1079 = vmatpush1.msra.mxu0 0.0
    %1080 = vmatprep.subr.mxu0 0.0
    %1081 = vmatpush1.msra.mxu0 0.0
    %1082 = vmatprep.subr.mxu0 0.0
    %1083 = vmatpush1.msra.mxu0 0.0
    %1084 = vmatprep.subr.mxu0 0.0
    %1085 = vmatpush1.msra.mxu0 0.0
    %1086 = vmatprep.subr.mxu0 0.0
    %1087 = vmatpush1.msra.mxu0 0.0
    %1088 = vmatprep.subr.mxu0 0.0
    %1089 = vmatpush1.msra.mxu0 0.0
    %1090 = vmatprep.subr.mxu0 0.0
    %1091 = vmatpush1.msra.mxu0 0.0
    %1092 = vmatprep.subr.mxu0 0.0
    %1093 = vmatpush1.msra.mxu0 0.0
    %1094 = vmatprep.subr.mxu0 0.0
    %1095 = vmatpush1.msra.mxu0 0.0
    %1096 = vmatprep.subr.mxu0 0.0
    %1097 = vmatpush1.msra.mxu0 %v957
    %1098 = vmatprep.subr.mxu0 0.0
    %1099 = vmatpush1.msra.mxu0 %v956
    %1100 = vmatprep.subr.mxu0 0.0
    %1101 = vmatpush2.msra.mxu0 0.0
    %1102 = vmatprep.subr.mxu0 0.0
    %1103 = vmatpush2.msra.mxu0 0.0
    %1104 = vmatprep.subr.mxu0 0.0
    %1105 = vmatpush2.msra.mxu0 0.0
    %1106 = vmatprep.subr.mxu0 0.0
    %1107 = vmatpush2.msra.mxu0 0.0
    %1108 = vmatprep.subr.mxu0 0.0
    %1109 = vmatpush2.msra.mxu0 0.0
    %1110 = vmatprep.subr.mxu0 0.0
    %1111 = vmatpush2.msra.mxu0 0.0
    %1112 = vmatprep.subr.mxu0 0.0
    %1113 = vmatpush2.msra.mxu0 0.0
    %1114 = vmatprep.subr.mxu0 0.0
    %1115 = vmatpush2.msra.mxu0 0.0
    %1116 = vmatprep.subr.mxu0 0.0
    %1117 = vmatpush2.msra.mxu0 0.0
    %1118 = vmatprep.subr.mxu0 0.0
    %1119 = vmatpush2.msra.mxu0 0.0
    %1120 = vmatprep.subr.mxu0 0.0
    %1121 = vmatpush2.msra.mxu0 0.0
    %1122 = vmatprep.subr.mxu0 0.0
    %1123 = vmatpush2.msra.mxu0 0.0
    %1124 = vmatprep.subr.mxu0 0.0
    %1125 = vmatpush2.msra.mxu0 0.0
    %1126 = vmatprep.subr.mxu0 0.0
    %1127 = vmatpush2.msra.mxu0 0.0
    %1128 = vmatprep.subr.mxu0 0.0
    %1129 = vmatpush2.msra.mxu0 0.0
    %1130 = vmatprep.subr.mxu0 0.0
    %1131 = vmatpush2.msra.mxu0 0.0
    %1132 = vmatprep.mubr.f32.mxu0 0.0
    %1133 = vmatmul.mubr.f32.gmra.mxu0 %v1066
    %v1134 = vpop.f32.mrf.mxu0
    %v1135 = vadd.f32 0.0, %v1134
    %v1136 = vpop.f32.mrf.mxu0
    %1137 = vdwg.mxu0
    %1139 = vset.pattern.permute.xlu0 96
    %1140 = vperm.xlu0 %1139, %v1063
    %v1141 = vpop.permute.xlu0 %1140
    %v1144 = vrot.slane %v1135, 6
    %v1146 = vmul.f32 %v1141, %v1144
    %v1147 = vld [vmem:[#allocation8] sm:$0xff]
    %v1148 = vld [vmem:[#allocation8 + $0x8] sm:$0xff]
    %v1149 = vld [vmem:[#allocation8 + $0x10] sm:$0xff]
    %v1150 = vld [vmem:[#allocation8 + $0x18] sm:$0xff]
    %v1152 = vrot.slane %v1146, 2
    %v1153 = vsel %vm86, %v1152, 0
    %1155 = vmatprep.subr.mxu0 0.0
    %1156 = vmatpush1.msra.mxu0 0.0
    %1157 = vmatprep.subr.mxu0 0.0
    %1158 = vmatpush1.msra.mxu0 0.0
    %1159 = vmatprep.subr.mxu0 0.0
    %1160 = vmatpush1.msra.mxu0 0.0
    %1161 = vmatprep.subr.mxu0 0.0
    %1162 = vmatpush1.msra.mxu0 0.0
    %1163 = vmatprep.subr.mxu0 0.0
    %1164 = vmatpush1.msra.mxu0 0.0
    %1165 = vmatprep.subr.mxu0 0.0
    %1166 = vmatpush1.msra.mxu0 0.0
    %1167 = vmatprep.subr.mxu0 0.0
    %1168 = vmatpush1.msra.mxu0 0.0
    %1169 = vmatprep.subr.mxu0 0.0
    %1170 = vmatpush1.msra.mxu0 0.0
    %1171 = vmatprep.subr.mxu0 0.0
    %1172 = vmatpush1.msra.mxu0 0.0
    %1173 = vmatprep.subr.mxu0 0.0
    %1174 = vmatpush1.msra.mxu0 0.0
    %1175 = vmatprep.subr.mxu0 0.0
    %1176 = vmatpush1.msra.mxu0 0.0
    %1177 = vmatprep.subr.mxu0 0.0
    %1178 = vmatpush1.msra.mxu0 0.0
    %1179 = vmatprep.subr.mxu0 0.0
    %1180 = vmatpush1.msra.mxu0 %v1150
    %1181 = vmatprep.subr.mxu0 0.0
    %1182 = vmatpush1.msra.mxu0 %v1149
    %1183 = vmatprep.subr.mxu0 0.0
    %1184 = vmatpush1.msra.mxu0 %v1148
    %1185 = vmatprep.subr.mxu0 0.0
    %1186 = vmatpush1.msra.mxu0 %v1147
    %1187 = vmatprep.subr.mxu0 0.0
    %1188 = vmatpush2.msra.mxu0 0.0
    %1189 = vmatprep.subr.mxu0 0.0
    %1190 = vmatpush2.msra.mxu0 0.0
    %1191 = vmatprep.subr.mxu0 0.0
    %1192 = vmatpush2.msra.mxu0 0.0
    %1193 = vmatprep.subr.mxu0 0.0
    %1194 = vmatpush2.msra.mxu0 0.0
    %1195 = vmatprep.subr.mxu0 0.0
    %1196 = vmatpush2.msra.mxu0 0.0
    %1197 = vmatprep.subr.mxu0 0.0
    %1198 = vmatpush2.msra.mxu0 0.0
    %1199 = vmatprep.subr.mxu0 0.0
    %1200 = vmatpush2.msra.mxu0 0.0
    %1201 = vmatprep.subr.mxu0 0.0
    %1202 = vmatpush2.msra.mxu0 0.0
    %1203 = vmatprep.subr.mxu0 0.0
    %1204 = vmatpush2.msra.mxu0 0.0
    %1205 = vmatprep.subr.mxu0 0.0
    %1206 = vmatpush2.msra.mxu0 0.0
    %1207 = vmatprep.subr.mxu0 0.0
    %1208 = vmatpush2.msra.mxu0 0.0
    %1209 = vmatprep.subr.mxu0 0.0
    %1210 = vmatpush2.msra.mxu0 0.0
    %1211 = vmatprep.subr.mxu0 0.0
    %1212 = vmatpush2.msra.mxu0 0.0
    %1213 = vmatprep.subr.mxu0 0.0
    %1214 = vmatpush2.msra.mxu0 0.0
    %1215 = vmatprep.subr.mxu0 0.0
    %1216 = vmatpush2.msra.mxu0 0.0
    %1217 = vmatprep.subr.mxu0 0.0
    %1218 = vmatpush2.msra.mxu0 0.0
    %1219 = vmatprep.mubr.f32.mxu0 0.0
    %1220 = vmatmul.mubr.f32.gmra.mxu0 %v1153
    %v1221 = vpop.f32.mrf.mxu0
    %v1222 = vadd.f32 0.0, %v1221
    %v1223 = vpop.f32.mrf.mxu0
    %1224 = vdwg.mxu0
    %v1226 = vrot.slane %v1222, 6
    %1227 = vrot.lane.b32.xlu0 %v1226, 32
    %v1228 = vpop.permute.xlu0 %1227
    %v1230 = vadd.f32 %v1046, %v1228
    %v1231 = vmax.f32 %v1230, 0.0
    %v1232 = vmax.f32 %v1046, 0.0
    %vm1233 = vcmask 256130
    %v1234 = vsel %vm1233, %v1046, -inf
    %1235 = vmax.xlane.f32.xlu0 %v1234
    %v1236 = vpop.xlane.xlu0 %1235
    %v1237 = vsub.f32 %v1046, %v1236
    %v1238 = vmul.f32 %v1237, 1.442695
    %v1239 = vpow.pop %v1238
    %1241 = vrot.lane.b32.xlu0 %v1239, 112
    %v1242 = vpop.permute.xlu0 %1241
    %v1244 = vsel %vm1047, %v1242, 0.0
    %1245 = vadd.xlane.f32.xlu0 %v1244
    %v1246 = vpop.xlane.xlu0 %1245
    %v1247 = vrcp.pop %v1246
    %v1248 = vmul.f32 %v1239, %v1247
    %v1249 = vlaneseq
    %v1250 = vshrl.u32 %v1249, 7
    %v1251 = vsub.s32 2, %v1250
    %v1252 = vrot.slane %v1248, %v1251
    %1254 = vrot.lane.b32.xlu0 %v1252, 112
    %v1255 = vpop.permute.xlu0 %1254
    %v1257 = vmul.f32 %v169, %v1255
    %v1258 = vmul.f32 %v170, %v1255
    %1259 = vset.pattern.permute.xlu0 97
    %1260 = vperm.xlu0 %1259, %v1063
    %v1261 = vpop.permute.xlu0 %1260
    %v1263 = vmul.f32 %v1261, %v1232
    %v1264 = vlaneseq
    %v1265 = vshrl.u32 %v1264, 7
    %v1266 = vsub.s32 2, %v1265
    %v1267 = vrot.slane %v1263, %v1266
    %1270 = vrot.lane.b32.xlu0 %v956, 64
    %v1271 = vpop.permute.xlu0 %1270
    %1272 = vrot.lane.b32.xlu0 %v957, 64
    %v1273 = vpop.permute.xlu0 %1272
    %v1276 = vsub.f32 %v1267, %v1271
    %v1277 = vsub.f32 %v1267, %v1273
    %1280 = vrot.lane.b32.xlu0 %v1276, 64
    %v1281 = vpop.permute.xlu0 %1280
    %1282 = vrot.lane.b32.xlu0 %v1277, 64
    %v1283 = vpop.permute.xlu0 %1282
    %v1287 = vsel %vm266, %v1257, 0
    %v1290 = vsel %vm266, %v1258, 0
    %1292 = vmatprep.subr.mxu0 0.0
    %1293 = vmatpush1.msra.mxu0 0.0
    %1294 = vmatprep.subr.mxu0 0.0
    %1295 = vmatpush1.msra.mxu0 0.0
    %1296 = vmatprep.subr.mxu0 0.0
    %1297 = vmatpush1.msra.mxu0 0.0
    %1298 = vmatprep.subr.mxu0 0.0
    %1299 = vmatpush1.msra.mxu0 0.0
    %1300 = vmatprep.subr.mxu0 0.0
    %1301 = vmatpush1.msra.mxu0 0.0
    %1302 = vmatprep.subr.mxu0 0.0
    %1303 = vmatpush1.msra.mxu0 0.0
    %1304 = vmatprep.subr.mxu0 0.0
    %1305 = vmatpush1.msra.mxu0 0.0
    %1306 = vmatprep.subr.mxu0 0.0
    %1307 = vmatpush1.msra.mxu0 0.0
    %1308 = vmatprep.subr.mxu0 0.0
    %1309 = vmatpush1.msra.mxu0 0.0
    %1310 = vmatprep.subr.mxu0 0.0
    %1311 = vmatpush1.msra.mxu0 0.0
    %1312 = vmatprep.subr.mxu0 0.0
    %1313 = vmatpush1.msra.mxu0 0.0
    %1314 = vmatprep.subr.mxu0 0.0
    %1315 = vmatpush1.msra.mxu0 0.0
    %1316 = vmatprep.subr.mxu0 0.0
    %1317 = vmatpush1.msra.mxu0 0.0
    %1318 = vmatprep.subr.mxu0 0.0
    %1319 = vmatpush1.msra.mxu0 0.0
    %1320 = vmatprep.subr.mxu0 0.0
    %1321 = vmatpush1.msra.mxu0 %v1283
    %1322 = vmatprep.subr.mxu0 0.0
    %1323 = vmatpush1.msra.mxu0 %v1281
    %1324 = vmatprep.subr.mxu0 0.0
    %1325 = vmatpush2.msra.mxu0 0.0
    %1326 = vmatprep.subr.mxu0 0.0
    %1327 = vmatpush2.msra.mxu0 0.0
    %1328 = vmatprep.subr.mxu0 0.0
    %1329 = vmatpush2.msra.mxu0 0.0
    %1330 = vmatprep.subr.mxu0 0.0
    %1331 = vmatpush2.msra.mxu0 0.0
    %1332 = vmatprep.subr.mxu0 0.0
    %1333 = vmatpush2.msra.mxu0 0.0
    %1334 = vmatprep.subr.mxu0 0.0
    %1335 = vmatpush2.msra.mxu0 0.0
    %1336 = vmatprep.subr.mxu0 0.0
    %1337 = vmatpush2.msra.mxu0 0.0
    %1338 = vmatprep.subr.mxu0 0.0
    %1339 = vmatpush2.msra.mxu0 0.0
    %1340 = vmatprep.subr.mxu0 0.0
    %1341 = vmatpush2.msra.mxu0 0.0
    %1342 = vmatprep.subr.mxu0 0.0
    %1343 = vmatpush2.msra.mxu0 0.0
    %1344 = vmatprep.subr.mxu0 0.0
    %1345 = vmatpush2.msra.mxu0 0.0
    %1346 = vmatprep.subr.mxu0 0.0
    %1347 = vmatpush2.msra.mxu0 0.0
    %1348 = vmatprep.subr.mxu0 0.0
    %1349 = vmatpush2.msra.mxu0 0.0
    %1350 = vmatprep.subr.mxu0 0.0
    %1351 = vmatpush2.msra.mxu0 0.0
    %1352 = vmatprep.subr.mxu0 0.0
    %1353 = vmatpush2.msra.mxu0 0.0
    %1354 = vmatprep.subr.mxu0 0.0
    %1355 = vmatpush2.msra.mxu0 0.0
    %1356 = vmatprep.mubr.f32.mxu0 0.0
    %1357 = vmatmul.mubr.f32.gmra.mxu0 %v1287
    %v1358 = vpop.f32.mrf.mxu0
    %v1359 = vadd.f32 0.0, %v1358
    %v1360 = vpop.f32.mrf.mxu0
    %1361 = vmatprep.mubr.f32.mxu0 0.0
    %1362 = vmatmul.mubr.f32.gmra.mxu0 %v1290
    %v1363 = vpop.f32.mrf.mxu0
    %v1364 = vadd.f32 0.0, %v1363
    %v1365 = vpop.f32.mrf.mxu0
    %1366 = vdwg.mxu0
    %v1367 = vadd.f32 %v956, %v1359
    %v1368 = vadd.f32 %v957, %v1364
    %1370 = vrot.lane.b32.xlu0 %v1231, 96
    %v1371 = vpop.permute.xlu0 %1370
    %vm1373 = vcmask 256002
    %1374 = vst.msk [vmem:[#allocation10] sm:$0x4] %vm1373, %v1371
    %v1375 = vld [vmem:[#allocation7] sm:$0xff]
    %v1376 = vld [vmem:[#allocation7 + $0x8] sm:$0xff]
    %v1377 = vld [vmem:[#allocation7 + $0x10] sm:$0xff]
    %v1378 = vld [vmem:[#allocation7 + $0x18] sm:$0xff]
    %v1379 = vrot.slane %v1231, 2
    %1380 = vrot.lane.b32.xlu0 %v1379, 96
    %v1381 = vpop.permute.xlu0 %1380
    %v1382 = vsel %vm86, %v1381, 0
    %1384 = vmatprep.subr.mxu0 0.0
    %1385 = vmatpush1.msra.mxu0 0.0
    %1386 = vmatprep.subr.mxu0 0.0
    %1387 = vmatpush1.msra.mxu0 0.0
    %1388 = vmatprep.subr.mxu0 0.0
    %1389 = vmatpush1.msra.mxu0 0.0
    %1390 = vmatprep.subr.mxu0 0.0
    %1391 = vmatpush1.msra.mxu0 0.0
    %1392 = vmatprep.subr.mxu0 0.0
    %1393 = vmatpush1.msra.mxu0 0.0
    %1394 = vmatprep.subr.mxu0 0.0
    %1395 = vmatpush1.msra.mxu0 0.0
    %1396 = vmatprep.subr.mxu0 0.0
    %1397 = vmatpush1.msra.mxu0 0.0
    %1398 = vmatprep.subr.mxu0 0.0
    %1399 = vmatpush1.msra.mxu0 0.0
    %1400 = vmatprep.subr.mxu0 0.0
    %1401 = vmatpush1.msra.mxu0 0.0
    %1402 = vmatprep.subr.mxu0 0.0
    %1403 = vmatpush1.msra.mxu0 0.0
    %1404 = vmatprep.subr.mxu0 0.0
    %1405 = vmatpush1.msra.mxu0 0.0
    %1406 = vmatprep.subr.mxu0 0.0
    %1407 = vmatpush1.msra.mxu0 0.0
    %1408 = vmatprep.subr.mxu0 0.0
    %1409 = vmatpush1.msra.mxu0 %v1378
    %1410 = vmatprep.subr.mxu0 0.0
    %1411 = vmatpush1.msra.mxu0 %v1377
    %1412 = vmatprep.subr.mxu0 0.0
    %1413 = vmatpush1.msra.mxu0 %v1376
    %1414 = vmatprep.subr.mxu0 0.0
    %1415 = vmatpush1.msra.mxu0 %v1375
    %1416 = vmatprep.subr.mxu0 0.0
    %1417 = vmatpush2.msra.mxu0 0.0
    %1418 = vmatprep.subr.mxu0 0.0
    %1419 = vmatpush2.msra.mxu0 0.0
    %1420 = vmatprep.subr.mxu0 0.0
    %1421 = vmatpush2.msra.mxu0 0.0
    %1422 = vmatprep.subr.mxu0 0.0
    %1423 = vmatpush2.msra.mxu0 0.0
    %1424 = vmatprep.subr.mxu0 0.0
    %1425 = vmatpush2.msra.mxu0 0.0
    %1426 = vmatprep.subr.mxu0 0.0
    %1427 = vmatpush2.msra.mxu0 0.0
    %1428 = vmatprep.subr.mxu0 0.0
    %1429 = vmatpush2.msra.mxu0 0.0
    %1430 = vmatprep.subr.mxu0 0.0
    %1431 = vmatpush2.msra.mxu0 0.0
    %1432 = vmatprep.subr.mxu0 0.0
    %1433 = vmatpush2.msra.mxu0 0.0
    %1434 = vmatprep.subr.mxu0 0.0
    %1435 = vmatpush2.msra.mxu0 0.0
    %1436 = vmatprep.subr.mxu0 0.0
    %1437 = vmatpush2.msra.mxu0 0.0
    %1438 = vmatprep.subr.mxu0 0.0
    %1439 = vmatpush2.msra.mxu0 0.0
    %1440 = vmatprep.subr.mxu0 0.0
    %1441 = vmatpush2.msra.mxu0 0.0
    %1442 = vmatprep.subr.mxu0 0.0
    %1443 = vmatpush2.msra.mxu0 0.0
    %1444 = vmatprep.subr.mxu0 0.0
    %1445 = vmatpush2.msra.mxu0 0.0
    %1446 = vmatprep.subr.mxu0 0.0
    %1447 = vmatpush2.msra.mxu0 0.0
    %1448 = vmatprep.mubr.f32.mxu0 0.0
    %1449 = vmatmul.mubr.f32.gmra.mxu0 %v1382
    %v1450 = vpop.f32.mrf.mxu0
    %v1451 = vadd.f32 0.0, %v1450
    %v1452 = vpop.f32.mrf.mxu0
    %1453 = vdwg.mxu0
    %v1455 = vrot.slane %v1451, 5
    %v1457 = vadd.f32 %v157, %v1455
    %vm1458 = vcmask 125955
    %v1459 = vsel %vm1458, %v1457, -inf
    %1460 = vmax.xlane.f32.xlu0 %v1459
    %v1461 = vpop.xlane.xlu0 %1460
    %v1462 = vsub.f32 %v1457, %v1461
    %v1463 = vmul.f32 %v1462, 1.442695
    %v1464 = vpow.pop %v1463
    %v1465 = vsel %vm1458, %v1464, 0.0
    %1466 = vadd.xlane.f32.xlu0 %v1465
    %v1467 = vpop.xlane.xlu0 %1466
    %v1468 = vrcp.pop %v1467
    %v1469 = vmul.f32 %v1464, %v1468
    %v1470 = vsub.f32 0.0, %v1457
    %v1471 = vmul.f32 %v1470, 1.442695
    %v1472 = vpow.pop %v1471
    %v1473 = vadd.f32 %v1472, 1.0
    %v1474 = vrcp.pop %v1473
    %v1476 = vrot.slane %v1469, 3
    %v1477 = vsel %vm266, %v1476, 0
    %1479 = vmatprep.subr.mxu0 0.0
    %1480 = vmatpush1.msra.mxu0 0.0
    %1481 = vmatprep.subr.mxu0 0.0
    %1482 = vmatpush1.msra.mxu0 0.0
    %1483 = vmatprep.subr.mxu0 0.0
    %1484 = vmatpush1.msra.mxu0 0.0
    %1485 = vmatprep.subr.mxu0 0.0
    %1486 = vmatpush1.msra.mxu0 0.0
    %1487 = vmatprep.subr.mxu0 0.0
    %1488 = vmatpush1.msra.mxu0 0.0
    %1489 = vmatprep.subr.mxu0 0.0
    %1490 = vmatpush1.msra.mxu0 0.0
    %1491 = vmatprep.subr.mxu0 0.0
    %1492 = vmatpush1.msra.mxu0 0.0
    %1493 = vmatprep.subr.mxu0 0.0
    %1494 = vmatpush1.msra.mxu0 0.0
    %1495 = vmatprep.subr.mxu0 0.0
    %1496 = vmatpush1.msra.mxu0 0.0
    %1497 = vmatprep.subr.mxu0 0.0
    %1498 = vmatpush1.msra.mxu0 0.0
    %1499 = vmatprep.subr.mxu0 0.0
    %1500 = vmatpush1.msra.mxu0 0.0
    %1501 = vmatprep.subr.mxu0 0.0
    %1502 = vmatpush1.msra.mxu0 0.0
    %1503 = vmatprep.subr.mxu0 0.0
    %1504 = vmatpush1.msra.mxu0 0.0
    %1505 = vmatprep.subr.mxu0 0.0
    %1506 = vmatpush1.msra.mxu0 0.0
    %1507 = vmatprep.subr.mxu0 0.0
    %1508 = vmatpush1.msra.mxu0 %v1368
    %1509 = vmatprep.subr.mxu0 0.0
    %1510 = vmatpush1.msra.mxu0 %v1367
    %1511 = vmatprep.subr.mxu0 0.0
    %1512 = vmatpush2.msra.mxu0 0.0
    %1513 = vmatprep.subr.mxu0 0.0
    %1514 = vmatpush2.msra.mxu0 0.0
    %1515 = vmatprep.subr.mxu0 0.0
    %1516 = vmatpush2.msra.mxu0 0.0
    %1517 = vmatprep.subr.mxu0 0.0
    %1518 = vmatpush2.msra.mxu0 0.0
    %1519 = vmatprep.subr.mxu0 0.0
    %1520 = vmatpush2.msra.mxu0 0.0
    %1521 = vmatprep.subr.mxu0 0.0
    %1522 = vmatpush2.msra.mxu0 0.0
    %1523 = vmatprep.subr.mxu0 0.0
    %1524 = vmatpush2.msra.mxu0 0.0
    %1525 = vmatprep.subr.mxu0 0.0
    %1526 = vmatpush2.msra.mxu0 0.0
    %1527 = vmatprep.subr.mxu0 0.0
    %1528 = vmatpush2.msra.mxu0 0.0
    %1529 = vmatprep.subr.mxu0 0.0
    %1530 = vmatpush2.msra.mxu0 0.0
    %1531 = vmatprep.subr.mxu0 0.0
    %1532 = vmatpush2.msra.mxu0 0.0
    %1533 = vmatprep.subr.mxu0 0.0
    %1534 = vmatpush2.msra.mxu0 0.0
    %1535 = vmatprep.subr.mxu0 0.0
    %1536 = vmatpush2.msra.mxu0 0.0
    %1537 = vmatprep.subr.mxu0 0.0
    %1538 = vmatpush2.msra.mxu0 0.0
    %1539 = vmatprep.subr.mxu0 0.0
    %1540 = vmatpush2.msra.mxu0 0.0
    %1541 = vmatprep.subr.mxu0 0.0
    %1542 = vmatpush2.msra.mxu0 0.0
    %1543 = vmatprep.mubr.f32.mxu0 0.0
    %1544 = vmatmul.mubr.f32.gmra.mxu0 %v1477
    %v1545 = vpop.f32.mrf.mxu0
    %v1546 = vadd.f32 0.0, %v1545
    %v1547 = vpop.f32.mrf.mxu0
    %1548 = vdwg.mxu0
    %1550 = vset.pattern.permute.xlu0 96
    %1551 = vperm.xlu0 %1550, %v1474
    %v1552 = vpop.permute.xlu0 %1551
    %v1555 = vrot.slane %v1546, 5
    %v1557 = vmul.f32 %v1552, %v1555
    %v1558 = vld [vmem:[#allocation8] sm:$0xff]
    %v1559 = vld [vmem:[#allocation8 + $0x8] sm:$0xff]
    %v1560 = vld [vmem:[#allocation8 + $0x10] sm:$0xff]
    %v1561 = vld [vmem:[#allocation8 + $0x18] sm:$0xff]
    %v1563 = vrot.slane %v1557, 3
    %v1564 = vsel %vm86, %v1563, 0
    %1566 = vmatprep.subr.mxu0 0.0
    %1567 = vmatpush1.msra.mxu0 0.0
    %1568 = vmatprep.subr.mxu0 0.0
    %1569 = vmatpush1.msra.mxu0 0.0
    %1570 = vmatprep.subr.mxu0 0.0
    %1571 = vmatpush1.msra.mxu0 0.0
    %1572 = vmatprep.subr.mxu0 0.0
    %1573 = vmatpush1.msra.mxu0 0.0
    %1574 = vmatprep.subr.mxu0 0.0
    %1575 = vmatpush1.msra.mxu0 0.0
    %1576 = vmatprep.subr.mxu0 0.0
    %1577 = vmatpush1.msra.mxu0 0.0
    %1578 = vmatprep.subr.mxu0 0.0
    %1579 = vmatpush1.msra.mxu0 0.0
    %1580 = vmatprep.subr.mxu0 0.0
    %1581 = vmatpush1.msra.mxu0 0.0
    %1582 = vmatprep.subr.mxu0 0.0
    %1583 = vmatpush1.msra.mxu0 0.0
    %1584 = vmatprep.subr.mxu0 0.0
    %1585 = vmatpush1.msra.mxu0 0.0
    %1586 = vmatprep.subr.mxu0 0.0
    %1587 = vmatpush1.msra.mxu0 0.0
    %1588 = vmatprep.subr.mxu0 0.0
    %1589 = vmatpush1.msra.mxu0 0.0
    %1590 = vmatprep.subr.mxu0 0.0
    %1591 = vmatpush1.msra.mxu0 %v1561
    %1592 = vmatprep.subr.mxu0 0.0
    %1593 = vmatpush1.msra.mxu0 %v1560
    %1594 = vmatprep.subr.mxu0 0.0
    %1595 = vmatpush1.msra.mxu0 %v1559
    %1596 = vmatprep.subr.mxu0 0.0
    %1597 = vmatpush1.msra.mxu0 %v1558
    %1598 = vmatprep.subr.mxu0 0.0
    %1599 = vmatpush2.msra.mxu0 0.0
    %1600 = vmatprep.subr.mxu0 0.0
    %1601 = vmatpush2.msra.mxu0 0.0
    %1602 = vmatprep.subr.mxu0 0.0
    %1603 = vmatpush2.msra.mxu0 0.0
    %1604 = vmatprep.subr.mxu0 0.0
    %1605 = vmatpush2.msra.mxu0 0.0
    %1606 = vmatprep.subr.mxu0 0.0
    %1607 = vmatpush2.msra.mxu0 0.0
    %1608 = vmatprep.subr.mxu0 0.0
    %1609 = vmatpush2.msra.mxu0 0.0
    %1610 = vmatprep.subr.mxu0 0.0
    %1611 = vmatpush2.msra.mxu0 0.0
    %1612 = vmatprep.subr.mxu0 0.0
    %1613 = vmatpush2.msra.mxu0 0.0
    %1614 = vmatprep.subr.mxu0 0.0
    %1615 = vmatpush2.msra.mxu0 0.0
    %1616 = vmatprep.subr.mxu0 0.0
    %1617 = vmatpush2.msra.mxu0 0.0
    %1618 = vmatprep.subr.mxu0 0.0
    %1619 = vmatpush2.msra.mxu0 0.0
    %1620 = vmatprep.subr.mxu0 0.0
    %1621 = vmatpush2.msra.mxu0 0.0
    %1622 = vmatprep.subr.mxu0 0.0
    %1623 = vmatpush2.msra.mxu0 0.0
    %1624 = vmatprep.subr.mxu0 0.0
    %1625 = vmatpush2.msra.mxu0 0.0
    %1626 = vmatprep.subr.mxu0 0.0
    %1627 = vmatpush2.msra.mxu0 0.0
    %1628 = vmatprep.subr.mxu0 0.0
    %1629 = vmatpush2.msra.mxu0 0.0
    %1630 = vmatprep.mubr.f32.mxu0 0.0
    %1631 = vmatmul.mubr.f32.gmra.mxu0 %v1564
    %v1632 = vpop.f32.mrf.mxu0
    %v1633 = vadd.f32 0.0, %v1632
    %v1634 = vpop.f32.mrf.mxu0
    %1635 = vdwg.mxu0
    %v1637 = vrot.slane %v1633, 5
    %1638 = vrot.lane.b32.xlu0 %v1637, 32
    %v1639 = vpop.permute.xlu0 %1638
    %v1641 = vadd.f32 %v1457, %v1639
    %v1642 = vmax.f32 %v1641, 0.0
    %v1643 = vmax.f32 %v1457, 0.0
    %vm1644 = vcmask 257155
    %v1645 = vsel %vm1644, %v1457, -inf
    %1646 = vmax.xlane.f32.xlu0 %v1645
    %v1647 = vpop.xlane.xlu0 %1646
    %v1648 = vsub.f32 %v1457, %v1647
    %v1649 = vmul.f32 %v1648, 1.442695
    %v1650 = vpow.pop %v1649
    %1652 = vrot.lane.b32.xlu0 %v1650, 112
    %v1653 = vpop.permute.xlu0 %1652
    %v1655 = vsel %vm1458, %v1653, 0.0
    %1656 = vadd.xlane.f32.xlu0 %v1655
    %v1657 = vpop.xlane.xlu0 %1656
    %v1658 = vrcp.pop %v1657
    %v1659 = vmul.f32 %v1650, %v1658
    %v1660 = vlaneseq
    %v1661 = vshrl.u32 %v1660, 7
    %v1662 = vsub.s32 3, %v1661
    %v1663 = vrot.slane %v1659, %v1662
    %1665 = vrot.lane.b32.xlu0 %v1663, 112
    %v1666 = vpop.permute.xlu0 %1665
    %v1668 = vmul.f32 %v169, %v1666
    %v1669 = vmul.f32 %v170, %v1666
    %1670 = vset.pattern.permute.xlu0 97
    %1671 = vperm.xlu0 %1670, %v1474
    %v1672 = vpop.permute.xlu0 %1671
    %v1674 = vmul.f32 %v1672, %v1643
    %v1675 = vlaneseq
    %v1676 = vshrl.u32 %v1675, 7
    %v1677 = vsub.s32 3, %v1676
    %v1678 = vrot.slane %v1674, %v1677
    %1681 = vrot.lane.b32.xlu0 %v1367, 64
    %v1682 = vpop.permute.xlu0 %1681
    %1683 = vrot.lane.b32.xlu0 %v1368, 64
    %v1684 = vpop.permute.xlu0 %1683
    %v1687 = vsub.f32 %v1678, %v1682
    %v1688 = vsub.f32 %v1678, %v1684
    %1691 = vrot.lane.b32.xlu0 %v1687, 64
    %v1692 = vpop.permute.xlu0 %1691
    %1693 = vrot.lane.b32.xlu0 %v1688, 64
    %v1694 = vpop.permute.xlu0 %1693
    %v1698 = vsel %vm266, %v1668, 0
    %v1701 = vsel %vm266, %v1669, 0
    %1703 = vmatprep.subr.mxu0 0.0
    %1704 = vmatpush1.msra.mxu0 0.0
    %1705 = vmatprep.subr.mxu0 0.0
    %1706 = vmatpush1.msra.mxu0 0.0
    %1707 = vmatprep.subr.mxu0 0.0
    %1708 = vmatpush1.msra.mxu0 0.0
    %1709 = vmatprep.subr.mxu0 0.0
    %1710 = vmatpush1.msra.mxu0 0.0
    %1711 = vmatprep.subr.mxu0 0.0
    %1712 = vmatpush1.msra.mxu0 0.0
    %1713 = vmatprep.subr.mxu0 0.0
    %1714 = vmatpush1.msra.mxu0 0.0
    %1715 = vmatprep.subr.mxu0 0.0
    %1716 = vmatpush1.msra.mxu0 0.0
    %1717 = vmatprep.subr.mxu0 0.0
    %1718 = vmatpush1.msra.mxu0 0.0
    %1719 = vmatprep.subr.mxu0 0.0
    %1720 = vmatpush1.msra.mxu0 0.0
    %1721 = vmatprep.subr.mxu0 0.0
    %1722 = vmatpush1.msra.mxu0 0.0
    %1723 = vmatprep.subr.mxu0 0.0
    %1724 = vmatpush1.msra.mxu0 0.0
    %1725 = vmatprep.subr.mxu0 0.0
    %1726 = vmatpush1.msra.mxu0 0.0
    %1727 = vmatprep.subr.mxu0 0.0
    %1728 = vmatpush1.msra.mxu0 0.0
    %1729 = vmatprep.subr.mxu0 0.0
    %1730 = vmatpush1.msra.mxu0 0.0
    %1731 = vmatprep.subr.mxu0 0.0
    %1732 = vmatpush1.msra.mxu0 %v1694
    %1733 = vmatprep.subr.mxu0 0.0
    %1734 = vmatpush1.msra.mxu0 %v1692
    %1735 = vmatprep.subr.mxu0 0.0
    %1736 = vmatpush2.msra.mxu0 0.0
    %1737 = vmatprep.subr.mxu0 0.0
    %1738 = vmatpush2.msra.mxu0 0.0
    %1739 = vmatprep.subr.mxu0 0.0
    %1740 = vmatpush2.msra.mxu0 0.0
    %1741 = vmatprep.subr.mxu0 0.0
    %1742 = vmatpush2.msra.mxu0 0.0
    %1743 = vmatprep.subr.mxu0 0.0
    %1744 = vmatpush2.msra.mxu0 0.0
    %1745 = vmatprep.subr.mxu0 0.0
    %1746 = vmatpush2.msra.mxu0 0.0
    %1747 = vmatprep.subr.mxu0 0.0
    %1748 = vmatpush2.msra.mxu0 0.0
    %1749 = vmatprep.subr.mxu0 0.0
    %1750 = vmatpush2.msra.mxu0 0.0
    %1751 = vmatprep.subr.mxu0 0.0
    %1752 = vmatpush2.msra.mxu0 0.0
    %1753 = vmatprep.subr.mxu0 0.0
    %1754 = vmatpush2.msra.mxu0 0.0
    %1755 = vmatprep.subr.mxu0 0.0
    %1756 = vmatpush2.msra.mxu0 0.0
    %1757 = vmatprep.subr.mxu0 0.0
    %1758 = vmatpush2.msra.mxu0 0.0
    %1759 = vmatprep.subr.mxu0 0.0
    %1760 = vmatpush2.msra.mxu0 0.0
    %1761 = vmatprep.subr.mxu0 0.0
    %1762 = vmatpush2.msra.mxu0 0.0
    %1763 = vmatprep.subr.mxu0 0.0
    %1764 = vmatpush2.msra.mxu0 0.0
    %1765 = vmatprep.subr.mxu0 0.0
    %1766 = vmatpush2.msra.mxu0 0.0
    %1767 = vmatprep.mubr.f32.mxu0 0.0
    %1768 = vmatmul.mubr.f32.gmra.mxu0 %v1698
    %v1769 = vpop.f32.mrf.mxu0
    %v1770 = vadd.f32 0.0, %v1769
    %v1771 = vpop.f32.mrf.mxu0
    %1772 = vmatprep.mubr.f32.mxu0 0.0
    %1773 = vmatmul.mubr.f32.gmra.mxu0 %v1701
    %v1774 = vpop.f32.mrf.mxu0
    %v1775 = vadd.f32 0.0, %v1774
    %v1776 = vpop.f32.mrf.mxu0
    %1777 = vdwg.mxu0
    %v1778 = vadd.f32 %v1367, %v1770
    %v1779 = vadd.f32 %v1368, %v1775
    %1781 = vrot.lane.b32.xlu0 %v1642, 96
    %v1782 = vpop.permute.xlu0 %1781
    %vm1784 = vcmask 257027
    %1785 = vst.msk [vmem:[#allocation10] sm:$0x8] %vm1784, %v1782
    %v1786 = vld [vmem:[#allocation7] sm:$0xff]
    %v1787 = vld [vmem:[#allocation7 + $0x8] sm:$0xff]
    %v1788 = vld [vmem:[#allocation7 + $0x10] sm:$0xff]
    %v1789 = vld [vmem:[#allocation7 + $0x18] sm:$0xff]
    %v1790 = vrot.slane %v1642, 3
    %1791 = vrot.lane.b32.xlu0 %v1790, 96
    %v1792 = vpop.permute.xlu0 %1791
    %v1793 = vsel %vm86, %v1792, 0
    %1795 = vmatprep.subr.mxu0 0.0
    %1796 = vmatpush1.msra.mxu0 0.0
    %1797 = vmatprep.subr.mxu0 0.0
    %1798 = vmatpush1.msra.mxu0 0.0
    %1799 = vmatprep.subr.mxu0 0.0
    %1800 = vmatpush1.msra.mxu0 0.0
    %1801 = vmatprep.subr.mxu0 0.0
    %1802 = vmatpush1.msra.mxu0 0.0
    %1803 = vmatprep.subr.mxu0 0.0
    %1804 = vmatpush1.msra.mxu0 0.0
    %1805 = vmatprep.subr.mxu0 0.0
    %1806 = vmatpush1.msra.mxu0 0.0
    %1807 = vmatprep.subr.mxu0 0.0
    %1808 = vmatpush1.msra.mxu0 0.0
    %1809 = vmatprep.subr.mxu0 0.0
    %1810 = vmatpush1.msra.mxu0 0.0
    %1811 = vmatprep.subr.mxu0 0.0
    %1812 = vmatpush1.msra.mxu0 0.0
    %1813 = vmatprep.subr.mxu0 0.0
    %1814 = vmatpush1.msra.mxu0 0.0
    %1815 = vmatprep.subr.mxu0 0.0
    %1816 = vmatpush1.msra.mxu0 0.0
    %1817 = vmatprep.subr.mxu0 0.0
    %1818 = vmatpush1.msra.mxu0 0.0
    %1819 = vmatprep.subr.mxu0 0.0
    %1820 = vmatpush1.msra.mxu0 %v1789
    %1821 = vmatprep.subr.mxu0 0.0
    %1822 = vmatpush1.msra.mxu0 %v1788
    %1823 = vmatprep.subr.mxu0 0.0
    %1824 = vmatpush1.msra.mxu0 %v1787
    %1825 = vmatprep.subr.mxu0 0.0
    %1826 = vmatpush1.msra.mxu0 %v1786
    %1827 = vmatprep.subr.mxu0 0.0
    %1828 = vmatpush2.msra.mxu0 0.0
    %1829 = vmatprep.subr.mxu0 0.0
    %1830 = vmatpush2.msra.mxu0 0.0
    %1831 = vmatprep.subr.mxu0 0.0
    %1832 = vmatpush2.msra.mxu0 0.0
    %1833 = vmatprep.subr.mxu0 0.0
    %1834 = vmatpush2.msra.mxu0 0.0
    %1835 = vmatprep.subr.mxu0 0.0
    %1836 = vmatpush2.msra.mxu0 0.0
    %1837 = vmatprep.subr.mxu0 0.0
    %1838 = vmatpush2.msra.mxu0 0.0
    %1839 = vmatprep.subr.mxu0 0.0
    %1840 = vmatpush2.msra.mxu0 0.0
    %1841 = vmatprep.subr.mxu0 0.0
    %1842 = vmatpush2.msra.mxu0 0.0
    %1843 = vmatprep.subr.mxu0 0.0
    %1844 = vmatpush2.msra.mxu0 0.0
    %1845 = vmatprep.subr.mxu0 0.0
    %1846 = vmatpush2.msra.mxu0 0.0
    %1847 = vmatprep.subr.mxu0 0.0
    %1848 = vmatpush2.msra.mxu0 0.0
    %1849 = vmatprep.subr.mxu0 0.0
    %1850 = vmatpush2.msra.mxu0 0.0
    %1851 = vmatprep.subr.mxu0 0.0
    %1852 = vmatpush2.msra.mxu0 0.0
    %1853 = vmatprep.subr.mxu0 0.0
    %1854 = vmatpush2.msra.mxu0 0.0
    %1855 = vmatprep.subr.mxu0 0.0
    %1856 = vmatpush2.msra.mxu0 0.0
    %1857 = vmatprep.subr.mxu0 0.0
    %1858 = vmatpush2.msra.mxu0 0.0
    %1859 = vmatprep.mubr.f32.mxu0 0.0
    %1860 = vmatmul.mubr.f32.gmra.mxu0 %v1793
    %v1861 = vpop.f32.mrf.mxu0
    %v1862 = vadd.f32 0.0, %v1861
    %v1863 = vpop.f32.mrf.mxu0
    %1864 = vdwg.mxu0
    %v1866 = vrot.slane %v1862, 4
    %v1868 = vadd.f32 %v157, %v1866
    %vm1869 = vcmask 126980
    %v1870 = vsel %vm1869, %v1868, -inf
    %1871 = vmax.xlane.f32.xlu0 %v1870
    %v1872 = vpop.xlane.xlu0 %1871
    %v1873 = vsub.f32 %v1868, %v1872
    %v1874 = vmul.f32 %v1873, 1.442695
    %v1875 = vpow.pop %v1874
    %v1876 = vsel %vm1869, %v1875, 0.0
    %1877 = vadd.xlane.f32.xlu0 %v1876
    %v1878 = vpop.xlane.xlu0 %1877
    %v1879 = vrcp.pop %v1878
    %v1880 = vmul.f32 %v1875, %v1879
    %v1881 = vsub.f32 0.0, %v1868
    %v1882 = vmul.f32 %v1881, 1.442695
    %v1883 = vpow.pop %v1882
    %v1884 = vadd.f32 %v1883, 1.0
    %v1885 = vrcp.pop %v1884
    %v1887 = vrot.slane %v1880, 4
    %v1888 = vsel %vm266, %v1887, 0
    %1890 = vmatprep.subr.mxu0 0.0
    %1891 = vmatpush1.msra.mxu0 0.0
    %1892 = vmatprep.subr.mxu0 0.0
    %1893 = vmatpush1.msra.mxu0 0.0
    %1894 = vmatprep.subr.mxu0 0.0
    %1895 = vmatpush1.msra.mxu0 0.0
    %1896 = vmatprep.subr.mxu0 0.0
    %1897 = vmatpush1.msra.mxu0 0.0
    %1898 = vmatprep.subr.mxu0 0.0
    %1899 = vmatpush1.msra.mxu0 0.0
    %1900 = vmatprep.subr.mxu0 0.0
    %1901 = vmatpush1.msra.mxu0 0.0
    %1902 = vmatprep.subr.mxu0 0.0
    %1903 = vmatpush1.msra.mxu0 0.0
    %1904 = vmatprep.subr.mxu0 0.0
    %1905 = vmatpush1.msra.mxu0 0.0
    %1906 = vmatprep.subr.mxu0 0.0
    %1907 = vmatpush1.msra.mxu0 0.0
    %1908 = vmatprep.subr.mxu0 0.0
    %1909 = vmatpush1.msra.mxu0 0.0
    %1910 = vmatprep.subr.mxu0 0.0
    %1911 = vmatpush1.msra.mxu0 0.0
    %1912 = vmatprep.subr.mxu0 0.0
    %1913 = vmatpush1.msra.mxu0 0.0
    %1914 = vmatprep.subr.mxu0 0.0
    %1915 = vmatpush1.msra.mxu0 0.0
    %1916 = vmatprep.subr.mxu0 0.0
    %1917 = vmatpush1.msra.mxu0 0.0
    %1918 = vmatprep.subr.mxu0 0.0
    %1919 = vmatpush1.msra.mxu0 %v1779
    %1920 = vmatprep.subr.mxu0 0.0
    %1921 = vmatpush1.msra.mxu0 %v1778
    %1922 = vmatprep.subr.mxu0 0.0
    %1923 = vmatpush2.msra.mxu0 0.0
    %1924 = vmatprep.subr.mxu0 0.0
    %1925 = vmatpush2.msra.mxu0 0.0
    %1926 = vmatprep.subr.mxu0 0.0
    %1927 = vmatpush2.msra.mxu0 0.0
    %1928 = vmatprep.subr.mxu0 0.0
    %1929 = vmatpush2.msra.mxu0 0.0
    %1930 = vmatprep.subr.mxu0 0.0
    %1931 = vmatpush2.msra.mxu0 0.0
    %1932 = vmatprep.subr.mxu0 0.0
    %1933 = vmatpush2.msra.mxu0 0.0
    %1934 = vmatprep.subr.mxu0 0.0
    %1935 = vmatpush2.msra.mxu0 0.0
    %1936 = vmatprep.subr.mxu0 0.0
    %1937 = vmatpush2.msra.mxu0 0.0
    %1938 = vmatprep.subr.mxu0 0.0
    %1939 = vmatpush2.msra.mxu0 0.0
    %1940 = vmatprep.subr.mxu0 0.0
    %1941 = vmatpush2.msra.mxu0 0.0
    %1942 = vmatprep.subr.mxu0 0.0
    %1943 = vmatpush2.msra.mxu0 0.0
    %1944 = vmatprep.subr.mxu0 0.0
    %1945 = vmatpush2.msra.mxu0 0.0
    %1946 = vmatprep.subr.mxu0 0.0
    %1947 = vmatpush2.msra.mxu0 0.0
    %1948 = vmatprep.subr.mxu0 0.0
    %1949 = vmatpush2.msra.mxu0 0.0
    %1950 = vmatprep.subr.mxu0 0.0
    %1951 = vmatpush2.msra.mxu0 0.0
    %1952 = vmatprep.subr.mxu0 0.0
    %1953 = vmatpush2.msra.mxu0 0.0
    %1954 = vmatprep.mubr.f32.mxu0 0.0
    %1955 = vmatmul.mubr.f32.gmra.mxu0 %v1888
    %v1956 = vpop.f32.mrf.mxu0
    %v1957 = vadd.f32 0.0, %v1956
    %v1958 = vpop.f32.mrf.mxu0
    %1959 = vdwg.mxu0
    %1961 = vset.pattern.permute.xlu0 96
    %1962 = vperm.xlu0 %1961, %v1885
    %v1963 = vpop.permute.xlu0 %1962
    %v1966 = vrot.slane %v1957, 4
    %v1968 = vmul.f32 %v1963, %v1966
    %v1969 = vld [vmem:[#allocation8] sm:$0xff]
    %v1970 = vld [vmem:[#allocation8 + $0x8] sm:$0xff]
    %v1971 = vld [vmem:[#allocation8 + $0x10] sm:$0xff]
    %v1972 = vld [vmem:[#allocation8 + $0x18] sm:$0xff]
    %v1974 = vrot.slane %v1968, 4
    %v1975 = vsel %vm86, %v1974, 0
    %1977 = vmatprep.subr.mxu0 0.0
    %1978 = vmatpush1.msra.mxu0 0.0
    %1979 = vmatprep.subr.mxu0 0.0
    %1980 = vmatpush1.msra.mxu0 0.0
    %1981 = vmatprep.subr.mxu0 0.0
    %1982 = vmatpush1.msra.mxu0 0.0
    %1983 = vmatprep.subr.mxu0 0.0
    %1984 = vmatpush1.msra.mxu0 0.0
    %1985 = vmatprep.subr.mxu0 0.0
    %1986 = vmatpush1.msra.mxu0 0.0
    %1987 = vmatprep.subr.mxu0 0.0
    %1988 = vmatpush1.msra.mxu0 0.0
    %1989 = vmatprep.subr.mxu0 0.0
    %1990 = vmatpush1.msra.mxu0 0.0
    %1991 = vmatprep.subr.mxu0 0.0
    %1992 = vmatpush1.msra.mxu0 0.0
    %1993 = vmatprep.subr.mxu0 0.0
    %1994 = vmatpush1.msra.mxu0 0.0
    %1995 = vmatprep.subr.mxu0 0.0
    %1996 = vmatpush1.msra.mxu0 0.0
    %1997 = vmatprep.subr.mxu0 0.0
    %1998 = vmatpush1.msra.mxu0 0.0
    %1999 = vmatprep.subr.mxu0 0.0
    %2000 = vmatpush1.msra.mxu0 0.0
    %2001 = vmatprep.subr.mxu0 0.0
    %2002 = vmatpush1.msra.mxu0 %v1972
    %2003 = vmatprep.subr.mxu0 0.0
    %2004 = vmatpush1.msra.mxu0 %v1971
    %2005 = vmatprep.subr.mxu0 0.0
    %2006 = vmatpush1.msra.mxu0 %v1970
    %2007 = vmatprep.subr.mxu0 0.0
    %2008 = vmatpush1.msra.mxu0 %v1969
    %2009 = vmatprep.subr.mxu0 0.0
    %2010 = vmatpush2.msra.mxu0 0.0
    %2011 = vmatprep.subr.mxu0 0.0
    %2012 = vmatpush2.msra.mxu0 0.0
    %2013 = vmatprep.subr.mxu0 0.0
    %2014 = vmatpush2.msra.mxu0 0.0
    %2015 = vmatprep.subr.mxu0 0.0
    %2016 = vmatpush2.msra.mxu0 0.0
    %2017 = vmatprep.subr.mxu0 0.0
    %2018 = vmatpush2.msra.mxu0 0.0
    %2019 = vmatprep.subr.mxu0 0.0
    %2020 = vmatpush2.msra.mxu0 0.0
    %2021 = vmatprep.subr.mxu0 0.0
    %2022 = vmatpush2.msra.mxu0 0.0
    %2023 = vmatprep.subr.mxu0 0.0
    %2024 = vmatpush2.msra.mxu0 0.0
    %2025 = vmatprep.subr.mxu0 0.0
    %2026 = vmatpush2.msra.mxu0 0.0
    %2027 = vmatprep.subr.mxu0 0.0
    %2028 = vmatpush2.msra.mxu0 0.0
    %2029 = vmatprep.subr.mxu0 0.0
    %2030 = vmatpush2.msra.mxu0 0.0
    %2031 = vmatprep.subr.mxu0 0.0
    %2032 = vmatpush2.msra.mxu0 0.0
    %2033 = vmatprep.subr.mxu0 0.0
    %2034 = vmatpush2.msra.mxu0 0.0
    %2035 = vmatprep.subr.mxu0 0.0
    %2036 = vmatpush2.msra.mxu0 0.0
    %2037 = vmatprep.subr.mxu0 0.0
    %2038 = vmatpush2.msra.mxu0 0.0
    %2039 = vmatprep.subr.mxu0 0.0
    %2040 = vmatpush2.msra.mxu0 0.0
    %2041 = vmatprep.mubr.f32.mxu0 0.0
    %2042 = vmatmul.mubr.f32.gmra.mxu0 %v1975
    %v2043 = vpop.f32.mrf.mxu0
    %v2044 = vadd.f32 0.0, %v2043
    %v2045 = vpop.f32.mrf.mxu0
    %2046 = vdwg.mxu0
    %v2048 = vrot.slane %v2044, 4
    %2049 = vrot.lane.b32.xlu0 %v2048, 32
    %v2050 = vpop.permute.xlu0 %2049
    %v2052 = vadd.f32 %v1868, %v2050
    %v2053 = vmax.f32 %v2052, 0.0
    %v2054 = vmax.f32 %v1868, 0.0
    %vm2055 = vcmask 258180
    %v2056 = vsel %vm2055, %v1868, -inf
    %2057 = vmax.xlane.f32.xlu0 %v2056
    %v2058 = vpop.xlane.xlu0 %2057
    %v2059 = vsub.f32 %v1868, %v2058
    %v2060 = vmul.f32 %v2059, 1.442695
    %v2061 = vpow.pop %v2060
    %2063 = vrot.lane.b32.xlu0 %v2061, 112
    %v2064 = vpop.permute.xlu0 %2063
    %v2066 = vsel %vm1869, %v2064, 0.0
    %2067 = vadd.xlane.f32.xlu0 %v2066
    %v2068 = vpop.xlane.xlu0 %2067
    %v2069 = vrcp.pop %v2068
    %v2070 = vmul.f32 %v2061, %v2069
    %v2071 = vlaneseq
    %v2072 = vshrl.u32 %v2071, 7
    %v2073 = vsub.s32 4, %v2072
    %v2074 = vrot.slane %v2070, %v2073
    %2076 = vrot.lane.b32.xlu0 %v2074, 112
    %v2077 = vpop.permute.xlu0 %2076
    %v2079 = vmul.f32 %v169, %v2077
    %v2080 = vmul.f32 %v170, %v2077
    %2081 = vset.pattern.permute.xlu0 97
    %2082 = vperm.xlu0 %2081, %v1885
    %v2083 = vpop.permute.xlu0 %2082
    %v2085 = vmul.f32 %v2083, %v2054
    %v2086 = vlaneseq
    %v2087 = vshrl.u32 %v2086, 7
    %v2088 = vsub.s32 4, %v2087
    %v2089 = vrot.slane %v2085, %v2088
    %2092 = vrot.lane.b32.xlu0 %v1778, 64
    %v2093 = vpop.permute.xlu0 %2092
    %2094 = vrot.lane.b32.xlu0 %v1779, 64
    %v2095 = vpop.permute.xlu0 %2094
    %v2098 = vsub.f32 %v2089, %v2093
    %v2099 = vsub.f32 %v2089, %v2095
    %2102 = vrot.lane.b32.xlu0 %v2098, 64
    %v2103 = vpop.permute.xlu0 %2102
    %2104 = vrot.lane.b32.xlu0 %v2099, 64
    %v2105 = vpop.permute.xlu0 %2104
    %v2109 = vsel %vm266, %v2079, 0
    %v2112 = vsel %vm266, %v2080, 0
    %2114 = vmatprep.subr.mxu0 0.0
    %2115 = vmatpush1.msra.mxu0 0.0
    %2116 = vmatprep.subr.mxu0 0.0
    %2117 = vmatpush1.msra.mxu0 0.0
    %2118 = vmatprep.subr.mxu0 0.0
    %2119 = vmatpush1.msra.mxu0 0.0
    %2120 = vmatprep.subr.mxu0 0.0
    %2121 = vmatpush1.msra.mxu0 0.0
    %2122 = vmatprep.subr.mxu0 0.0
    %2123 = vmatpush1.msra.mxu0 0.0
    %2124 = vmatprep.subr.mxu0 0.0
    %2125 = vmatpush1.msra.mxu0 0.0
    %2126 = vmatprep.subr.mxu0 0.0
    %2127 = vmatpush1.msra.mxu0 0.0
    %2128 = vmatprep.subr.mxu0 0.0
    %2129 = vmatpush1.msra.mxu0 0.0
    %2130 = vmatprep.subr.mxu0 0.0
    %2131 = vmatpush1.msra.mxu0 0.0
    %2132 = vmatprep.subr.mxu0 0.0
    %2133 = vmatpush1.msra.mxu0 0.0
    %2134 = vmatprep.subr.mxu0 0.0
    %2135 = vmatpush1.msra.mxu0 0.0
    %2136 = vmatprep.subr.mxu0 0.0
    %2137 = vmatpush1.msra.mxu0 0.0
    %2138 = vmatprep.subr.mxu0 0.0
    %2139 = vmatpush1.msra.mxu0 0.0
    %2140 = vmatprep.subr.mxu0 0.0
    %2141 = vmatpush1.msra.mxu0 0.0
    %2142 = vmatprep.subr.mxu0 0.0
    %2143 = vmatpush1.msra.mxu0 %v2105
    %2144 = vmatprep.subr.mxu0 0.0
    %2145 = vmatpush1.msra.mxu0 %v2103
    %2146 = vmatprep.subr.mxu0 0.0
    %2147 = vmatpush2.msra.mxu0 0.0
    %2148 = vmatprep.subr.mxu0 0.0
    %2149 = vmatpush2.msra.mxu0 0.0
    %2150 = vmatprep.subr.mxu0 0.0
    %2151 = vmatpush2.msra.mxu0 0.0
    %2152 = vmatprep.subr.mxu0 0.0
    %2153 = vmatpush2.msra.mxu0 0.0
    %2154 = vmatprep.subr.mxu0 0.0
    %2155 = vmatpush2.msra.mxu0 0.0
    %2156 = vmatprep.subr.mxu0 0.0
    %2157 = vmatpush2.msra.mxu0 0.0
    %2158 = vmatprep.subr.mxu0 0.0
    %2159 = vmatpush2.msra.mxu0 0.0
    %2160 = vmatprep.subr.mxu0 0.0
    %2161 = vmatpush2.msra.mxu0 0.0
    %2162 = vmatprep.subr.mxu0 0.0
    %2163 = vmatpush2.msra.mxu0 0.0
    %2164 = vmatprep.subr.mxu0 0.0
    %2165 = vmatpush2.msra.mxu0 0.0
    %2166 = vmatprep.subr.mxu0 0.0
    %2167 = vmatpush2.msra.mxu0 0.0
    %2168 = vmatprep.subr.mxu0 0.0
    %2169 = vmatpush2.msra.mxu0 0.0
    %2170 = vmatprep.subr.mxu0 0.0
    %2171 = vmatpush2.msra.mxu0 0.0
    %2172 = vmatprep.subr.mxu0 0.0
    %2173 = vmatpush2.msra.mxu0 0.0
    %2174 = vmatprep.subr.mxu0 0.0
    %2175 = vmatpush2.msra.mxu0 0.0
    %2176 = vmatprep.subr.mxu0 0.0
    %2177 = vmatpush2.msra.mxu0 0.0
    %2178 = vmatprep.mubr.f32.mxu0 0.0
    %2179 = vmatmul.mubr.f32.gmra.mxu0 %v2109
    %v2180 = vpop.f32.mrf.mxu0
    %v2181 = vadd.f32 0.0, %v2180
    %v2182 = vpop.f32.mrf.mxu0
    %2183 = vmatprep.mubr.f32.mxu0 0.0
    %2184 = vmatmul.mubr.f32.gmra.mxu0 %v2112
    %v2185 = vpop.f32.mrf.mxu0
    %v2186 = vadd.f32 0.0, %v2185
    %v2187 = vpop.f32.mrf.mxu0
    %2188 = vdwg.mxu0
    %v2189 = vadd.f32 %v1778, %v2181
    %v2190 = vadd.f32 %v1779, %v2186
    %2192 = vrot.lane.b32.xlu0 %v2053, 96
    %v2193 = vpop.permute.xlu0 %2192
    %vm2195 = vcmask 258052
    %2196 = vst.msk [vmem:[#allocation10] sm:$0x10] %vm2195, %v2193
    %v2197 = vld [vmem:[#allocation7] sm:$0xff]
    %v2198 = vld [vmem:[#allocation7 + $0x8] sm:$0xff]
    %v2199 = vld [vmem:[#allocation7 + $0x10] sm:$0xff]
    %v2200 = vld [vmem:[#allocation7 + $0x18] sm:$0xff]
    %v2201 = vrot.slane %v2053, 4
    %2202 = vrot.lane.b32.xlu0 %v2201, 96
    %v2203 = vpop.permute.xlu0 %2202
    %v2204 = vsel %vm86, %v2203, 0
    %2206 = vmatprep.subr.mxu0 0.0
    %2207 = vmatpush1.msra.mxu0 0.0
    %2208 = vmatprep.subr.mxu0 0.0
    %2209 = vmatpush1.msra.mxu0 0.0
    %2210 = vmatprep.subr.mxu0 0.0
    %2211 = vmatpush1.msra.mxu0 0.0
    %2212 = vmatprep.subr.mxu0 0.0
    %2213 = vmatpush1.msra.mxu0 0.0
    %2214 = vmatprep.subr.mxu0 0.0
    %2215 = vmatpush1.msra.mxu0 0.0
    %2216 = vmatprep.subr.mxu0 0.0
    %2217 = vmatpush1.msra.mxu0 0.0
    %2218 = vmatprep.subr.mxu0 0.0
    %2219 = vmatpush1.msra.mxu0 0.0
    %2220 = vmatprep.subr.mxu0 0.0
    %2221 = vmatpush1.msra.mxu0 0.0
    %2222 = vmatprep.subr.mxu0 0.0
    %2223 = vmatpush1.msra.mxu0 0.0
    %2224 = vmatprep.subr.mxu0 0.0
    %2225 = vmatpush1.msra.mxu0 0.0
    %2226 = vmatprep.subr.mxu0 0.0
    %2227 = vmatpush1.msra.mxu0 0.0
    %2228 = vmatprep.subr.mxu0 0.0
    %2229 = vmatpush1.msra.mxu0 0.0
    %2230 = vmatprep.subr.mxu0 0.0
    %2231 = vmatpush1.msra.mxu0 %v2200
    %2232 = vmatprep.subr.mxu0 0.0
    %2233 = vmatpush1.msra.mxu0 %v2199
    %2234 = vmatprep.subr.mxu0 0.0
    %2235 = vmatpush1.msra.mxu0 %v2198
    %2236 = vmatprep.subr.mxu0 0.0
    %2237 = vmatpush1.msra.mxu0 %v2197
    %2238 = vmatprep.subr.mxu0 0.0
    %2239 = vmatpush2.msra.mxu0 0.0
    %2240 = vmatprep.subr.mxu0 0.0
    %2241 = vmatpush2.msra.mxu0 0.0
    %2242 = vmatprep.subr.mxu0 0.0
    %2243 = vmatpush2.msra.mxu0 0.0
    %2244 = vmatprep.subr.mxu0 0.0
    %2245 = vmatpush2.msra.mxu0 0.0
    %2246 = vmatprep.subr.mxu0 0.0
    %2247 = vmatpush2.msra.mxu0 0.0
    %2248 = vmatprep.subr.mxu0 0.0
    %2249 = vmatpush2.msra.mxu0 0.0
    %2250 = vmatprep.subr.mxu0 0.0
    %2251 = vmatpush2.msra.mxu0 0.0
    %2252 = vmatprep.subr.mxu0 0.0
    %2253 = vmatpush2.msra.mxu0 0.0
    %2254 = vmatprep.subr.mxu0 0.0
    %2255 = vmatpush2.msra.mxu0 0.0
    %2256 = vmatprep.subr.mxu0 0.0
    %2257 = vmatpush2.msra.mxu0 0.0
    %2258 = vmatprep.subr.mxu0 0.0
    %2259 = vmatpush2.msra.mxu0 0.0
    %2260 = vmatprep.subr.mxu0 0.0
    %2261 = vmatpush2.msra.mxu0 0.0
    %2262 = vmatprep.subr.mxu0 0.0
    %2263 = vmatpush2.msra.mxu0 0.0
    %2264 = vmatprep.subr.mxu0 0.0
    %2265 = vmatpush2.msra.mxu0 0.0
    %2266 = vmatprep.subr.mxu0 0.0
    %2267 = vmatpush2.msra.mxu0 0.0
    %2268 = vmatprep.subr.mxu0 0.0
    %2269 = vmatpush2.msra.mxu0 0.0
    %2270 = vmatprep.mubr.f32.mxu0 0.0
    %2271 = vmatmul.mubr.f32.gmra.mxu0 %v2204
    %v2272 = vpop.f32.mrf.mxu0
    %v2273 = vadd.f32 0.0, %v2272
    %v2274 = vpop.f32.mrf.mxu0
    %2275 = vdwg.mxu0
    %v2277 = vrot.slane %v2273, 3
    %v2279 = vadd.f32 %v157, %v2277
    %vm2280 = vcmask 128005
    %v2281 = vsel %vm2280, %v2279, -inf
    %2282 = vmax.xlane.f32.xlu0 %v2281
    %v2283 = vpop.xlane.xlu0 %2282
    %v2284 = vsub.f32 %v2279, %v2283
    %v2285 = vmul.f32 %v2284, 1.442695
    %v2286 = vpow.pop %v2285
    %v2287 = vsel %vm2280, %v2286, 0.0
    %2288 = vadd.xlane.f32.xlu0 %v2287
    %v2289 = vpop.xlane.xlu0 %2288
    %v2290 = vrcp.pop %v2289
    %v2291 = vmul.f32 %v2286, %v2290
    %v2292 = vsub.f32 0.0, %v2279
    %v2293 = vmul.f32 %v2292, 1.442695
    %v2294 = vpow.pop %v2293
    %v2295 = vadd.f32 %v2294, 1.0
    %v2296 = vrcp.pop %v2295
    %v2298 = vrot.slane %v2291, 5
    %v2299 = vsel %vm266, %v2298, 0
    %2301 = vmatprep.subr.mxu0 0.0
    %2302 = vmatpush1.msra.mxu0 0.0
    %2303 = vmatprep.subr.mxu0 0.0
    %2304 = vmatpush1.msra.mxu0 0.0
    %2305 = vmatprep.subr.mxu0 0.0
    %2306 = vmatpush1.msra.mxu0 0.0
    %2307 = vmatprep.subr.mxu0 0.0
    %2308 = vmatpush1.msra.mxu0 0.0
    %2309 = vmatprep.subr.mxu0 0.0
    %2310 = vmatpush1.msra.mxu0 0.0
    %2311 = vmatprep.subr.mxu0 0.0
    %2312 = vmatpush1.msra.mxu0 0.0
    %2313 = vmatprep.subr.mxu0 0.0
    %2314 = vmatpush1.msra.mxu0 0.0
    %2315 = vmatprep.subr.mxu0 0.0
    %2316 = vmatpush1.msra.mxu0 0.0
    %2317 = vmatprep.subr.mxu0 0.0
    %2318 = vmatpush1.msra.mxu0 0.0
    %2319 = vmatprep.subr.mxu0 0.0
    %2320 = vmatpush1.msra.mxu0 0.0
    %2321 = vmatprep.subr.mxu0 0.0
    %2322 = vmatpush1.msra.mxu0 0.0
    %2323 = vmatprep.subr.mxu0 0.0
    %2324 = vmatpush1.msra.mxu0 0.0
    %2325 = vmatprep.subr.mxu0 0.0
    %2326 = vmatpush1.msra.mxu0 0.0
    %2327 = vmatprep.subr.mxu0 0.0
    %2328 = vmatpush1.msra.mxu0 0.0
    %2329 = vmatprep.subr.mxu0 0.0
    %2330 = vmatpush1.msra.mxu0 %v2190
    %2331 = vmatprep.subr.mxu0 0.0
    %2332 = vmatpush1.msra.mxu0 %v2189
    %2333 = vmatprep.subr.mxu0 0.0
    %2334 = vmatpush2.msra.mxu0 0.0
    %2335 = vmatprep.subr.mxu0 0.0
    %2336 = vmatpush2.msra.mxu0 0.0
    %2337 = vmatprep.subr.mxu0 0.0
    %2338 = vmatpush2.msra.mxu0 0.0
    %2339 = vmatprep.subr.mxu0 0.0
    %2340 = vmatpush2.msra.mxu0 0.0
    %2341 = vmatprep.subr.mxu0 0.0
    %2342 = vmatpush2.msra.mxu0 0.0
    %2343 = vmatprep.subr.mxu0 0.0
    %2344 = vmatpush2.msra.mxu0 0.0
    %2345 = vmatprep.subr.mxu0 0.0
    %2346 = vmatpush2.msra.mxu0 0.0
    %2347 = vmatprep.subr.mxu0 0.0
    %2348 = vmatpush2.msra.mxu0 0.0
    %2349 = vmatprep.subr.mxu0 0.0
    %2350 = vmatpush2.msra.mxu0 0.0
    %2351 = vmatprep.subr.mxu0 0.0
    %2352 = vmatpush2.msra.mxu0 0.0
    %2353 = vmatprep.subr.mxu0 0.0
    %2354 = vmatpush2.msra.mxu0 0.0
    %2355 = vmatprep.subr.mxu0 0.0
    %2356 = vmatpush2.msra.mxu0 0.0
    %2357 = vmatprep.subr.mxu0 0.0
    %2358 = vmatpush2.msra.mxu0 0.0
    %2359 = vmatprep.subr.mxu0 0.0
    %2360 = vmatpush2.msra.mxu0 0.0
    %2361 = vmatprep.subr.mxu0 0.0
    %2362 = vmatpush2.msra.mxu0 0.0
    %2363 = vmatprep.subr.mxu0 0.0
    %2364 = vmatpush2.msra.mxu0 0.0
    %2365 = vmatprep.mubr.f32.mxu0 0.0
    %2366 = vmatmul.mubr.f32.gmra.mxu0 %v2299
    %v2367 = vpop.f32.mrf.mxu0
    %v2368 = vadd.f32 0.0, %v2367
    %v2369 = vpop.f32.mrf.mxu0
    %2370 = vdwg.mxu0
    %2372 = vset.pattern.permute.xlu0 96
    %2373 = vperm.xlu0 %2372, %v2296
    %v2374 = vpop.permute.xlu0 %2373
    %v2377 = vrot.slane %v2368, 3
    %v2379 = vmul.f32 %v2374, %v2377
    %v2380 = vld [vmem:[#allocation8] sm:$0xff]
    %v2381 = vld [vmem:[#allocation8 + $0x8] sm:$0xff]
    %v2382 = vld [vmem:[#allocation8 + $0x10] sm:$0xff]
    %v2383 = vld [vmem:[#allocation8 + $0x18] sm:$0xff]
    %v2385 = vrot.slane %v2379, 5
    %v2386 = vsel %vm86, %v2385, 0
    %2388 = vmatprep.subr.mxu0 0.0
    %2389 = vmatpush1.msra.mxu0 0.0
    %2390 = vmatprep.subr.mxu0 0.0
    %2391 = vmatpush1.msra.mxu0 0.0
    %2392 = vmatprep.subr.mxu0 0.0
    %2393 = vmatpush1.msra.mxu0 0.0
    %2394 = vmatprep.subr.mxu0 0.0
    %2395 = vmatpush1.msra.mxu0 0.0
    %2396 = vmatprep.subr.mxu0 0.0
    %2397 = vmatpush1.msra.mxu0 0.0
    %2398 = vmatprep.subr.mxu0 0.0
    %2399 = vmatpush1.msra.mxu0 0.0
    %2400 = vmatprep.subr.mxu0 0.0
    %2401 = vmatpush1.msra.mxu0 0.0
    %2402 = vmatprep.subr.mxu0 0.0
    %2403 = vmatpush1.msra.mxu0 0.0
    %2404 = vmatprep.subr.mxu0 0.0
    %2405 = vmatpush1.msra.mxu0 0.0
    %2406 = vmatprep.subr.mxu0 0.0
    %2407 = vmatpush1.msra.mxu0 0.0
    %2408 = vmatprep.subr.mxu0 0.0
    %2409 = vmatpush1.msra.mxu0 0.0
    %2410 = vmatprep.subr.mxu0 0.0
    %2411 = vmatpush1.msra.mxu0 0.0
    %2412 = vmatprep.subr.mxu0 0.0
    %2413 = vmatpush1.msra.mxu0 %v2383
    %2414 = vmatprep.subr.mxu0 0.0
    %2415 = vmatpush1.msra.mxu0 %v2382
    %2416 = vmatprep.subr.mxu0 0.0
    %2417 = vmatpush1.msra.mxu0 %v2381
    %2418 = vmatprep.subr.mxu0 0.0
    %2419 = vmatpush1.msra.mxu0 %v2380
    %2420 = vmatprep.subr.mxu0 0.0
    %2421 = vmatpush2.msra.mxu0 0.0
    %2422 = vmatprep.subr.mxu0 0.0
    %2423 = vmatpush2.msra.mxu0 0.0
    %2424 = vmatprep.subr.mxu0 0.0
    %2425 = vmatpush2.msra.mxu0 0.0
    %2426 = vmatprep.subr.mxu0 0.0
    %2427 = vmatpush2.msra.mxu0 0.0
    %2428 = vmatprep.subr.mxu0 0.0
    %2429 = vmatpush2.msra.mxu0 0.0
    %2430 = vmatprep.subr.mxu0 0.0
    %2431 = vmatpush2.msra.mxu0 0.0
    %2432 = vmatprep.subr.mxu0 0.0
    %2433 = vmatpush2.msra.mxu0 0.0
    %2434 = vmatprep.subr.mxu0 0.0
    %2435 = vmatpush2.msra.mxu0 0.0
    %2436 = vmatprep.subr.mxu0 0.0
    %2437 = vmatpush2.msra.mxu0 0.0
    %2438 = vmatprep.subr.mxu0 0.0
    %2439 = vmatpush2.msra.mxu0 0.0
    %2440 = vmatprep.subr.mxu0 0.0
    %2441 = vmatpush2.msra.mxu0 0.0
    %2442 = vmatprep.subr.mxu0 0.0
    %2443 = vmatpush2.msra.mxu0 0.0
    %2444 = vmatprep.subr.mxu0 0.0
    %2445 = vmatpush2.msra.mxu0 0.0
    %2446 = vmatprep.subr.mxu0 0.0
    %2447 = vmatpush2.msra.mxu0 0.0
    %2448 = vmatprep.subr.mxu0 0.0
    %2449 = vmatpush2.msra.mxu0 0.0
    %2450 = vmatprep.subr.mxu0 0.0
    %2451 = vmatpush2.msra.mxu0 0.0
    %2452 = vmatprep.mubr.f32.mxu0 0.0
    %2453 = vmatmul.mubr.f32.gmra.mxu0 %v2386
    %v2454 = vpop.f32.mrf.mxu0
    %v2455 = vadd.f32 0.0, %v2454
    %v2456 = vpop.f32.mrf.mxu0
    %2457 = vdwg.mxu0
    %v2459 = vrot.slane %v2455, 3
    %2460 = vrot.lane.b32.xlu0 %v2459, 32
    %v2461 = vpop.permute.xlu0 %2460
    %v2463 = vadd.f32 %v2279, %v2461
    %v2464 = vmax.f32 %v2463, 0.0
    %v2465 = vmax.f32 %v2279, 0.0
    %vm2466 = vcmask 259205
    %v2467 = vsel %vm2466, %v2279, -inf
    %2468 = vmax.xlane.f32.xlu0 %v2467
    %v2469 = vpop.xlane.xlu0 %2468
    %v2470 = vsub.f32 %v2279, %v2469
    %v2471 = vmul.f32 %v2470, 1.442695
    %v2472 = vpow.pop %v2471
    %2474 = vrot.lane.b32.xlu0 %v2472, 112
    %v2475 = vpop.permute.xlu0 %2474
    %v2477 = vsel %vm2280, %v2475, 0.0
    %2478 = vadd.xlane.f32.xlu0 %v2477
    %v2479 = vpop.xlane.xlu0 %2478
    %v2480 = vrcp.pop %v2479
    %v2481 = vmul.f32 %v2472, %v2480
    %v2482 = vlaneseq
    %v2483 = vshrl.u32 %v2482, 7
    %v2484 = vsub.s32 5, %v2483
    %v2485 = vrot.slane %v2481, %v2484
    %2487 = vrot.lane.b32.xlu0 %v2485, 112
    %v2488 = vpop.permute.xlu0 %2487
    %v2490 = vmul.f32 %v169, %v2488
    %v2491 = vmul.f32 %v170, %v2488
    %2492 = vset.pattern.permute.xlu0 97
    %2493 = vperm.xlu0 %2492, %v2296
    %v2494 = vpop.permute.xlu0 %2493
    %v2496 = vmul.f32 %v2494, %v2465
    %v2497 = vlaneseq
    %v2498 = vshrl.u32 %v2497, 7
    %v2499 = vsub.s32 5, %v2498
    %v2500 = vrot.slane %v2496, %v2499
    %2503 = vrot.lane.b32.xlu0 %v2189, 64
    %v2504 = vpop.permute.xlu0 %2503
    %2505 = vrot.lane.b32.xlu0 %v2190, 64
    %v2506 = vpop.permute.xlu0 %2505
    %v2509 = vsub.f32 %v2500, %v2504
    %v2510 = vsub.f32 %v2500, %v2506
    %2513 = vrot.lane.b32.xlu0 %v2509, 64
    %v2514 = vpop.permute.xlu0 %2513
    %2515 = vrot.lane.b32.xlu0 %v2510, 64
    %v2516 = vpop.permute.xlu0 %2515
    %v2520 = vsel %vm266, %v2490, 0
    %v2523 = vsel %vm266, %v2491, 0
    %2525 = vmatprep.subr.mxu0 0.0
    %2526 = vmatpush1.msra.mxu0 0.0
    %2527 = vmatprep.subr.mxu0 0.0
    %2528 = vmatpush1.msra.mxu0 0.0
    %2529 = vmatprep.subr.mxu0 0.0
    %2530 = vmatpush1.msra.mxu0 0.0
    %2531 = vmatprep.subr.mxu0 0.0
    %2532 = vmatpush1.msra.mxu0 0.0
    %2533 = vmatprep.subr.mxu0 0.0
    %2534 = vmatpush1.msra.mxu0 0.0
    %2535 = vmatprep.subr.mxu0 0.0
    %2536 = vmatpush1.msra.mxu0 0.0
    %2537 = vmatprep.subr.mxu0 0.0
    %2538 = vmatpush1.msra.mxu0 0.0
    %2539 = vmatprep.subr.mxu0 0.0
    %2540 = vmatpush1.msra.mxu0 0.0
    %2541 = vmatprep.subr.mxu0 0.0
    %2542 = vmatpush1.msra.mxu0 0.0
    %2543 = vmatprep.subr.mxu0 0.0
    %2544 = vmatpush1.msra.mxu0 0.0
    %2545 = vmatprep.subr.mxu0 0.0
    %2546 = vmatpush1.msra.mxu0 0.0
    %2547 = vmatprep.subr.mxu0 0.0
    %2548 = vmatpush1.msra.mxu0 0.0
    %2549 = vmatprep.subr.mxu0 0.0
    %2550 = vmatpush1.msra.mxu0 0.0
    %2551 = vmatprep.subr.mxu0 0.0
    %2552 = vmatpush1.msra.mxu0 0.0
    %2553 = vmatprep.subr.mxu0 0.0
    %2554 = vmatpush1.msra.mxu0 %v2516
    %2555 = vmatprep.subr.mxu0 0.0
    %2556 = vmatpush1.msra.mxu0 %v2514
    %2557 = vmatprep.subr.mxu0 0.0
    %2558 = vmatpush2.msra.mxu0 0.0
    %2559 = vmatprep.subr.mxu0 0.0
    %2560 = vmatpush2.msra.mxu0 0.0
    %2561 = vmatprep.subr.mxu0 0.0
    %2562 = vmatpush2.msra.mxu0 0.0
    %2563 = vmatprep.subr.mxu0 0.0
    %2564 = vmatpush2.msra.mxu0 0.0
    %2565 = vmatprep.subr.mxu0 0.0
    %2566 = vmatpush2.msra.mxu0 0.0
    %2567 = vmatprep.subr.mxu0 0.0
    %2568 = vmatpush2.msra.mxu0 0.0
    %2569 = vmatprep.subr.mxu0 0.0
    %2570 = vmatpush2.msra.mxu0 0.0
    %2571 = vmatprep.subr.mxu0 0.0
    %2572 = vmatpush2.msra.mxu0 0.0
    %2573 = vmatprep.subr.mxu0 0.0
    %2574 = vmatpush2.msra.mxu0 0.0
    %2575 = vmatprep.subr.mxu0 0.0
    %2576 = vmatpush2.msra.mxu0 0.0
    %2577 = vmatprep.subr.mxu0 0.0
    %2578 = vmatpush2.msra.mxu0 0.0
    %2579 = vmatprep.subr.mxu0 0.0
    %2580 = vmatpush2.msra.mxu0 0.0
    %2581 = vmatprep.subr.mxu0 0.0
    %2582 = vmatpush2.msra.mxu0 0.0
    %2583 = vmatprep.subr.mxu0 0.0
    %2584 = vmatpush2.msra.mxu0 0.0
    %2585 = vmatprep.subr.mxu0 0.0
    %2586 = vmatpush2.msra.mxu0 0.0
    %2587 = vmatprep.subr.mxu0 0.0
    %2588 = vmatpush2.msra.mxu0 0.0
    %2589 = vmatprep.mubr.f32.mxu0 0.0
    %2590 = vmatmul.mubr.f32.gmra.mxu0 %v2520
    %v2591 = vpop.f32.mrf.mxu0
    %v2592 = vadd.f32 0.0, %v2591
    %v2593 = vpop.f32.mrf.mxu0
    %2594 = vmatprep.mubr.f32.mxu0 0.0
    %2595 = vmatmul.mubr.f32.gmra.mxu0 %v2523
    %v2596 = vpop.f32.mrf.mxu0
    %v2597 = vadd.f32 0.0, %v2596
    %v2598 = vpop.f32.mrf.mxu0
    %2599 = vdwg.mxu0
    %v2600 = vadd.f32 %v2189, %v2592
    %v2601 = vadd.f32 %v2190, %v2597
    %2603 = vrot.lane.b32.xlu0 %v2464, 96
    %v2604 = vpop.permute.xlu0 %2603
    %vm2606 = vcmask 259077
    %2607 = vst.msk [vmem:[#allocation10] sm:$0x20] %vm2606, %v2604
    %v2608 = vld [vmem:[#allocation7] sm:$0xff]
    %v2609 = vld [vmem:[#allocation7 + $0x8] sm:$0xff]
    %v2610 = vld [vmem:[#allocation7 + $0x10] sm:$0xff]
    %v2611 = vld [vmem:[#allocation7 + $0x18] sm:$0xff]
    %v2612 = vrot.slane %v2464, 5
    %2613 = vrot.lane.b32.xlu0 %v2612, 96
    %v2614 = vpop.permute.xlu0 %2613
    %v2615 = vsel %vm86, %v2614, 0
    %2617 = vmatprep.subr.mxu0 0.0
    %2618 = vmatpush1.msra.mxu0 0.0
    %2619 = vmatprep.subr.mxu0 0.0
    %2620 = vmatpush1.msra.mxu0 0.0
    %2621 = vmatprep.subr.mxu0 0.0
    %2622 = vmatpush1.msra.mxu0 0.0
    %2623 = vmatprep.subr.mxu0 0.0
    %2624 = vmatpush1.msra.mxu0 0.0
    %2625 = vmatprep.subr.mxu0 0.0
    %2626 = vmatpush1.msra.mxu0 0.0
    %2627 = vmatprep.subr.mxu0 0.0
    %2628 = vmatpush1.msra.mxu0 0.0
    %2629 = vmatprep.subr.mxu0 0.0
    %2630 = vmatpush1.msra.mxu0 0.0
    %2631 = vmatprep.subr.mxu0 0.0
    %2632 = vmatpush1.msra.mxu0 0.0
    %2633 = vmatprep.subr.mxu0 0.0
    %2634 = vmatpush1.msra.mxu0 0.0
    %2635 = vmatprep.subr.mxu0 0.0
    %2636 = vmatpush1.msra.mxu0 0.0
    %2637 = vmatprep.subr.mxu0 0.0
    %2638 = vmatpush1.msra.mxu0 0.0
    %2639 = vmatprep.subr.mxu0 0.0
    %2640 = vmatpush1.msra.mxu0 0.0
    %2641 = vmatprep.subr.mxu0 0.0
    %2642 = vmatpush1.msra.mxu0 %v2611
    %2643 = vmatprep.subr.mxu0 0.0
    %2644 = vmatpush1.msra.mxu0 %v2610
    %2645 = vmatprep.subr.mxu0 0.0
    %2646 = vmatpush1.msra.mxu0 %v2609
    %2647 = vmatprep.subr.mxu0 0.0
    %2648 = vmatpush1.msra.mxu0 %v2608
    %2649 = vmatprep.subr.mxu0 0.0
    %2650 = vmatpush2.msra.mxu0 0.0
    %2651 = vmatprep.subr.mxu0 0.0
    %2652 = vmatpush2.msra.mxu0 0.0
    %2653 = vmatprep.subr.mxu0 0.0
    %2654 = vmatpush2.msra.mxu0 0.0
    %2655 = vmatprep.subr.mxu0 0.0
    %2656 = vmatpush2.msra.mxu0 0.0
    %2657 = vmatprep.subr.mxu0 0.0
    %2658 = vmatpush2.msra.mxu0 0.0
    %2659 = vmatprep.subr.mxu0 0.0
    %2660 = vmatpush2.msra.mxu0 0.0
    %2661 = vmatprep.subr.mxu0 0.0
    %2662 = vmatpush2.msra.mxu0 0.0
    %2663 = vmatprep.subr.mxu0 0.0
    %2664 = vmatpush2.msra.mxu0 0.0
    %2665 = vmatprep.subr.mxu0 0.0
    %2666 = vmatpush2.msra.mxu0 0.0
    %2667 = vmatprep.subr.mxu0 0.0
    %2668 = vmatpush2.msra.mxu0 0.0
    %2669 = vmatprep.subr.mxu0 0.0
    %2670 = vmatpush2.msra.mxu0 0.0
    %2671 = vmatprep.subr.mxu0 0.0
    %2672 = vmatpush2.msra.mxu0 0.0
    %2673 = vmatprep.subr.mxu0 0.0
    %2674 = vmatpush2.msra.mxu0 0.0
    %2675 = vmatprep.subr.mxu0 0.0
    %2676 = vmatpush2.msra.mxu0 0.0
    %2677 = vmatprep.subr.mxu0 0.0
    %2678 = vmatpush2.msra.mxu0 0.0
    %2679 = vmatprep.subr.mxu0 0.0
    %2680 = vmatpush2.msra.mxu0 0.0
    %2681 = vmatprep.mubr.f32.mxu0 0.0
    %2682 = vmatmul.mubr.f32.gmra.mxu0 %v2615
    %v2683 = vpop.f32.mrf.mxu0
    %v2684 = vadd.f32 0.0, %v2683
    %v2685 = vpop.f32.mrf.mxu0
    %2686 = vdwg.mxu0
    %v2688 = vrot.slane %v2684, 2
    %v2690 = vadd.f32 %v157, %v2688
    %vm2691 = vcmask 129030
    %v2692 = vsel %vm2691, %v2690, -inf
    %2693 = vmax.xlane.f32.xlu0 %v2692
    %v2694 = vpop.xlane.xlu0 %2693
    %v2695 = vsub.f32 %v2690, %v2694
    %v2696 = vmul.f32 %v2695, 1.442695
    %v2697 = vpow.pop %v2696
    %v2698 = vsel %vm2691, %v2697, 0.0
    %2699 = vadd.xlane.f32.xlu0 %v2698
    %v2700 = vpop.xlane.xlu0 %2699
    %v2701 = vrcp.pop %v2700
    %v2702 = vmul.f32 %v2697, %v2701
    %v2703 = vsub.f32 0.0, %v2690
    %v2704 = vmul.f32 %v2703, 1.442695
    %v2705 = vpow.pop %v2704
    %v2706 = vadd.f32 %v2705, 1.0
    %v2707 = vrcp.pop %v2706
    %v2709 = vrot.slane %v2702, 6
    %v2710 = vsel %vm266, %v2709, 0
    %2712 = vmatprep.subr.mxu0 0.0
    %2713 = vmatpush1.msra.mxu0 0.0
    %2714 = vmatprep.subr.mxu0 0.0
    %2715 = vmatpush1.msra.mxu0 0.0
    %2716 = vmatprep.subr.mxu0 0.0
    %2717 = vmatpush1.msra.mxu0 0.0
    %2718 = vmatprep.subr.mxu0 0.0
    %2719 = vmatpush1.msra.mxu0 0.0
    %2720 = vmatprep.subr.mxu0 0.0
    %2721 = vmatpush1.msra.mxu0 0.0
    %2722 = vmatprep.subr.mxu0 0.0
    %2723 = vmatpush1.msra.mxu0 0.0
    %2724 = vmatprep.subr.mxu0 0.0
    %2725 = vmatpush1.msra.mxu0 0.0
    %2726 = vmatprep.subr.mxu0 0.0
    %2727 = vmatpush1.msra.mxu0 0.0
    %2728 = vmatprep.subr.mxu0 0.0
    %2729 = vmatpush1.msra.mxu0 0.0
    %2730 = vmatprep.subr.mxu0 0.0
    %2731 = vmatpush1.msra.mxu0 0.0
    %2732 = vmatprep.subr.mxu0 0.0
    %2733 = vmatpush1.msra.mxu0 0.0
    %2734 = vmatprep.subr.mxu0 0.0
    %2735 = vmatpush1.msra.mxu0 0.0
    %2736 = vmatprep.subr.mxu0 0.0
    %2737 = vmatpush1.msra.mxu0 0.0
    %2738 = vmatprep.subr.mxu0 0.0
    %2739 = vmatpush1.msra.mxu0 0.0
    %2740 = vmatprep.subr.mxu0 0.0
    %2741 = vmatpush1.msra.mxu0 %v2601
    %2742 = vmatprep.subr.mxu0 0.0
    %2743 = vmatpush1.msra.mxu0 %v2600
    %2744 = vmatprep.subr.mxu0 0.0
    %2745 = vmatpush2.msra.mxu0 0.0
    %2746 = vmatprep.subr.mxu0 0.0
    %2747 = vmatpush2.msra.mxu0 0.0
    %2748 = vmatprep.subr.mxu0 0.0
    %2749 = vmatpush2.msra.mxu0 0.0
    %2750 = vmatprep.subr.mxu0 0.0
    %2751 = vmatpush2.msra.mxu0 0.0
    %2752 = vmatprep.subr.mxu0 0.0
    %2753 = vmatpush2.msra.mxu0 0.0
    %2754 = vmatprep.subr.mxu0 0.0
    %2755 = vmatpush2.msra.mxu0 0.0
    %2756 = vmatprep.subr.mxu0 0.0
    %2757 = vmatpush2.msra.mxu0 0.0
    %2758 = vmatprep.subr.mxu0 0.0
    %2759 = vmatpush2.msra.mxu0 0.0
    %2760 = vmatprep.subr.mxu0 0.0
    %2761 = vmatpush2.msra.mxu0 0.0
    %2762 = vmatprep.subr.mxu0 0.0
    %2763 = vmatpush2.msra.mxu0 0.0
    %2764 = vmatprep.subr.mxu0 0.0
    %2765 = vmatpush2.msra.mxu0 0.0
    %2766 = vmatprep.subr.mxu0 0.0
    %2767 = vmatpush2.msra.mxu0 0.0
    %2768 = vmatprep.subr.mxu0 0.0
    %2769 = vmatpush2.msra.mxu0 0.0
    %2770 = vmatprep.subr.mxu0 0.0
    %2771 = vmatpush2.msra.mxu0 0.0
    %2772 = vmatprep.subr.mxu0 0.0
    %2773 = vmatpush2.msra.mxu0 0.0
    %2774 = vmatprep.subr.mxu0 0.0
    %2775 = vmatpush2.msra.mxu0 0.0
    %2776 = vmatprep.mubr.f32.mxu0 0.0
    %2777 = vmatmul.mubr.f32.gmra.mxu0 %v2710
    %v2778 = vpop.f32.mrf.mxu0
    %v2779 = vadd.f32 0.0, %v2778
    %v2780 = vpop.f32.mrf.mxu0
    %2781 = vdwg.mxu0
    %2783 = vset.pattern.permute.xlu0 96
    %2784 = vperm.xlu0 %2783, %v2707
    %v2785 = vpop.permute.xlu0 %2784
    %v2788 = vrot.slane %v2779, 2
    %v2790 = vmul.f32 %v2785, %v2788
    %v2791 = vld [vmem:[#allocation8] sm:$0xff]
    %v2792 = vld [vmem:[#allocation8 + $0x8] sm:$0xff]
    %v2793 = vld [vmem:[#allocation8 + $0x10] sm:$0xff]
    %v2794 = vld [vmem:[#allocation8 + $0x18] sm:$0xff]
    %v2796 = vrot.slane %v2790, 6
    %v2797 = vsel %vm86, %v2796, 0
    %2799 = vmatprep.subr.mxu0 0.0
    %2800 = vmatpush1.msra.mxu0 0.0
    %2801 = vmatprep.subr.mxu0 0.0
    %2802 = vmatpush1.msra.mxu0 0.0
    %2803 = vmatprep.subr.mxu0 0.0
    %2804 = vmatpush1.msra.mxu0 0.0
    %2805 = vmatprep.subr.mxu0 0.0
    %2806 = vmatpush1.msra.mxu0 0.0
    %2807 = vmatprep.subr.mxu0 0.0
    %2808 = vmatpush1.msra.mxu0 0.0
    %2809 = vmatprep.subr.mxu0 0.0
    %2810 = vmatpush1.msra.mxu0 0.0
    %2811 = vmatprep.subr.mxu0 0.0
    %2812 = vmatpush1.msra.mxu0 0.0
    %2813 = vmatprep.subr.mxu0 0.0
    %2814 = vmatpush1.msra.mxu0 0.0
    %2815 = vmatprep.subr.mxu0 0.0
    %2816 = vmatpush1.msra.mxu0 0.0
    %2817 = vmatprep.subr.mxu0 0.0
    %2818 = vmatpush1.msra.mxu0 0.0
    %2819 = vmatprep.subr.mxu0 0.0
    %2820 = vmatpush1.msra.mxu0 0.0
    %2821 = vmatprep.subr.mxu0 0.0
    %2822 = vmatpush1.msra.mxu0 0.0
    %2823 = vmatprep.subr.mxu0 0.0
    %2824 = vmatpush1.msra.mxu0 %v2794
    %2825 = vmatprep.subr.mxu0 0.0
    %2826 = vmatpush1.msra.mxu0 %v2793
    %2827 = vmatprep.subr.mxu0 0.0
    %2828 = vmatpush1.msra.mxu0 %v2792
    %2829 = vmatprep.subr.mxu0 0.0
    %2830 = vmatpush1.msra.mxu0 %v2791
    %2831 = vmatprep.subr.mxu0 0.0
    %2832 = vmatpush2.msra.mxu0 0.0
    %2833 = vmatprep.subr.mxu0 0.0
    %2834 = vmatpush2.msra.mxu0 0.0
    %2835 = vmatprep.subr.mxu0 0.0
    %2836 = vmatpush2.msra.mxu0 0.0
    %2837 = vmatprep.subr.mxu0 0.0
    %2838 = vmatpush2.msra.mxu0 0.0
    %2839 = vmatprep.subr.mxu0 0.0
    %2840 = vmatpush2.msra.mxu0 0.0
    %2841 = vmatprep.subr.mxu0 0.0
    %2842 = vmatpush2.msra.mxu0 0.0
    %2843 = vmatprep.subr.mxu0 0.0
    %2844 = vmatpush2.msra.mxu0 0.0
    %2845 = vmatprep.subr.mxu0 0.0
    %2846 = vmatpush2.msra.mxu0 0.0
    %2847 = vmatprep.subr.mxu0 0.0
    %2848 = vmatpush2.msra.mxu0 0.0
    %2849 = vmatprep.subr.mxu0 0.0
    %2850 = vmatpush2.msra.mxu0 0.0
    %2851 = vmatprep.subr.mxu0 0.0
    %2852 = vmatpush2.msra.mxu0 0.0
    %2853 = vmatprep.subr.mxu0 0.0
    %2854 = vmatpush2.msra.mxu0 0.0
    %2855 = vmatprep.subr.mxu0 0.0
    %2856 = vmatpush2.msra.mxu0 0.0
    %2857 = vmatprep.subr.mxu0 0.0
    %2858 = vmatpush2.msra.mxu0 0.0
    %2859 = vmatprep.subr.mxu0 0.0
    %2860 = vmatpush2.msra.mxu0 0.0
    %2861 = vmatprep.subr.mxu0 0.0
    %2862 = vmatpush2.msra.mxu0 0.0
    %2863 = vmatprep.mubr.f32.mxu0 0.0
    %2864 = vmatmul.mubr.f32.gmra.mxu0 %v2797
    %v2865 = vpop.f32.mrf.mxu0
    %v2866 = vadd.f32 0.0, %v2865
    %v2867 = vpop.f32.mrf.mxu0
    %2868 = vdwg.mxu0
    %v2870 = vrot.slane %v2866, 2
    %2871 = vrot.lane.b32.xlu0 %v2870, 32
    %v2872 = vpop.permute.xlu0 %2871
    %v2874 = vadd.f32 %v2690, %v2872
    %v2875 = vmax.f32 %v2874, 0.0
    %v2876 = vmax.f32 %v2690, 0.0
    %vm2877 = vcmask 260230
    %v2878 = vsel %vm2877, %v2690, -inf
    %2879 = vmax.xlane.f32.xlu0 %v2878
    %v2880 = vpop.xlane.xlu0 %2879
    %v2881 = vsub.f32 %v2690, %v2880
    %v2882 = vmul.f32 %v2881, 1.442695
    %v2883 = vpow.pop %v2882
    %2885 = vrot.lane.b32.xlu0 %v2883, 112
    %v2886 = vpop.permute.xlu0 %2885
    %v2888 = vsel %vm2691, %v2886, 0.0
    %2889 = vadd.xlane.f32.xlu0 %v2888
    %v2890 = vpop.xlane.xlu0 %2889
    %v2891 = vrcp.pop %v2890
    %v2892 = vmul.f32 %v2883, %v2891
    %v2893 = vlaneseq
    %v2894 = vshrl.u32 %v2893, 7
    %v2895 = vsub.s32 6, %v2894
    %v2896 = vrot.slane %v2892, %v2895
    %2898 = vrot.lane.b32.xlu0 %v2896, 112
    %v2899 = vpop.permute.xlu0 %2898
    %v2901 = vmul.f32 %v169, %v2899
    %v2902 = vmul.f32 %v170, %v2899
    %2903 = vset.pattern.permute.xlu0 97
    %2904 = vperm.xlu0 %2903, %v2707
    %v2905 = vpop.permute.xlu0 %2904
    %v2907 = vmul.f32 %v2905, %v2876
    %v2908 = vlaneseq
    %v2909 = vshrl.u32 %v2908, 7
    %v2910 = vsub.s32 6, %v2909
    %v2911 = vrot.slane %v2907, %v2910
    %2914 = vrot.lane.b32.xlu0 %v2600, 64
    %v2915 = vpop.permute.xlu0 %2914
    %2916 = vrot.lane.b32.xlu0 %v2601, 64
    %v2917 = vpop.permute.xlu0 %2916
    %v2920 = vsub.f32 %v2911, %v2915
    %v2921 = vsub.f32 %v2911, %v2917
    %2924 = vrot.lane.b32.xlu0 %v2920, 64
    %v2925 = vpop.permute.xlu0 %2924
    %2926 = vrot.lane.b32.xlu0 %v2921, 64
    %v2927 = vpop.permute.xlu0 %2926
    %v2931 = vsel %vm266, %v2901, 0
    %v2934 = vsel %vm266, %v2902, 0
    %2936 = vmatprep.subr.mxu0 0.0
    %2937 = vmatpush1.msra.mxu0 0.0
    %2938 = vmatprep.subr.mxu0 0.0
    %2939 = vmatpush1.msra.mxu0 0.0
    %2940 = vmatprep.subr.mxu0 0.0
    %2941 = vmatpush1.msra.mxu0 0.0
    %2942 = vmatprep.subr.mxu0 0.0
    %2943 = vmatpush1.msra.mxu0 0.0
    %2944 = vmatprep.subr.mxu0 0.0
    %2945 = vmatpush1.msra.mxu0 0.0
    %2946 = vmatprep.subr.mxu0 0.0
    %2947 = vmatpush1.msra.mxu0 0.0
    %2948 = vmatprep.subr.mxu0 0.0
    %2949 = vmatpush1.msra.mxu0 0.0
    %2950 = vmatprep.subr.mxu0 0.0
    %2951 = vmatpush1.msra.mxu0 0.0
    %2952 = vmatprep.subr.mxu0 0.0
    %2953 = vmatpush1.msra.mxu0 0.0
    %2954 = vmatprep.subr.mxu0 0.0
    %2955 = vmatpush1.msra.mxu0 0.0
    %2956 = vmatprep.subr.mxu0 0.0
    %2957 = vmatpush1.msra.mxu0 0.0
    %2958 = vmatprep.subr.mxu0 0.0
    %2959 = vmatpush1.msra.mxu0 0.0
    %2960 = vmatprep.subr.mxu0 0.0
    %2961 = vmatpush1.msra.mxu0 0.0
    %2962 = vmatprep.subr.mxu0 0.0
    %2963 = vmatpush1.msra.mxu0 0.0
    %2964 = vmatprep.subr.mxu0 0.0
    %2965 = vmatpush1.msra.mxu0 %v2927
    %2966 = vmatprep.subr.mxu0 0.0
    %2967 = vmatpush1.msra.mxu0 %v2925
    %2968 = vmatprep.subr.mxu0 0.0
    %2969 = vmatpush2.msra.mxu0 0.0
    %2970 = vmatprep.subr.mxu0 0.0
    %2971 = vmatpush2.msra.mxu0 0.0
    %2972 = vmatprep.subr.mxu0 0.0
    %2973 = vmatpush2.msra.mxu0 0.0
    %2974 = vmatprep.subr.mxu0 0.0
    %2975 = vmatpush2.msra.mxu0 0.0
    %2976 = vmatprep.subr.mxu0 0.0
    %2977 = vmatpush2.msra.mxu0 0.0
    %2978 = vmatprep.subr.mxu0 0.0
    %2979 = vmatpush2.msra.mxu0 0.0
    %2980 = vmatprep.subr.mxu0 0.0
    %2981 = vmatpush2.msra.mxu0 0.0
    %2982 = vmatprep.subr.mxu0 0.0
    %2983 = vmatpush2.msra.mxu0 0.0
    %2984 = vmatprep.subr.mxu0 0.0
    %2985 = vmatpush2.msra.mxu0 0.0
    %2986 = vmatprep.subr.mxu0 0.0
    %2987 = vmatpush2.msra.mxu0 0.0
    %2988 = vmatprep.subr.mxu0 0.0
    %2989 = vmatpush2.msra.mxu0 0.0
    %2990 = vmatprep.subr.mxu0 0.0
    %2991 = vmatpush2.msra.mxu0 0.0
    %2992 = vmatprep.subr.mxu0 0.0
    %2993 = vmatpush2.msra.mxu0 0.0
    %2994 = vmatprep.subr.mxu0 0.0
    %2995 = vmatpush2.msra.mxu0 0.0
    %2996 = vmatprep.subr.mxu0 0.0
    %2997 = vmatpush2.msra.mxu0 0.0
    %2998 = vmatprep.subr.mxu0 0.0
    %2999 = vmatpush2.msra.mxu0 0.0
    %3000 = vmatprep.mubr.f32.mxu0 0.0
    %3001 = vmatmul.mubr.f32.gmra.mxu0 %v2931
    %v3002 = vpop.f32.mrf.mxu0
    %v3003 = vadd.f32 0.0, %v3002
    %v3004 = vpop.f32.mrf.mxu0
    %3005 = vmatprep.mubr.f32.mxu0 0.0
    %3006 = vmatmul.mubr.f32.gmra.mxu0 %v2934
    %v3007 = vpop.f32.mrf.mxu0
    %v3008 = vadd.f32 0.0, %v3007
    %v3009 = vpop.f32.mrf.mxu0
    %3010 = vdwg.mxu0
    %v3011 = vadd.f32 %v2600, %v3003
    %v3012 = vadd.f32 %v2601, %v3008
    %3014 = vrot.lane.b32.xlu0 %v2875, 96
    %v3015 = vpop.permute.xlu0 %3014
    %vm3017 = vcmask 260102
    %3018 = vst.msk [vmem:[#allocation10] sm:$0x40] %vm3017, %v3015
    %v3019 = vld [vmem:[#allocation7] sm:$0xff]
    %v3020 = vld [vmem:[#allocation7 + $0x8] sm:$0xff]
    %v3021 = vld [vmem:[#allocation7 + $0x10] sm:$0xff]
    %v3022 = vld [vmem:[#allocation7 + $0x18] sm:$0xff]
    %v3023 = vrot.slane %v2875, 6
    %3024 = vrot.lane.b32.xlu0 %v3023, 96
    %v3025 = vpop.permute.xlu0 %3024
    %v3026 = vsel %vm86, %v3025, 0
    %3028 = vmatprep.subr.mxu0 0.0
    %3029 = vmatpush1.msra.mxu0 0.0
    %3030 = vmatprep.subr.mxu0 0.0
    %3031 = vmatpush1.msra.mxu0 0.0
    %3032 = vmatprep.subr.mxu0 0.0
    %3033 = vmatpush1.msra.mxu0 0.0
    %3034 = vmatprep.subr.mxu0 0.0
    %3035 = vmatpush1.msra.mxu0 0.0
    %3036 = vmatprep.subr.mxu0 0.0
    %3037 = vmatpush1.msra.mxu0 0.0
    %3038 = vmatprep.subr.mxu0 0.0
    %3039 = vmatpush1.msra.mxu0 0.0
    %3040 = vmatprep.subr.mxu0 0.0
    %3041 = vmatpush1.msra.mxu0 0.0
    %3042 = vmatprep.subr.mxu0 0.0
    %3043 = vmatpush1.msra.mxu0 0.0
    %3044 = vmatprep.subr.mxu0 0.0
    %3045 = vmatpush1.msra.mxu0 0.0
    %3046 = vmatprep.subr.mxu0 0.0
    %3047 = vmatpush1.msra.mxu0 0.0
    %3048 = vmatprep.subr.mxu0 0.0
    %3049 = vmatpush1.msra.mxu0 0.0
    %3050 = vmatprep.subr.mxu0 0.0
    %3051 = vmatpush1.msra.mxu0 0.0
    %3052 = vmatprep.subr.mxu0 0.0
    %3053 = vmatpush1.msra.mxu0 %v3022
    %3054 = vmatprep.subr.mxu0 0.0
    %3055 = vmatpush1.msra.mxu0 %v3021
    %3056 = vmatprep.subr.mxu0 0.0
    %3057 = vmatpush1.msra.mxu0 %v3020
    %3058 = vmatprep.subr.mxu0 0.0
    %3059 = vmatpush1.msra.mxu0 %v3019
    %3060 = vmatprep.subr.mxu0 0.0
    %3061 = vmatpush2.msra.mxu0 0.0
    %3062 = vmatprep.subr.mxu0 0.0
    %3063 = vmatpush2.msra.mxu0 0.0
    %3064 = vmatprep.subr.mxu0 0.0
    %3065 = vmatpush2.msra.mxu0 0.0
    %3066 = vmatprep.subr.mxu0 0.0
    %3067 = vmatpush2.msra.mxu0 0.0
    %3068 = vmatprep.subr.mxu0 0.0
    %3069 = vmatpush2.msra.mxu0 0.0
    %3070 = vmatprep.subr.mxu0 0.0
    %3071 = vmatpush2.msra.mxu0 0.0
    %3072 = vmatprep.subr.mxu0 0.0
    %3073 = vmatpush2.msra.mxu0 0.0
    %3074 = vmatprep.subr.mxu0 0.0
    %3075 = vmatpush2.msra.mxu0 0.0
    %3076 = vmatprep.subr.mxu0 0.0
    %3077 = vmatpush2.msra.mxu0 0.0
    %3078 = vmatprep.subr.mxu0 0.0
    %3079 = vmatpush2.msra.mxu0 0.0
    %3080 = vmatprep.subr.mxu0 0.0
    %3081 = vmatpush2.msra.mxu0 0.0
    %3082 = vmatprep.subr.mxu0 0.0
    %3083 = vmatpush2.msra.mxu0 0.0
    %3084 = vmatprep.subr.mxu0 0.0
    %3085 = vmatpush2.msra.mxu0 0.0
    %3086 = vmatprep.subr.mxu0 0.0
    %3087 = vmatpush2.msra.mxu0 0.0
    %3088 = vmatprep.subr.mxu0 0.0
    %3089 = vmatpush2.msra.mxu0 0.0
    %3090 = vmatprep.subr.mxu0 0.0
    %3091 = vmatpush2.msra.mxu0 0.0
    %3092 = vmatprep.mubr.f32.mxu0 0.0
    %3093 = vmatmul.mubr.f32.gmra.mxu0 %v3026
    %v3094 = vpop.f32.mrf.mxu0
    %v3095 = vadd.f32 0.0, %v3094
    %v3096 = vpop.f32.mrf.mxu0
    %3097 = vdwg.mxu0
    %v3099 = vrot.slane %v3095, 1
    %v3101 = vadd.f32 %v157, %v3099
    %vm3102 = vcmask 130055
    %v3103 = vsel %vm3102, %v3101, -inf
    %3104 = vmax.xlane.f32.xlu0 %v3103
    %v3105 = vpop.xlane.xlu0 %3104
    %v3106 = vsub.f32 %v3101, %v3105
    %v3107 = vmul.f32 %v3106, 1.442695
    %v3108 = vpow.pop %v3107
    %v3109 = vsel %vm3102, %v3108, 0.0
    %3110 = vadd.xlane.f32.xlu0 %v3109
    %v3111 = vpop.xlane.xlu0 %3110
    %v3112 = vrcp.pop %v3111
    %v3113 = vmul.f32 %v3108, %v3112
    %v3114 = vsub.f32 0.0, %v3101
    %v3115 = vmul.f32 %v3114, 1.442695
    %v3116 = vpow.pop %v3115
    %v3117 = vadd.f32 %v3116, 1.0
    %v3118 = vrcp.pop %v3117
    %v3120 = vrot.slane %v3113, 7
    %v3121 = vsel %vm266, %v3120, 0
    %3123 = vmatprep.subr.mxu0 0.0
    %3124 = vmatpush1.msra.mxu0 0.0
    %3125 = vmatprep.subr.mxu0 0.0
    %3126 = vmatpush1.msra.mxu0 0.0
    %3127 = vmatprep.subr.mxu0 0.0
    %3128 = vmatpush1.msra.mxu0 0.0
    %3129 = vmatprep.subr.mxu0 0.0
    %3130 = vmatpush1.msra.mxu0 0.0
    %3131 = vmatprep.subr.mxu0 0.0
    %3132 = vmatpush1.msra.mxu0 0.0
    %3133 = vmatprep.subr.mxu0 0.0
    %3134 = vmatpush1.msra.mxu0 0.0
    %3135 = vmatprep.subr.mxu0 0.0
    %3136 = vmatpush1.msra.mxu0 0.0
    %3137 = vmatprep.subr.mxu0 0.0
    %3138 = vmatpush1.msra.mxu0 0.0
    %3139 = vmatprep.subr.mxu0 0.0
    %3140 = vmatpush1.msra.mxu0 0.0
    %3141 = vmatprep.subr.mxu0 0.0
    %3142 = vmatpush1.msra.mxu0 0.0
    %3143 = vmatprep.subr.mxu0 0.0
    %3144 = vmatpush1.msra.mxu0 0.0
    %3145 = vmatprep.subr.mxu0 0.0
    %3146 = vmatpush1.msra.mxu0 0.0
    %3147 = vmatprep.subr.mxu0 0.0
    %3148 = vmatpush1.msra.mxu0 0.0
    %3149 = vmatprep.subr.mxu0 0.0
    %3150 = vmatpush1.msra.mxu0 0.0
    %3151 = vmatprep.subr.mxu0 0.0
    %3152 = vmatpush1.msra.mxu0 %v3012
    %3153 = vmatprep.subr.mxu0 0.0
    %3154 = vmatpush1.msra.mxu0 %v3011
    %3155 = vmatprep.subr.mxu0 0.0
    %3156 = vmatpush2.msra.mxu0 0.0
    %3157 = vmatprep.subr.mxu0 0.0
    %3158 = vmatpush2.msra.mxu0 0.0
    %3159 = vmatprep.subr.mxu0 0.0
    %3160 = vmatpush2.msra.mxu0 0.0
    %3161 = vmatprep.subr.mxu0 0.0
    %3162 = vmatpush2.msra.mxu0 0.0
    %3163 = vmatprep.subr.mxu0 0.0
    %3164 = vmatpush2.msra.mxu0 0.0
    %3165 = vmatprep.subr.mxu0 0.0
    %3166 = vmatpush2.msra.mxu0 0.0
    %3167 = vmatprep.subr.mxu0 0.0
    %3168 = vmatpush2.msra.mxu0 0.0
    %3169 = vmatprep.subr.mxu0 0.0
    %3170 = vmatpush2.msra.mxu0 0.0
    %3171 = vmatprep.subr.mxu0 0.0
    %3172 = vmatpush2.msra.mxu0 0.0
    %3173 = vmatprep.subr.mxu0 0.0
    %3174 = vmatpush2.msra.mxu0 0.0
    %3175 = vmatprep.subr.mxu0 0.0
    %3176 = vmatpush2.msra.mxu0 0.0
    %3177 = vmatprep.subr.mxu0 0.0
    %3178 = vmatpush2.msra.mxu0 0.0
    %3179 = vmatprep.subr.mxu0 0.0
    %3180 = vmatpush2.msra.mxu0 0.0
    %3181 = vmatprep.subr.mxu0 0.0
    %3182 = vmatpush2.msra.mxu0 0.0
    %3183 = vmatprep.subr.mxu0 0.0
    %3184 = vmatpush2.msra.mxu0 0.0
    %3185 = vmatprep.subr.mxu0 0.0
    %3186 = vmatpush2.msra.mxu0 0.0
    %3187 = vmatprep.mubr.f32.mxu0 0.0
    %3188 = vmatmul.mubr.f32.gmra.mxu0 %v3121
    %v3189 = vpop.f32.mrf.mxu0
    %v3190 = vadd.f32 0.0, %v3189
    %v3191 = vpop.f32.mrf.mxu0
    %3192 = vdwg.mxu0
    %3194 = vset.pattern.permute.xlu0 96
    %3195 = vperm.xlu0 %3194, %v3118
    %v3196 = vpop.permute.xlu0 %3195
    %v3199 = vrot.slane %v3190, 1
    %v3201 = vmul.f32 %v3196, %v3199
    %v3202 = vld [vmem:[#allocation8] sm:$0xff]
    %v3203 = vld [vmem:[#allocation8 + $0x8] sm:$0xff]
    %v3204 = vld [vmem:[#allocation8 + $0x10] sm:$0xff]
    %v3205 = vld [vmem:[#allocation8 + $0x18] sm:$0xff]
    %v3207 = vrot.slane %v3201, 7
    %v3208 = vsel %vm86, %v3207, 0
    %3210 = vmatprep.subr.mxu0 0.0
    %3211 = vmatpush1.msra.mxu0 0.0
    %3212 = vmatprep.subr.mxu0 0.0
    %3213 = vmatpush1.msra.mxu0 0.0
    %3214 = vmatprep.subr.mxu0 0.0
    %3215 = vmatpush1.msra.mxu0 0.0
    %3216 = vmatprep.subr.mxu0 0.0
    %3217 = vmatpush1.msra.mxu0 0.0
    %3218 = vmatprep.subr.mxu0 0.0
    %3219 = vmatpush1.msra.mxu0 0.0
    %3220 = vmatprep.subr.mxu0 0.0
    %3221 = vmatpush1.msra.mxu0 0.0
    %3222 = vmatprep.subr.mxu0 0.0
    %3223 = vmatpush1.msra.mxu0 0.0
    %3224 = vmatprep.subr.mxu0 0.0
    %3225 = vmatpush1.msra.mxu0 0.0
    %3226 = vmatprep.subr.mxu0 0.0
    %3227 = vmatpush1.msra.mxu0 0.0
    %3228 = vmatprep.subr.mxu0 0.0
    %3229 = vmatpush1.msra.mxu0 0.0
    %3230 = vmatprep.subr.mxu0 0.0
    %3231 = vmatpush1.msra.mxu0 0.0
    %3232 = vmatprep.subr.mxu0 0.0
    %3233 = vmatpush1.msra.mxu0 0.0
    %3234 = vmatprep.subr.mxu0 0.0
    %3235 = vmatpush1.msra.mxu0 %v3205
    %3236 = vmatprep.subr.mxu0 0.0
    %3237 = vmatpush1.msra.mxu0 %v3204
    %3238 = vmatprep.subr.mxu0 0.0
    %3239 = vmatpush1.msra.mxu0 %v3203
    %3240 = vmatprep.subr.mxu0 0.0
    %3241 = vmatpush1.msra.mxu0 %v3202
    %3242 = vmatprep.subr.mxu0 0.0
    %3243 = vmatpush2.msra.mxu0 0.0
    %3244 = vmatprep.subr.mxu0 0.0
    %3245 = vmatpush2.msra.mxu0 0.0
    %3246 = vmatprep.subr.mxu0 0.0
    %3247 = vmatpush2.msra.mxu0 0.0
    %3248 = vmatprep.subr.mxu0 0.0
    %3249 = vmatpush2.msra.mxu0 0.0
    %3250 = vmatprep.subr.mxu0 0.0
    %3251 = vmatpush2.msra.mxu0 0.0
    %3252 = vmatprep.subr.mxu0 0.0
    %3253 = vmatpush2.msra.mxu0 0.0
    %3254 = vmatprep.subr.mxu0 0.0
    %3255 = vmatpush2.msra.mxu0 0.0
    %3256 = vmatprep.subr.mxu0 0.0
    %3257 = vmatpush2.msra.mxu0 0.0
    %3258 = vmatprep.subr.mxu0 0.0
    %3259 = vmatpush2.msra.mxu0 0.0
    %3260 = vmatprep.subr.mxu0 0.0
    %3261 = vmatpush2.msra.mxu0 0.0
    %3262 = vmatprep.subr.mxu0 0.0
    %3263 = vmatpush2.msra.mxu0 0.0
    %3264 = vmatprep.subr.mxu0 0.0
    %3265 = vmatpush2.msra.mxu0 0.0
    %3266 = vmatprep.subr.mxu0 0.0
    %3267 = vmatpush2.msra.mxu0 0.0
    %3268 = vmatprep.subr.mxu0 0.0
    %3269 = vmatpush2.msra.mxu0 0.0
    %3270 = vmatprep.subr.mxu0 0.0
    %3271 = vmatpush2.msra.mxu0 0.0
    %3272 = vmatprep.subr.mxu0 0.0
    %3273 = vmatpush2.msra.mxu0 0.0
    %3274 = vmatprep.mubr.f32.mxu0 0.0
    %3275 = vmatmul.mubr.f32.gmra.mxu0 %v3208
    %v3276 = vpop.f32.mrf.mxu0
    %v3277 = vadd.f32 0.0, %v3276
    %v3278 = vpop.f32.mrf.mxu0
    %3279 = vdwg.mxu0
    %v3281 = vrot.slane %v3277, 1
    %3282 = vrot.lane.b32.xlu0 %v3281, 32
    %v3283 = vpop.permute.xlu0 %3282
    %v3285 = vadd.f32 %v3101, %v3283
    %v3286 = vmax.f32 %v3285, 0.0
    %3288 = vrot.lane.b32.xlu0 %v3286, 96
    %v3289 = vpop.permute.xlu0 %3288
    %vm3291 = vcmask 261127
    %3292 = vst.msk [vmem:[#allocation10] sm:$0x80] %vm3291, %v3289
    // Predicated region
    $region38: #{tpu_custom_call.1} parent=1 // pred_check
      _
    $region39: #{tpu_custom_call.1} parent=1 // pred_check_branch
      %3294 = sbr.rel (0) target = $region41
    $region40: #{tpu_custom_call.1} parent=1 // pred_region
      %s3296 = ssub.s32 128, 128
      %3297 = vsyncadd [#allocation4], %s3296
      %s3299 = sshll.u32 [#allocation10], 4
      %s3300 = int_to_ptr.vmem [resolvable:$true] %s3299
      %3302 = dma.vmem_to_hbm [thread:$0]  %s3300, 128, %s5, [#allocation4]
    $region41: #{tpu_custom_call.1} parent=1 // pred_fallthru
      _
    // Predicated region
    $region42: #{tpu_custom_call.1} parent=1 // pred_check
      _
    $region43: #{tpu_custom_call.1} parent=1 // pred_check_branch
      %3304 = sbr.rel (0) target = $region45
    $region44: #{tpu_custom_call.1} parent=1 // pred_region
      %3305 = dma.done [#allocation4], 128
    $region45: #{tpu_custom_call.1} parent=1 // pred_fallthru
      _
    %3306 = vsyncpa [#allocation3], 1
    %3307 = vsyncpa [#allocation6], 1
    %3308 = vsyncpa [#allocation9], 1
    %3309 = vsyncpa [#allocation4], 1

</llo_original>
